<compile_context>
chip_gen: v7x
topology: tpu7x:2x2x1
jax: 0.10.0
libtpu: 0.0.40
codegen_flags: <defaults>
</compile_context>

<pallas_src>
import functools

import jax
import jax.numpy as jnp
from jax.experimental import pallas as pl
from jax.experimental.pallas import tpu as pltpu


def _simplex_activate(x, *, n_iters=26):
    """Row-wise projection onto the probability simplex (== LocalDictionary.activate).

    Sort-free: tau solves the monotone piecewise-linear equation
        f(tau) = sum_i relu(x_i - tau) = 1,
    bracketed by [max(x)-1, (sum(x)-1)/H] <= tau <= max(x).  Fixed-count bisection
    narrows the bracket to ~1e-8, then one exact refinement on the localized support
        tau = (sum_{x_i >= lo} x_i - 1) / |{x_i >= lo}|
    recovers the same tau as the sorted/cumsum reference.  Only (Bt, H) temps.
    """
    h = x.shape[-1]
    x_max = jnp.max(x, axis=-1, keepdims=True)                 # (Bt, 1)
    x_sum = jnp.sum(x, axis=-1, keepdims=True)                 # (Bt, 1)
    lo0 = jnp.maximum(x_max - 1.0, (x_sum - 1.0) * (1.0 / h))  # f(lo0) >= 1
    hi0 = x_max                                                # f(hi0) <  1

    def body(_, carry):
        lo, hi = carry
        mid = 0.5 * (lo + hi)
        f = jnp.sum(jnp.maximum(x - mid, 0.0), axis=-1, keepdims=True)
        go_up = f >= 1.0                                       # tau* >= mid
        return jnp.where(go_up, mid, lo), jnp.where(go_up, hi, mid)

    lo, _ = jax.lax.fori_loop(0, n_iters, body, (lo0, hi0))

    # Exact refinement on the localized support (lo < max(x) so rho >= 1 always;
    # elements numerically at the threshold contribute ~0 and are harmless).
    cond = (x >= lo).astype(x.dtype)                           # (Bt, H)
    rho = jnp.sum(cond, axis=-1, keepdims=True)
    s = jnp.sum(x * cond, axis=-1, keepdims=True)
    tau = (s - 1.0) / rho
    return jnp.maximum(x - tau, 0.0)


def local_dictionary_kernel(step_ref, pen_ref, y_ref, w_ref, gram_s_ref, wsq_ref,
                            o_ref, *, num_layers):
    f32 = jnp.float32
    y = y_ref[...]                      # (Bt, D)  one batch tile
    W = w_ref[...]                      # (H, D)   resident across the grid
    gram_s = gram_s_ref[...]            # (H, H)   = step * (W @ W.T), resident
    w_sq = wsq_ref[...]                 # (1, H)   = ||W_h||^2, resident
    step = step_ref[0]                  # scalars from SMEM
    penalty = pen_ref[0]

    # ---- per-tile loop invariants (computed once, full-height MXU push) ----------
    # c = y @ W.T
    c = jax.lax.dot_general(y, W, (((1,), (1,)), ((), ())),
                            preferred_element_type=f32)        # (Bt, H)
    y_sq = jnp.sum(y * y, axis=1, keepdims=True)               # (Bt, 1)
    # weight[b,h] = ||y_b - W_h||^2 via matmul expansion (no (Bt,H,D) temp).
    # Note: mild cancellation risk if a y row sits on a dictionary atom; fine here.
    weight = y_sq - 2.0 * c + w_sq                             # (Bt, H)
    base_s = step * (penalty * weight - c)                     # step * invariant grad part

    # ---- layer 0 peeled: x_tmp == 0 => grad == base, momentum coeff 0/3 == 0 ------
    x1 = _simplex_activate(-base_s)

    # ---- accelerated (FISTA) iterations, fori_loop to bound live ranges -----------
    def layer_body(layer, carry):
        x_tmp, x_old = carry
        grad_s = jnp.dot(x_tmp, gram_s, preferred_element_type=f32)  # step*(x @ Gram)
        x_new = _simplex_activate(x_tmp - grad_s - base_s)
        lf = layer.astype(f32)
        coef = lf / (lf + 3.0)
        return x_new + coef * (x_new - x_old), x_new

    _, x_fin = jax.lax.fori_loop(1, num_layers, layer_body, (x1, x1))

    # ---- decode: x @ W -> (Bt, D), lane-dense store --------------------------------
    o_ref[...] = jnp.dot(x_fin, W, preferred_element_type=f32)


def local_dictionary_forward(y, W, step, penalty, num_layers, *, block_b=None,
                             vmem_limit_bytes=48 * 1024 * 1024):
    B, D = y.shape
    H = W.shape[0]
    assert num_layers >= 1

    if block_b is None:
        block_b = 128 if B % 128 == 0 else B      # fill the MXU M dimension
    assert B % block_b == 0, "batch must be divisible by the batch tile"

    step = jnp.asarray(step, jnp.float32)
    penalty = jnp.asarray(penalty, jnp.float32)

    # Grid-invariant precompute (hoisted out of the kernel): Gram = W @ W.T pre-scaled
    # by step, and the dictionary row norms.  HIGHEST precision keeps the factored
    # gradient within the 1e-5 tolerance of the reference's HIGHEST-precision matmuls.
    hp = jax.lax.Precision.HIGHEST
    gram_s = step * jnp.dot(W, W.T, precision=hp)              # (H, H)
    w_sq = jnp.sum(W * W, axis=1)[None, :]                     # (1, H)

    step_arr = step.reshape((1,))
    pen_arr = penalty.reshape((1,))

    return pl.pallas_call(
        functools.partial(local_dictionary_kernel, num_layers=num_layers),
        out_shape=jax.ShapeDtypeStruct((B, D), jnp.float32),
        grid=(B // block_b,),
        in_specs=[
            pl.BlockSpec(memory_space=pltpu.MemorySpace.SMEM),   # step (scalar)
            pl.BlockSpec(memory_space=pltpu.MemorySpace.SMEM),   # penalty (scalar)
            pl.BlockSpec((block_b, D), lambda i: (i, 0)),        # y: batch tile
            pl.BlockSpec((H, D), lambda i: (0, 0)),              # W: resident
            pl.BlockSpec((H, H), lambda i: (0, 0)),              # step*Gram: resident
            pl.BlockSpec((1, H), lambda i: (0, 0)),              # ||W_h||^2: resident
        ],
        out_specs=pl.BlockSpec((block_b, D), lambda i: (i, 0)),
        compiler_params=pltpu.CompilerParams(
            dimension_semantics=("parallel",),   # batch tiles independent -> both TCs
            vmem_limit_bytes=vmem_limit_bytes,   # <= v7x 64 MiB/TC, ample on v5e/v6e
        ),
    )(step_arr, pen_arr, y, W, gram_s, w_sq)


# --------------------- pure-JAX reference (for sanity check) ----------------------
def _ref_activate(x):
    m, n = x.shape
    u = -jnp.sort(-x, axis=1)                                    # descending sort
    v = (jnp.cumsum(u, axis=1) - 1.0) / (jnp.arange(n, dtype=jnp.float32) + 1.0)
    idx = jnp.sum((u > v).astype(jnp.int32), axis=1) - 1
    w = v[jnp.arange(m), idx]
    return jnp.maximum(x - w[:, None], 0.0)


def _ref_forward(y, W, step, penalty, num_layers):
    hp = jax.lax.Precision.HIGHEST
    weight = jnp.sum((y[:, None, :] - W[None, :, :]) ** 2, axis=2)
    x_tmp = jnp.zeros((y.shape[0], W.shape[0]), jnp.float32)
    x_old = jnp.zeros_like(x_tmp)
    x_new = x_tmp
    for layer in range(num_layers):
        grad = jnp.dot(jnp.dot(x_tmp, W, precision=hp) - y, W.T, precision=hp)
        grad = grad + weight * penalty
        x_new = _ref_activate(x_tmp - grad * step)
        x_tmp = x_new + layer / (layer + 3) * (x_new - x_old)
        x_old = x_new
    return jnp.dot(x_new, W, precision=hp)


if __name__ == "__main__":
    # (8,128)-aligned shapes; B = 2 * block_b so the "parallel" grid has >= 2 steps
    # (feeds both TensorCores on v7x) while every matmul gets 128 MXU rows.
    B, input_size, hidden_size = 256, 128, 256
    num_layers, penalty, step = 8, 0.1, 0.05

    key = jax.random.PRNGKey(0)
    k_y, k_w = jax.random.split(key)
    y = jax.random.normal(k_y, (B, input_size), jnp.float32)
    # __init__ zero-inits W and step (which makes the forward trivially zero);
    # use deterministic random values so real compute is exercised.
    W = 0.1 * jax.random.normal(k_w, (hidden_size, input_size), jnp.float32)

    out = local_dictionary_forward(y, W, step, penalty, num_layers, block_b=128)
    out = jax.block_until_ready(out)

    ref = _ref_forward(y, W, jnp.float32(step), jnp.float32(penalty), num_layers)
    assert out.shape == (B, input_size)
    assert bool(jnp.allclose(out, ref, atol=1e-5, rtol=1e-5)), \
        float(jnp.max(jnp.abs(out - ref)))
    print("KERNEL_OK")
</pallas_src>

<mosaic_0001>
module attributes {stable_mosaic.version = 11 : i64} {
  func.func @local_dictionary_kernel(%arg0: i32, %arg1: memref<1xf32, #tpu.memory_space<smem>>, %arg2: memref<1xf32, #tpu.memory_space<smem>>, %arg3: memref<128x128xf32, #tpu.memory_space<vmem>>, %arg4: memref<256x128xf32, #tpu.memory_space<vmem>>, %arg5: memref<256x256xf32, #tpu.memory_space<vmem>>, %arg6: memref<1x256xf32, #tpu.memory_space<vmem>>, %arg7: memref<128x128xf32, #tpu.memory_space<vmem>>) attributes {dimension_semantics = [#tpu.dimension_semantics<parallel>], iteration_bounds = array<i64: 2>, scalar_prefetch = 0 : i64, scratch_operands = 0 : i64, tpu.core_type = #tpu.core_type<tc>, window_params = [{transform_indices = @transform_0, window_bounds = array<i64: 1>}, {transform_indices = @transform_1, window_bounds = array<i64: 1>}, {transform_indices = @transform_2, window_bounds = array<i64: 128, 128>}, {pipeline_mode = #tpu.pipeline_mode<synchronous>, transform_indices = @transform_3, window_bounds = array<i64: 256, 128>}, {pipeline_mode = #tpu.pipeline_mode<synchronous>, transform_indices = @transform_4, window_bounds = array<i64: 256, 256>}, {pipeline_mode = #tpu.pipeline_mode<synchronous>, transform_indices = @transform_5, window_bounds = array<i64: 1, 256>}, {transform_indices = @transform_6, window_bounds = array<i64: 128, 128>}]} {
    %c0 = arith.constant 0 : index
    %c0_0 = arith.constant 0 : index
    %0 = vector.load %arg3[%c0, %c0_0] : memref<128x128xf32, #tpu.memory_space<vmem>>, vector<128x128xf32>
    %c0_1 = arith.constant 0 : index
    %c0_2 = arith.constant 0 : index
    %1 = vector.load %arg4[%c0_1, %c0_2] : memref<256x128xf32, #tpu.memory_space<vmem>>, vector<256x128xf32>
    %c0_3 = arith.constant 0 : index
    %c0_4 = arith.constant 0 : index
    %2 = vector.load %arg5[%c0_3, %c0_4] : memref<256x256xf32, #tpu.memory_space<vmem>>, vector<256x256xf32>
    %c0_5 = arith.constant 0 : index
    %c0_6 = arith.constant 0 : index
    %3 = vector.load %arg6[%c0_5, %c0_6] : memref<1x256xf32, #tpu.memory_space<vmem>>, vector<1x256xf32>
    %c0_7 = arith.constant 0 : index
    %4 = memref.load %arg1[%c0_7] : memref<1xf32, #tpu.memory_space<smem>>
    %c0_8 = arith.constant 0 : index
    %5 = memref.load %arg2[%c0_8] : memref<1xf32, #tpu.memory_space<smem>>
    %cst = arith.constant dense<0.000000e+00> : vector<128x256xf32>
    %6 = tpu.matmul %0, %1, %cst {dimension_numbers = #tpu.dot_dimension_numbers<[1], [1], [0], [0], [0, 0, 1, 0], [], []>} : vector<128x128xf32>, vector<256x128xf32>, vector<128x256xf32> -> vector<128x256xf32>
    %7 = arith.mulf %0, %0 : vector<128x128xf32>
    %cst_9 = arith.constant dense<0.000000e+00> : vector<128xf32>
    %8 = vector.multi_reduction <add>, %7, %cst_9 [1] : vector<128x128xf32> to vector<128xf32>
    %9 = vector.shape_cast %8 : vector<128xf32> to vector<128x1xf32>
    %cst_10 = arith.constant 2.000000e+00 : f32
    %10 = vector.broadcast %cst_10 : f32 to vector<128x256xf32>
    %11 = arith.mulf %10, %6 : vector<128x256xf32>
    %12 = vector.broadcast %9 : vector<128x1xf32> to vector<128x256xf32>
    %13 = arith.subf %12, %11 : vector<128x256xf32>
    %14 = vector.broadcast %3 : vector<1x256xf32> to vector<128x256xf32>
    %15 = arith.addf %13, %14 : vector<128x256xf32>
    %16 = vector.broadcast %5 : f32 to vector<128x256xf32>
    %17 = arith.mulf %16, %15 : vector<128x256xf32>
    %18 = arith.subf %17, %6 : vector<128x256xf32>
    %19 = vector.broadcast %4 : f32 to vector<128x256xf32>
    %20 = arith.mulf %19, %18 : vector<128x256xf32>
    %cst_11 = arith.constant 0.000000e+00 : f32
    %21 = vector.broadcast %cst_11 : f32 to vector<128x256xf32>
    %22 = arith.subf %21, %20 : vector<128x256xf32>
    %cst_12 = arith.constant dense<0xFF800000> : vector<128xf32>
    %23 = vector.multi_reduction <maximumf>, %22, %cst_12 [1] : vector<128x256xf32> to vector<128xf32>
    %24 = vector.shape_cast %23 : vector<128xf32> to vector<128x1xf32>
    %cst_13 = arith.constant dense<0.000000e+00> : vector<128xf32>
    %25 = vector.multi_reduction <add>, %22, %cst_13 [1] : vector<128x256xf32> to vector<128xf32>
    %26 = vector.shape_cast %25 : vector<128xf32> to vector<128x1xf32>
    %cst_14 = arith.constant 1.000000e+00 : f32
    %27 = vector.broadcast %cst_14 : f32 to vector<128x1xf32>
    %28 = arith.subf %24, %27 : vector<128x1xf32>
    %cst_15 = arith.constant 1.000000e+00 : f32
    %29 = vector.broadcast %cst_15 : f32 to vector<128x1xf32>
    %30 = arith.subf %26, %29 : vector<128x1xf32>
    %cst_16 = arith.constant 3.906250e-03 : f32
    %31 = vector.broadcast %cst_16 : f32 to vector<128x1xf32>
    %32 = arith.mulf %30, %31 : vector<128x1xf32>
    %33 = arith.maximumf %28, %32 : vector<128x1xf32>
    %c0_i32 = arith.constant 0 : i32
    %c26_i32 = arith.constant 26 : i32
    %34 = arith.addi %c0_i32, %c26_i32 : i32
    %c1_i32 = arith.constant 1 : i32
    %35:2 = scf.for %arg8 = %c0_i32 to %34 step %c1_i32 iter_args(%arg9 = %33, %arg10 = %24) -> (vector<128x1xf32>, vector<128x1xf32>)  : i32 {
      %56 = arith.addf %arg9, %arg10 : vector<128x1xf32>
      %cst_27 = arith.constant 5.000000e-01 : f32
      %57 = vector.broadcast %cst_27 : f32 to vector<128x1xf32>
      %58 = arith.mulf %57, %56 : vector<128x1xf32>
      %59 = vector.broadcast %58 : vector<128x1xf32> to vector<128x256xf32>
      %60 = arith.subf %22, %59 : vector<128x256xf32>
      %cst_28 = arith.constant 0.000000e+00 : f32
      %61 = vector.broadcast %cst_28 : f32 to vector<128x256xf32>
      %62 = arith.maximumf %60, %61 : vector<128x256xf32>
      %cst_29 = arith.constant dense<0.000000e+00> : vector<128xf32>
      %63 = vector.multi_reduction <add>, %62, %cst_29 [1] : vector<128x256xf32> to vector<128xf32>
      %64 = vector.shape_cast %63 : vector<128xf32> to vector<128x1xf32>
      %cst_30 = arith.constant 1.000000e+00 : f32
      %65 = vector.broadcast %cst_30 : f32 to vector<128x1xf32>
      %66 = arith.cmpf oge, %64, %65 : vector<128x1xf32>
      %67 = arith.select %66, %58, %arg9 : vector<128x1xi1>, vector<128x1xf32>
      %68 = arith.select %66, %arg10, %58 : vector<128x1xi1>, vector<128x1xf32>
      scf.yield %67, %68 : vector<128x1xf32>, vector<128x1xf32>
    }
    %36 = vector.broadcast %35#0 : vector<128x1xf32> to vector<128x256xf32>
    %37 = arith.cmpf oge, %22, %36 : vector<128x256xf32>
    %38 = arith.extui %37 : vector<128x256xi1> to vector<128x256xi32>
    %39 = arith.sitofp %38 : vector<128x256xi32> to vector<128x256xf32>
    %cst_17 = arith.constant dense<0.000000e+00> : vector<128xf32>
    %40 = vector.multi_reduction <add>, %39, %cst_17 [1] : vector<128x256xf32> to vector<128xf32>
    %41 = vector.shape_cast %40 : vector<128xf32> to vector<128x1xf32>
    %42 = arith.mulf %22, %39 : vector<128x256xf32>
    %cst_18 = arith.constant dense<0.000000e+00> : vector<128xf32>
    %43 = vector.multi_reduction <add>, %42, %cst_18 [1] : vector<128x256xf32> to vector<128xf32>
    %44 = vector.shape_cast %43 : vector<128xf32> to vector<128x1xf32>
    %cst_19 = arith.constant 1.000000e+00 : f32
    %45 = vector.broadcast %cst_19 : f32 to vector<128x1xf32>
    %46 = arith.subf %44, %45 : vector<128x1xf32>
    %47 = arith.divf %46, %41 : vector<128x1xf32>
    %48 = vector.broadcast %47 : vector<128x1xf32> to vector<128x256xf32>
    %49 = arith.subf %22, %48 : vector<128x256xf32>
    %cst_20 = arith.constant 0.000000e+00 : f32
    %50 = vector.broadcast %cst_20 : f32 to vector<128x256xf32>
    %51 = arith.maximumf %49, %50 : vector<128x256xf32>
    %c1_i32_21 = arith.constant 1 : i32
    %c7_i32 = arith.constant 7 : i32
    %52 = arith.addi %c1_i32_21, %c7_i32 : i32
    %c1_i32_22 = arith.constant 1 : i32
    %53:2 = scf.for %arg8 = %c1_i32_21 to %52 step %c1_i32_22 iter_args(%arg9 = %51, %arg10 = %51) -> (vector<128x256xf32>, vector<128x256xf32>)  : i32 {
      %cst_27 = arith.constant dense<0.000000e+00> : vector<128x256xf32>
      %56 = tpu.matmul %arg9, %2, %cst_27 {dimension_numbers = #tpu.dot_dimension_numbers<[1], [0], [0], [1], [0, 0, 1, 1], [], []>} : vector<128x256xf32>, vector<256x256xf32>, vector<128x256xf32> -> vector<128x256xf32>
      %57 = arith.subf %arg9, %56 : vector<128x256xf32>
      %58 = arith.subf %57, %20 : vector<128x256xf32>
      %cst_28 = arith.constant dense<0xFF800000> : vector<128xf32>
      %59 = vector.multi_reduction <maximumf>, %58, %cst_28 [1] : vector<128x256xf32> to vector<128xf32>
      %60 = vector.shape_cast %59 : vector<128xf32> to vector<128x1xf32>
      %cst_29 = arith.constant dense<0.000000e+00> : vector<128xf32>
      %61 = vector.multi_reduction <add>, %58, %cst_29 [1] : vector<128x256xf32> to vector<128xf32>
      %62 = vector.shape_cast %61 : vector<128xf32> to vector<128x1xf32>
      %cst_30 = arith.constant 1.000000e+00 : f32
      %63 = vector.broadcast %cst_30 : f32 to vector<128x1xf32>
      %64 = arith.subf %60, %63 : vector<128x1xf32>
      %cst_31 = arith.constant 1.000000e+00 : f32
      %65 = vector.broadcast %cst_31 : f32 to vector<128x1xf32>
      %66 = arith.subf %62, %65 : vector<128x1xf32>
      %cst_32 = arith.constant 3.906250e-03 : f32
      %67 = vector.broadcast %cst_32 : f32 to vector<128x1xf32>
      %68 = arith.mulf %66, %67 : vector<128x1xf32>
      %69 = arith.maximumf %64, %68 : vector<128x1xf32>
      %c0_i32_33 = arith.constant 0 : i32
      %c26_i32_34 = arith.constant 26 : i32
      %70 = arith.addi %c0_i32_33, %c26_i32_34 : i32
      %c1_i32_35 = arith.constant 1 : i32
      %71:2 = scf.for %arg11 = %c0_i32_33 to %70 step %c1_i32_35 iter_args(%arg12 = %69, %arg13 = %60) -> (vector<128x1xf32>, vector<128x1xf32>)  : i32 {
        %95 = arith.addf %arg12, %arg13 : vector<128x1xf32>
        %cst_41 = arith.constant 5.000000e-01 : f32
        %96 = vector.broadcast %cst_41 : f32 to vector<128x1xf32>
        %97 = arith.mulf %96, %95 : vector<128x1xf32>
        %98 = vector.broadcast %97 : vector<128x1xf32> to vector<128x256xf32>
        %99 = arith.subf %58, %98 : vector<128x256xf32>
        %cst_42 = arith.constant 0.000000e+00 : f32
        %100 = vector.broadcast %cst_42 : f32 to vector<128x256xf32>
        %101 = arith.maximumf %99, %100 : vector<128x256xf32>
        %cst_43 = arith.constant dense<0.000000e+00> : vector<128xf32>
        %102 = vector.multi_reduction <add>, %101, %cst_43 [1] : vector<128x256xf32> to vector<128xf32>
        %103 = vector.shape_cast %102 : vector<128xf32> to vector<128x1xf32>
        %cst_44 = arith.constant 1.000000e+00 : f32
        %104 = vector.broadcast %cst_44 : f32 to vector<128x1xf32>
        %105 = arith.cmpf oge, %103, %104 : vector<128x1xf32>
        %106 = arith.select %105, %97, %arg12 : vector<128x1xi1>, vector<128x1xf32>
        %107 = arith.select %105, %arg13, %97 : vector<128x1xi1>, vector<128x1xf32>
        scf.yield %106, %107 : vector<128x1xf32>, vector<128x1xf32>
      }
      %72 = vector.broadcast %71#0 : vector<128x1xf32> to vector<128x256xf32>
      %73 = arith.cmpf oge, %58, %72 : vector<128x256xf32>
      %74 = arith.extui %73 : vector<128x256xi1> to vector<128x256xi32>
      %75 = arith.sitofp %74 : vector<128x256xi32> to vector<128x256xf32>
      %cst_36 = arith.constant dense<0.000000e+00> : vector<128xf32>
      %76 = vector.multi_reduction <add>, %75, %cst_36 [1] : vector<128x256xf32> to vector<128xf32>
      %77 = vector.shape_cast %76 : vector<128xf32> to vector<128x1xf32>
      %78 = arith.mulf %58, %75 : vector<128x256xf32>
      %cst_37 = arith.constant dense<0.000000e+00> : vector<128xf32>
      %79 = vector.multi_reduction <add>, %78, %cst_37 [1] : vector<128x256xf32> to vector<128xf32>
      %80 = vector.shape_cast %79 : vector<128xf32> to vector<128x1xf32>
      %cst_38 = arith.constant 1.000000e+00 : f32
      %81 = vector.broadcast %cst_38 : f32 to vector<128x1xf32>
      %82 = arith.subf %80, %81 : vector<128x1xf32>
      %83 = arith.divf %82, %77 : vector<128x1xf32>
      %84 = vector.broadcast %83 : vector<128x1xf32> to vector<128x256xf32>
      %85 = arith.subf %58, %84 : vector<128x256xf32>
      %cst_39 = arith.constant 0.000000e+00 : f32
      %86 = vector.broadcast %cst_39 : f32 to vector<128x256xf32>
      %87 = arith.maximumf %85, %86 : vector<128x256xf32>
      %88 = arith.sitofp %arg8 : i32 to f32
      %cst_40 = arith.constant 3.000000e+00 : f32
      %89 = arith.addf %88, %cst_40 : f32
      %90 = arith.divf %88, %89 : f32
      %91 = arith.subf %87, %arg10 : vector<128x256xf32>
      %92 = vector.broadcast %90 : f32 to vector<128x256xf32>
      %93 = arith.mulf %92, %91 : vector<128x256xf32>
      %94 = arith.addf %87, %93 : vector<128x256xf32>
      scf.yield %94, %87 : vector<128x256xf32>, vector<128x256xf32>
    }
    %c7_i32_23 = arith.constant 7 : i32
    %cst_24 = arith.constant dense<0.000000e+00> : vector<128x128xf32>
    %54 = tpu.matmul %53#1, %1, %cst_24 {dimension_numbers = #tpu.dot_dimension_numbers<[1], [0], [0], [1], [0, 0, 1, 1], [], []>} : vector<128x256xf32>, vector<256x128xf32>, vector<128x128xf32> -> vector<128x128xf32>
    %c0_25 = arith.constant 0 : index
    %c0_26 = arith.constant 0 : index
    %55 = vector.load %arg7[%c0_25, %c0_26] : memref<128x128xf32, #tpu.memory_space<vmem>>, vector<128x128xf32>
    tpu.vector_store %arg7[%c0_25, %c0_26], %54 {strides = array<i32>} : memref<128x128xf32, #tpu.memory_space<vmem>>, vector<128x128xf32>,
    return
  }
  func.func @transform_0(%arg0: i32) -> i32 {
    %c0_i32 = arith.constant 0 : i32
    %c0_i32_0 = arith.constant 0 : i32
    return %c0_i32 : i32
  }
  func.func @transform_1(%arg0: i32) -> i32 {
    %c0_i32 = arith.constant 0 : i32
    %c0_i32_0 = arith.constant 0 : i32
    return %c0_i32 : i32
  }
  func.func @transform_2(%arg0: i32) -> (i32, i32) {
    %c0_i32 = arith.constant 0 : i32
    %c0_i32_0 = arith.constant 0 : i32
    return %arg0, %c0_i32 : i32, i32
  }
  func.func @transform_3(%arg0: i32) -> (i32, i32) {
    %c0_i32 = arith.constant 0 : i32
    %c0_i32_0 = arith.constant 0 : i32
    %c0_i32_1 = arith.constant 0 : i32
    return %c0_i32, %c0_i32_0 : i32, i32
  }
  func.func @transform_4(%arg0: i32) -> (i32, i32) {
    %c0_i32 = arith.constant 0 : i32
    %c0_i32_0 = arith.constant 0 : i32
    %c0_i32_1 = arith.constant 0 : i32
    return %c0_i32, %c0_i32_0 : i32, i32
  }
  func.func @transform_5(%arg0: i32) -> (i32, i32) {
    %c0_i32 = arith.constant 0 : i32
    %c0_i32_0 = arith.constant 0 : i32
    %c0_i32_1 = arith.constant 0 : i32
    return %c0_i32, %c0_i32_0 : i32, i32
  }
  func.func @transform_6(%arg0: i32) -> (i32, i32) {
    %c0_i32 = arith.constant 0 : i32
    %c0_i32_0 = arith.constant 0 : i32
    return %arg0, %c0_i32 : i32, i32
  }
}

</mosaic_0001>

<llo_original>
// kernel: tpu_custom_call.1
$region0: #{tpu_custom_call.1}
  #allocation0 [shape = 'u32[]', space=smem, size = 0x4, offset = 0x4, fixed_abs, tag = 'smem constant byte address 0x4 - core index']
  #allocation1 [shape = 'u32[144,128]{1,0:T(1,128)}', space=vmem, size = 0x12000, scoped, tag = 'internal scratch']
  #allocation2 [shape = 'f32[1]{0:T(128)S(6)}', space=smem, size = 0x200, scoped, tag = 'scoped memory for tpu_custom_call.1']
  #allocation3 [shape = 'f32[1]{0:T(128)S(6)}', space=smem, size = 0x200, scoped, tag = 'scoped memory for tpu_custom_call.1']
  %s0 = inlined_call_operand.<no memory space> [shape: f32[1], index: 0, kind: input, shape index: {}]
  %s1 = inlined_call_operand.<no memory space> [shape: f32[1], index: 1, kind: input, shape index: {}]
  %s2 = inlined_call_operand.hbm [shape: f32[256,128], index: 2, kind: input, shape index: {}]
  %s3 = inlined_call_operand.hbm [shape: f32[256,128], index: 3, kind: input, shape index: {}]
  %s4 = inlined_call_operand.hbm [shape: f32[256,256], index: 4, kind: input, shape index: {}]
  %s5 = inlined_call_operand.vmem [shape: f32[1,256], index: 5, kind: input, shape index: {}]
  %s6 = inlined_call_operand.hbm [shape: f32[256,128], index: 6, kind: output, shape index: {}]
  %s7 = sld [smem:[#allocation0]]
  $region90: #{tpu_custom_call.1} parent=0
    _
  %s9 = ssub.s32 1, %s7
  %s10 = scalar_select 0, %s9, %s7
  %11 = sst [smem:[#allocation2]] %s0
  %12 = sst [smem:[#allocation3]] %s1
  $region1: #{tpu_custom_call.1} parent=0
    #allocation4 [shape = 'u8[131072]{0}', space=vmem, size = 0x20000, scoped, tag = 'input window, operand 2']
    #allocation5 [shape = 's32[2]{0}', space=sflag, size = 0x8, scoped, tag = 'scoped memory for tpu_custom_call.1']
    #allocation6 [shape = 's32[2]{0}', space=sflag, size = 0x8, scoped, tag = 'scoped memory for tpu_custom_call.1']
    #allocation7 [shape = 'u8[131072]{0}', space=vmem, size = 0x20000, scoped, tag = 'input window, operand 3, single buffered']
    #allocation8 [shape = 's32[1]{0}', space=sflag, size = 0x4, scoped, tag = 'scoped memory for tpu_custom_call.1']
    #allocation9 [shape = 'u8[262144]{0}', space=vmem, size = 0x40000, scoped, tag = 'input window, operand 4, single buffered']
    #allocation10 [shape = 'u8[131072]{0}', space=vmem, size = 0x20000, scoped, tag = 'output window, operand 0']
    %13 = vsyncpa [#allocation5], 0
    %s14 = scalar_lea.sflag [#allocation5], 1
    %15 = vsyncpa %s14, 0
    %16 = vsyncpa [#allocation8], 0
    %17 = vsyncpa [#allocation6], 0
    %s18 = scalar_lea.sflag [#allocation6], 1
    %19 = vsyncpa %s18, 0
    loop: start=0, step=1, limit=4
    $region2: #{tpu_custom_call.1} parent=1 // loop_pre_header
      _
    $region3: #{tpu_custom_call.1} parent=1 // loop_header
      %s21 = sphi 0, %s25
      %p22 = scmp.ge.s32.totalorder %s21, 4
      %s29 = sphi 0, %s29
      %s31 = sphi 0, %s29
      %s32 = sphi 0, %s31
      %s46 = sphi 0, %s32
      %s50 = sphi 0, %s50
      %s52 = sphi 0, %s50
      %s53 = sphi 0, %s52
      %s67 = sphi 0, %s53
      %s73 = sphi 0, %s75
      %s76 = sphi 0, %s73
      %s77 = sphi 0, %s76
      %s93 = sphi 0, %s77
      %s97 = sphi 0, %s97
      %s99 = sphi 0, %s97
      %s100 = sphi 0, %s99
      %s114 = sphi 0, %s100
      %s118 = sphi 0, %s118
      %s120 = sphi 0, %s118
      %s121 = sphi 0, %s120
      %s135 = sphi 0, %s121
      %s139 = sphi 0, %s139
      %s141 = sphi 0, %s139
      %s142 = sphi 0, %s141
      %s156 = sphi 0, %s142
      %s162 = sphi 0, %s164
      %s165 = sphi 0, %s162
      %s166 = sphi 0, %s165
      %s182 = sphi 0, %s166
    $region4: #{tpu_custom_call.1} parent=1 // loop_header_branch
      %24 = sbr.rel (%p22) target = $region8
    $region5: #{tpu_custom_call.1} parent=1 // loop_body
      %s26 = ssub.s32 %s21, 1
      %s27 = ssub.s32 %s21, 2
      %s28 = sadd.s32 %s21, 1
      %s30 = sadd.s32 %s29, 1
      %p33 = scmp.eq.s32.totalorder %s21, 1
      %p34 = scmp.ne.s32.totalorder %s29, %s31
      %p35 = scmp.eq.s32.totalorder %s21, 0
      %p36 = por %p34, %p35
      %p37 = scmp.ne.s32.totalorder %s29, %s31
      %p38 = scmp.eq.s32.totalorder %s26, 1
      %p39 = por %p37, %p38
      %p40 = scmp.ne.s32.totalorder %s31, %s32
      %p41 = scmp.eq.s32.totalorder %s26, 0
      %p42 = por %p40, %p41
      %p43 = scmp.ne.s32.totalorder %s31, %s32
      %p44 = scmp.eq.s32.totalorder %s27, 1
      %p45 = por %p43, %p44
      %p47 = scmp.ne.s32.totalorder %s32, %s46
      %p48 = scmp.eq.s32.totalorder %s27, 0
      %p49 = por %p47, %p48
      %s51 = sadd.s32 %s50, 1
      %p54 = scmp.eq.s32.totalorder %s21, 1
      %p55 = scmp.ne.s32.totalorder %s50, %s52
      %p56 = scmp.eq.s32.totalorder %s21, 0
      %p57 = por %p55, %p56
      %p58 = scmp.ne.s32.totalorder %s50, %s52
      %p59 = scmp.eq.s32.totalorder %s26, 1
      %p60 = por %p58, %p59
      %p61 = scmp.ne.s32.totalorder %s52, %s53
      %p62 = scmp.eq.s32.totalorder %s26, 0
      %p63 = por %p61, %p62
      %p64 = scmp.ne.s32.totalorder %s52, %s53
      %p65 = scmp.eq.s32.totalorder %s27, 1
      %p66 = por %p64, %p65
      %p68 = scmp.ne.s32.totalorder %s53, %s67
      %p69 = scmp.eq.s32.totalorder %s27, 0
      %p70 = por %p68, %p69
      %s71 = ssub.s32 %s21, %s28
      %p72 = scmp.eq.s32.totalorder %s71, 0
      %s74 = sadd.s32 %s73, 1
      %s75 = scalar_select %p72, %s73, %s74
      %p78 = pneg %p72
      %p79 = scmp.eq.s32.totalorder %s21, 1
      %p80 = por %p78, %p79
      %p81 = scmp.ne.s32.totalorder %s73, %s76
      %p82 = scmp.eq.s32.totalorder %s21, 0
      %p83 = por %p81, %p82
      %p84 = scmp.ne.s32.totalorder %s73, %s76
      %p85 = scmp.eq.s32.totalorder %s26, 1
      %p86 = por %p84, %p85
      %p87 = scmp.ne.s32.totalorder %s76, %s77
      %p88 = scmp.eq.s32.totalorder %s26, 0
      %p89 = por %p87, %p88
      %p90 = scmp.ne.s32.totalorder %s76, %s77
      %p91 = scmp.eq.s32.totalorder %s27, 1
      %p92 = por %p90, %p91
      %p94 = scmp.ne.s32.totalorder %s77, %s93
      %p95 = scmp.eq.s32.totalorder %s27, 0
      %p96 = por %p94, %p95
      %s98 = sadd.s32 %s97, 1
      %p101 = scmp.eq.s32.totalorder %s21, 1
      %p102 = scmp.ne.s32.totalorder %s97, %s99
      %p103 = scmp.eq.s32.totalorder %s21, 0
      %p104 = por %p102, %p103
      %p105 = scmp.ne.s32.totalorder %s97, %s99
      %p106 = scmp.eq.s32.totalorder %s26, 1
      %p107 = por %p105, %p106
      %p108 = scmp.ne.s32.totalorder %s99, %s100
      %p109 = scmp.eq.s32.totalorder %s26, 0
      %p110 = por %p108, %p109
      %p111 = scmp.ne.s32.totalorder %s99, %s100
      %p112 = scmp.eq.s32.totalorder %s27, 1
      %p113 = por %p111, %p112
      %p115 = scmp.ne.s32.totalorder %s100, %s114
      %p116 = scmp.eq.s32.totalorder %s27, 0
      %p117 = por %p115, %p116
      %s119 = sadd.s32 %s118, 1
      %p122 = scmp.eq.s32.totalorder %s21, 1
      %p123 = scmp.ne.s32.totalorder %s118, %s120
      %p124 = scmp.eq.s32.totalorder %s21, 0
      %p125 = por %p123, %p124
      %p126 = scmp.ne.s32.totalorder %s118, %s120
      %p127 = scmp.eq.s32.totalorder %s26, 1
      %p128 = por %p126, %p127
      %p129 = scmp.ne.s32.totalorder %s120, %s121
      %p130 = scmp.eq.s32.totalorder %s26, 0
      %p131 = por %p129, %p130
      %p132 = scmp.ne.s32.totalorder %s120, %s121
      %p133 = scmp.eq.s32.totalorder %s27, 1
      %p134 = por %p132, %p133
      %p136 = scmp.ne.s32.totalorder %s121, %s135
      %p137 = scmp.eq.s32.totalorder %s27, 0
      %p138 = por %p136, %p137
      %s140 = sadd.s32 %s139, 1
      %p143 = scmp.eq.s32.totalorder %s21, 1
      %p144 = scmp.ne.s32.totalorder %s139, %s141
      %p145 = scmp.eq.s32.totalorder %s21, 0
      %p146 = por %p144, %p145
      %p147 = scmp.ne.s32.totalorder %s139, %s141
      %p148 = scmp.eq.s32.totalorder %s26, 1
      %p149 = por %p147, %p148
      %p150 = scmp.ne.s32.totalorder %s141, %s142
      %p151 = scmp.eq.s32.totalorder %s26, 0
      %p152 = por %p150, %p151
      %p153 = scmp.ne.s32.totalorder %s141, %s142
      %p154 = scmp.eq.s32.totalorder %s27, 1
      %p155 = por %p153, %p154
      %p157 = scmp.ne.s32.totalorder %s142, %s156
      %p158 = scmp.eq.s32.totalorder %s27, 0
      %p159 = por %p157, %p158
      %s160 = ssub.s32 %s21, %s28
      %p161 = scmp.eq.s32.totalorder %s160, 0
      %s163 = sadd.s32 %s162, 1
      %s164 = scalar_select %p161, %s162, %s163
      %p167 = pneg %p161
      %p168 = scmp.eq.s32.totalorder %s21, 1
      %p169 = por %p167, %p168
      %p170 = scmp.ne.s32.totalorder %s162, %s165
      %p171 = scmp.eq.s32.totalorder %s21, 0
      %p172 = por %p170, %p171
      %p173 = scmp.ne.s32.totalorder %s162, %s165
      %p174 = scmp.eq.s32.totalorder %s26, 1
      %p175 = por %p173, %p174
      %p176 = scmp.ne.s32.totalorder %s165, %s166
      %p177 = scmp.eq.s32.totalorder %s26, 0
      %p178 = por %p176, %p177
      %p179 = scmp.ne.s32.totalorder %s165, %s166
      %p180 = scmp.eq.s32.totalorder %s27, 1
      %p181 = por %p179, %p180
      %p183 = scmp.ne.s32.totalorder %s166, %s182
      %p184 = scmp.eq.s32.totalorder %s27, 0
      %p185 = por %p183, %p184
      %p186 = scmp.le.s32.totalorder 1, %s21
      %p187 = scmp.lt.s32.totalorder %s21, 3
      %p188 = pnand %p186, %p187
      %p189 = pneg %p188
      // Predicated region
      $region9: #{tpu_custom_call.1} parent=5 // pred_check
        _
      $region10: #{tpu_custom_call.1} parent=5 // pred_check_branch
        %191 = sbr.rel (%p188) target = $region12
      $region11: #{tpu_custom_call.1} parent=5 // pred_region
        %s192 = ssub.s32 %s21, 1
        // Predicated region
        $region13: #{tpu_custom_call.1} parent=11 // pred_check
          %p193 = pneg %p42
        $region14: #{tpu_custom_call.1} parent=11 // pred_check_branch
          %195 = sbr.rel (%p193) target = $region16
        $region15: #{tpu_custom_call.1} parent=11 // pred_region
          _
        $region16: #{tpu_custom_call.1} parent=11 // pred_fallthru
          _
        // Predicated region
        $region17: #{tpu_custom_call.1} parent=11 // pred_check
          %p196 = pneg %p63
        $region18: #{tpu_custom_call.1} parent=11 // pred_check_branch
          %198 = sbr.rel (%p196) target = $region20
        $region19: #{tpu_custom_call.1} parent=11 // pred_region
          _
        $region20: #{tpu_custom_call.1} parent=11 // pred_fallthru
          _
        // Predicated region
        $region21: #{tpu_custom_call.1} parent=11 // pred_check
          %p199 = pneg %p110
        $region22: #{tpu_custom_call.1} parent=11 // pred_check_branch
          %201 = sbr.rel (%p199) target = $region24
        $region23: #{tpu_custom_call.1} parent=11 // pred_region
          %s203 = ssub.s32 4096, 4096
          %204 = vsyncadd [#allocation8], %s203
          %s205 = sshll.u32 [#allocation7], 4
          %s206 = int_to_ptr.vmem [resolvable:$true] %s205
          %211 = dma.hbm_to_vmem [thread:$0]  %s3, 4096, %s206, [#allocation8], 128, 128, 8
        $region24: #{tpu_custom_call.1} parent=11 // pred_fallthru
          _
        // Predicated region
        $region25: #{tpu_custom_call.1} parent=11 // pred_check
          %p212 = pneg %p131
        $region26: #{tpu_custom_call.1} parent=11 // pred_check_branch
          %214 = sbr.rel (%p212) target = $region28
        $region27: #{tpu_custom_call.1} parent=11 // pred_region
          %s216 = ssub.s32 8192, 8192
          %217 = vsyncadd [#allocation8], %s216
          %s218 = sshll.u32 [#allocation9], 4
          %s219 = int_to_ptr.vmem [resolvable:$true] %s218
          %224 = dma.hbm_to_vmem [thread:$0]  %s4, 8192, %s219, [#allocation8], 256, 256, 16
        $region28: #{tpu_custom_call.1} parent=11 // pred_fallthru
          _
        // Predicated region
        $region29: #{tpu_custom_call.1} parent=11 // pred_check
          %p225 = pneg %p152
        $region30: #{tpu_custom_call.1} parent=11 // pred_check_branch
          %227 = sbr.rel (%p225) target = $region32
        $region31: #{tpu_custom_call.1} parent=11 // pred_region
          _
        $region32: #{tpu_custom_call.1} parent=11 // pred_fallthru
          _
      $region12: #{tpu_custom_call.1} parent=5 // pred_fallthru
        _
      %p228 = scmp.lt.s32.totalorder %s21, 2
      // Predicated region
      $region33: #{tpu_custom_call.1} parent=5 // pred_check
        %p229 = pneg %p228
      $region34: #{tpu_custom_call.1} parent=5 // pred_check_branch
        %231 = sbr.rel (%p229) target = $region36
      $region35: #{tpu_custom_call.1} parent=5 // pred_region
        // Predicated region
        $region37: #{tpu_custom_call.1} parent=35 // pred_check
          %p232 = pneg %p83
        $region38: #{tpu_custom_call.1} parent=35 // pred_check_branch
          %234 = sbr.rel (%p232) target = $region40
        $region39: #{tpu_custom_call.1} parent=35 // pred_region
          %s235 = sand.u32 %s73, 1
          %s236 = scalar_lea.sflag [#allocation5], %s235
          %s237 = sand.u32 %s73, 1
          %s238 = smul.addr %s237, 128
          %s239 = scalar_lea.vmem [#allocation4], %s238
          %s240 = smul.u32 16, %s21
          %s242 = ssub.s32 2048, 2048
          %243 = vsyncadd %s236, %s242
          %s244 = smul.addr %s240, 128
          %s245 = scalar_lea.hbm %s2, %s244
          %s246 = sshll.u32 %s239, 4
          %s247 = int_to_ptr.vmem [resolvable:$true] %s246
          %252 = dma.hbm_to_vmem [thread:$0]  %s245, 2048, %s247, %s236, 128, 128, 8
        $region40: #{tpu_custom_call.1} parent=35 // pred_fallthru
          _
      $region36: #{tpu_custom_call.1} parent=5 // pred_fallthru
        _
      %p253 = scmp.le.s32.totalorder 1, %s21
      %p254 = scmp.lt.s32.totalorder %s21, 3
      %p255 = pnand %p253, %p254
      %p256 = pneg %p255
      // Predicated region
      $region41: #{tpu_custom_call.1} parent=5 // pred_check
        _
      $region42: #{tpu_custom_call.1} parent=5 // pred_check_branch
        %258 = sbr.rel (%p255) target = $region44
      $region43: #{tpu_custom_call.1} parent=5 // pred_region
        %s259 = ssub.s32 %s21, 1
        %s260 = sand.u32 %s76, 1
        %s261 = scalar_lea.sflag [#allocation5], %s260
        %s262 = sand.u32 %s76, 1
        %s263 = smul.addr %s262, 128
        %s264 = scalar_lea.vmem [#allocation4], %s263
        // Predicated region
        $region45: #{tpu_custom_call.1} parent=43 // pred_check
          %p265 = pneg %p89
        $region46: #{tpu_custom_call.1} parent=43 // pred_check_branch
          %267 = sbr.rel (%p265) target = $region48
        $region47: #{tpu_custom_call.1} parent=43 // pred_region
          %268 = dma.done %s261, 2048
        $region48: #{tpu_custom_call.1} parent=43 // pred_fallthru
          _
        // Predicated region
        $region49: #{tpu_custom_call.1} parent=43 // pred_check
          %p269 = pneg %p110
        $region50: #{tpu_custom_call.1} parent=43 // pred_check_branch
          %271 = sbr.rel (%p269) target = $region52
        $region51: #{tpu_custom_call.1} parent=43 // pred_region
          %272 = dma.done [#allocation8], 4096
        $region52: #{tpu_custom_call.1} parent=43 // pred_fallthru
          _
        // Predicated region
        $region53: #{tpu_custom_call.1} parent=43 // pred_check
          %p273 = pneg %p131
        $region54: #{tpu_custom_call.1} parent=43 // pred_check_branch
          %275 = sbr.rel (%p273) target = $region56
        $region55: #{tpu_custom_call.1} parent=43 // pred_region
          %276 = dma.done [#allocation8], 8192
        $region56: #{tpu_custom_call.1} parent=43 // pred_fallthru
          _
        %p277 = pneg %p42
        %p278 = pneg %p39
        %p279 = pneg %p63
        %p280 = pneg %p60
        %s281 = sand.u32 %s76, 1
        %s282 = scalar_lea.sflag [#allocation5], %s281
        %s283 = sand.u32 %s76, 1
        %s284 = smul.addr %s283, 128
        %s285 = scalar_lea.vmem [#allocation4], %s284
        %p286 = pneg %p89
        %p287 = pneg %p86
        %p288 = pneg %p110
        %p289 = pneg %p107
        %p290 = pneg %p131
        %p291 = pneg %p128
        %p292 = pneg %p152
        %p293 = pneg %p149
        %p294 = pneg %p178
        %p295 = pneg %p175
        %s296 = sand.u32 %s165, 1
        %s297 = scalar_lea.sflag [#allocation6], %s296
        %s298 = sand.u32 %s165, 1
        %s299 = smul.addr %s298, 128
        %s300 = scalar_lea.vmem [#allocation10], %s299
        %s301 = smul.u32 16, %s26
        %s302 = smul.u32 16, %s26
        %v303 = vld [vmem:[%s264] sm:$0xff]
        %v304 = vld [vmem:[%s264 + $0x8] sm:$0xff]
        %v305 = vld [vmem:[%s264 + $0x10] sm:$0xff]
        %v306 = vld [vmem:[%s264 + $0x18] sm:$0xff]
        %v307 = vld [vmem:[%s264 + $0x20] sm:$0xff]
        %v308 = vld [vmem:[%s264 + $0x28] sm:$0xff]
        %v309 = vld [vmem:[%s264 + $0x30] sm:$0xff]
        %v310 = vld [vmem:[%s264 + $0x38] sm:$0xff]
        %v311 = vld [vmem:[%s264 + $0x40] sm:$0xff]
        %v312 = vld [vmem:[%s264 + $0x48] sm:$0xff]
        %v313 = vld [vmem:[%s264 + $0x50] sm:$0xff]
        %v314 = vld [vmem:[%s264 + $0x58] sm:$0xff]
        %v315 = vld [vmem:[%s264 + $0x60] sm:$0xff]
        %v316 = vld [vmem:[%s264 + $0x68] sm:$0xff]
        %v317 = vld [vmem:[%s264 + $0x70] sm:$0xff]
        %v318 = vld [vmem:[%s264 + $0x78] sm:$0xff]
        %v319 = vld [vmem:[#allocation7] sm:$0xff]
        %v320 = vld [vmem:[#allocation7 + $0x8] sm:$0xff]
        %v321 = vld [vmem:[#allocation7 + $0x10] sm:$0xff]
        %v322 = vld [vmem:[#allocation7 + $0x18] sm:$0xff]
        %v323 = vld [vmem:[#allocation7 + $0x20] sm:$0xff]
        %v324 = vld [vmem:[#allocation7 + $0x28] sm:$0xff]
        %v325 = vld [vmem:[#allocation7 + $0x30] sm:$0xff]
        %v326 = vld [vmem:[#allocation7 + $0x38] sm:$0xff]
        %v327 = vld [vmem:[#allocation7 + $0x40] sm:$0xff]
        %v328 = vld [vmem:[#allocation7 + $0x48] sm:$0xff]
        %v329 = vld [vmem:[#allocation7 + $0x50] sm:$0xff]
        %v330 = vld [vmem:[#allocation7 + $0x58] sm:$0xff]
        %v331 = vld [vmem:[#allocation7 + $0x60] sm:$0xff]
        %v332 = vld [vmem:[#allocation7 + $0x68] sm:$0xff]
        %v333 = vld [vmem:[#allocation7 + $0x70] sm:$0xff]
        %v334 = vld [vmem:[#allocation7 + $0x78] sm:$0xff]
        %v335 = vld [vmem:[#allocation7 + $0x80] sm:$0xff]
        %v336 = vld [vmem:[#allocation7 + $0x88] sm:$0xff]
        %v337 = vld [vmem:[#allocation7 + $0x90] sm:$0xff]
        %v338 = vld [vmem:[#allocation7 + $0x98] sm:$0xff]
        %v339 = vld [vmem:[#allocation7 + $0xa0] sm:$0xff]
        %v340 = vld [vmem:[#allocation7 + $0xa8] sm:$0xff]
        %v341 = vld [vmem:[#allocation7 + $0xb0] sm:$0xff]
        %v342 = vld [vmem:[#allocation7 + $0xb8] sm:$0xff]
        %v343 = vld [vmem:[#allocation7 + $0xc0] sm:$0xff]
        %v344 = vld [vmem:[#allocation7 + $0xc8] sm:$0xff]
        %v345 = vld [vmem:[#allocation7 + $0xd0] sm:$0xff]
        %v346 = vld [vmem:[#allocation7 + $0xd8] sm:$0xff]
        %v347 = vld [vmem:[#allocation7 + $0xe0] sm:$0xff]
        %v348 = vld [vmem:[#allocation7 + $0xe8] sm:$0xff]
        %v349 = vld [vmem:[#allocation7 + $0xf0] sm:$0xff]
        %v350 = vld [vmem:[#allocation7 + $0xf8] sm:$0xff]
        %v351 = vld [vmem:[#allocation9] sm:$0xff]
        %v352 = vld [vmem:[#allocation9 + $0x8] sm:$0xff]
        %v353 = vld [vmem:[#allocation9 + $0x10] sm:$0xff]
        %v354 = vld [vmem:[#allocation9 + $0x18] sm:$0xff]
        %v355 = vld [vmem:[#allocation9 + $0x20] sm:$0xff]
        %v356 = vld [vmem:[#allocation9 + $0x28] sm:$0xff]
        %v357 = vld [vmem:[#allocation9 + $0x30] sm:$0xff]
        %v358 = vld [vmem:[#allocation9 + $0x38] sm:$0xff]
        %v359 = vld [vmem:[#allocation9 + $0x40] sm:$0xff]
        %v360 = vld [vmem:[#allocation9 + $0x48] sm:$0xff]
        %v361 = vld [vmem:[#allocation9 + $0x50] sm:$0xff]
        %v362 = vld [vmem:[#allocation9 + $0x58] sm:$0xff]
        %v363 = vld [vmem:[#allocation9 + $0x60] sm:$0xff]
        %v364 = vld [vmem:[#allocation9 + $0x68] sm:$0xff]
        %v365 = vld [vmem:[#allocation9 + $0x70] sm:$0xff]
        %v366 = vld [vmem:[#allocation9 + $0x78] sm:$0xff]
        %v367 = vld [vmem:[#allocation9 + $0x80] sm:$0xff]
        %v368 = vld [vmem:[#allocation9 + $0x88] sm:$0xff]
        %v369 = vld [vmem:[#allocation9 + $0x90] sm:$0xff]
        %v370 = vld [vmem:[#allocation9 + $0x98] sm:$0xff]
        %v371 = vld [vmem:[#allocation9 + $0xa0] sm:$0xff]
        %v372 = vld [vmem:[#allocation9 + $0xa8] sm:$0xff]
        %v373 = vld [vmem:[#allocation9 + $0xb0] sm:$0xff]
        %v374 = vld [vmem:[#allocation9 + $0xb8] sm:$0xff]
        %v375 = vld [vmem:[#allocation9 + $0xc0] sm:$0xff]
        %v376 = vld [vmem:[#allocation9 + $0xc8] sm:$0xff]
        %v377 = vld [vmem:[#allocation9 + $0xd0] sm:$0xff]
        %v378 = vld [vmem:[#allocation9 + $0xd8] sm:$0xff]
        %v379 = vld [vmem:[#allocation9 + $0xe0] sm:$0xff]
        %v380 = vld [vmem:[#allocation9 + $0xe8] sm:$0xff]
        %v381 = vld [vmem:[#allocation9 + $0xf0] sm:$0xff]
        %v382 = vld [vmem:[#allocation9 + $0xf8] sm:$0xff]
        %v383 = vld [vmem:[#allocation9 + $0x100] sm:$0xff]
        %v384 = vld [vmem:[#allocation9 + $0x108] sm:$0xff]
        %v385 = vld [vmem:[#allocation9 + $0x110] sm:$0xff]
        %v386 = vld [vmem:[#allocation9 + $0x118] sm:$0xff]
        %v387 = vld [vmem:[#allocation9 + $0x120] sm:$0xff]
        %v388 = vld [vmem:[#allocation9 + $0x128] sm:$0xff]
        %v389 = vld [vmem:[#allocation9 + $0x130] sm:$0xff]
        %v390 = vld [vmem:[#allocation9 + $0x138] sm:$0xff]
        %v391 = vld [vmem:[#allocation9 + $0x140] sm:$0xff]
        %v392 = vld [vmem:[#allocation9 + $0x148] sm:$0xff]
        %v393 = vld [vmem:[#allocation9 + $0x150] sm:$0xff]
        %v394 = vld [vmem:[#allocation9 + $0x158] sm:$0xff]
        %v395 = vld [vmem:[#allocation9 + $0x160] sm:$0xff]
        %v396 = vld [vmem:[#allocation9 + $0x168] sm:$0xff]
        %v397 = vld [vmem:[#allocation9 + $0x170] sm:$0xff]
        %v398 = vld [vmem:[#allocation9 + $0x178] sm:$0xff]
        %v399 = vld [vmem:[#allocation9 + $0x180] sm:$0xff]
        %v400 = vld [vmem:[#allocation9 + $0x188] sm:$0xff]
        %v401 = vld [vmem:[#allocation9 + $0x190] sm:$0xff]
        %v402 = vld [vmem:[#allocation9 + $0x198] sm:$0xff]
        %v403 = vld [vmem:[#allocation9 + $0x1a0] sm:$0xff]
        %v404 = vld [vmem:[#allocation9 + $0x1a8] sm:$0xff]
        %v405 = vld [vmem:[#allocation9 + $0x1b0] sm:$0xff]
        %v406 = vld [vmem:[#allocation9 + $0x1b8] sm:$0xff]
        %v407 = vld [vmem:[#allocation9 + $0x1c0] sm:$0xff]
        %v408 = vld [vmem:[#allocation9 + $0x1c8] sm:$0xff]
        %v409 = vld [vmem:[#allocation9 + $0x1d0] sm:$0xff]
        %v410 = vld [vmem:[#allocation9 + $0x1d8] sm:$0xff]
        %v411 = vld [vmem:[#allocation9 + $0x1e0] sm:$0xff]
        %v412 = vld [vmem:[#allocation9 + $0x1e8] sm:$0xff]
        %v413 = vld [vmem:[#allocation9 + $0x1f0] sm:$0xff]
        %v414 = vld [vmem:[#allocation9 + $0x1f8] sm:$0xff]
        %v415 = vld [vmem:[%s5] sm:$0x3]
        %s416 = sld [smem:[#allocation2]]
        %s417 = sld [smem:[#allocation3]]
        %418 = vmatprep.subr.mxu0 0.0
        %419 = vmatpush1.xpose.msra.mxu0 %v319
        %420 = vmatprep.subr.mxu0 0.0
        %421 = vmatpush1.xpose.msra.mxu0 %v320
        %422 = vmatprep.subr.mxu0 0.0
        %423 = vmatpush1.xpose.msra.mxu0 %v321
        %424 = vmatprep.subr.mxu0 0.0
        %425 = vmatpush1.xpose.msra.mxu0 %v322
        %426 = vmatprep.subr.mxu0 0.0
        %427 = vmatpush1.xpose.msra.mxu0 %v323
        %428 = vmatprep.subr.mxu0 0.0
        %429 = vmatpush1.xpose.msra.mxu0 %v324
        %430 = vmatprep.subr.mxu0 0.0
        %431 = vmatpush1.xpose.msra.mxu0 %v325
        %432 = vmatprep.subr.mxu0 0.0
        %433 = vmatpush1.xpose.msra.mxu0 %v326
        %434 = vmatprep.subr.mxu0 0.0
        %435 = vmatpush1.xpose.msra.mxu0 %v327
        %436 = vmatprep.subr.mxu0 0.0
        %437 = vmatpush1.xpose.msra.mxu0 %v328
        %438 = vmatprep.subr.mxu0 0.0
        %439 = vmatpush1.xpose.msra.mxu0 %v329
        %440 = vmatprep.subr.mxu0 0.0
        %441 = vmatpush1.xpose.msra.mxu0 %v330
        %442 = vmatprep.subr.mxu0 0.0
        %443 = vmatpush1.xpose.msra.mxu0 %v331
        %444 = vmatprep.subr.mxu0 0.0
        %445 = vmatpush1.xpose.msra.mxu0 %v332
        %446 = vmatprep.subr.mxu0 0.0
        %447 = vmatpush1.xpose.msra.mxu0 %v333
        %448 = vmatprep.subr.mxu0 0.0
        %449 = vmatpush1.xpose.msra.mxu0 %v334
        %450 = vmatprep.subr.mxu0 0.0
        %451 = vmatpush1.xpose.msra.mxu0 %v335
        %452 = vmatprep.subr.mxu0 0.0
        %453 = vmatpush1.xpose.msra.mxu0 %v336
        %454 = vmatprep.subr.mxu0 0.0
        %455 = vmatpush1.xpose.msra.mxu0 %v337
        %456 = vmatprep.subr.mxu0 0.0
        %457 = vmatpush1.xpose.msra.mxu0 %v338
        %458 = vmatprep.subr.mxu0 0.0
        %459 = vmatpush1.xpose.msra.mxu0 %v339
        %460 = vmatprep.subr.mxu0 0.0
        %461 = vmatpush1.xpose.msra.mxu0 %v340
        %462 = vmatprep.subr.mxu0 0.0
        %463 = vmatpush1.xpose.msra.mxu0 %v341
        %464 = vmatprep.subr.mxu0 0.0
        %465 = vmatpush1.xpose.msra.mxu0 %v342
        %466 = vmatprep.subr.mxu0 0.0
        %467 = vmatpush1.xpose.msra.mxu0 %v343
        %468 = vmatprep.subr.mxu0 0.0
        %469 = vmatpush1.xpose.msra.mxu0 %v344
        %470 = vmatprep.subr.mxu0 0.0
        %471 = vmatpush1.xpose.msra.mxu0 %v345
        %472 = vmatprep.subr.mxu0 0.0
        %473 = vmatpush1.xpose.msra.mxu0 %v346
        %474 = vmatprep.subr.mxu0 0.0
        %475 = vmatpush1.xpose.msra.mxu0 %v347
        %476 = vmatprep.subr.mxu0 0.0
        %477 = vmatpush1.xpose.msra.mxu0 %v348
        %478 = vmatprep.subr.mxu0 0.0
        %479 = vmatpush1.xpose.msra.mxu0 %v349
        %480 = vmatprep.subr.mxu0 0.0
        %481 = vmatpush1.xpose.msra.mxu0 %v350
        %482 = vmatprep.mubr.f32.mxu0 0.0
        %483 = vmatmul.mubr.f32.gmra.mrb[0].mxu0 %v303
        %v484 = vpop.f32.mrb[0].mxu0
        %v485 = vadd.f32 0.0, %v484
        %v486 = vpop.f32.mrb[0].mxu0
        %v487 = vadd.f32 0.0, %v486
        %488 = vmatprep.mubr.f32.mxu0 0.0
        %489 = vmatmul.mubr.f32.gmra.mrb[0].mxu0 %v304
        %v490 = vpop.f32.mrb[0].mxu0
        %v491 = vadd.f32 0.0, %v490
        %v492 = vpop.f32.mrb[0].mxu0
        %v493 = vadd.f32 0.0, %v492
        %494 = vmatprep.mubr.f32.mxu0 0.0
        %495 = vmatmul.mubr.f32.gmra.mrb[0].mxu0 %v305
        %v496 = vpop.f32.mrb[0].mxu0
        %v497 = vadd.f32 0.0, %v496
        %v498 = vpop.f32.mrb[0].mxu0
        %v499 = vadd.f32 0.0, %v498
        %500 = vmatprep.mubr.f32.mxu0 0.0
        %501 = vmatmul.mubr.f32.gmra.mrb[0].mxu0 %v306
        %v502 = vpop.f32.mrb[0].mxu0
        %v503 = vadd.f32 0.0, %v502
        %v504 = vpop.f32.mrb[0].mxu0
        %v505 = vadd.f32 0.0, %v504
        %506 = vmatprep.mubr.f32.mxu0 0.0
        %507 = vmatmul.mubr.f32.gmra.mrb[0].mxu0 %v307
        %v508 = vpop.f32.mrb[0].mxu0
        %v509 = vadd.f32 0.0, %v508
        %v510 = vpop.f32.mrb[0].mxu0
        %v511 = vadd.f32 0.0, %v510
        %512 = vmatprep.mubr.f32.mxu0 0.0
        %513 = vmatmul.mubr.f32.gmra.mrb[0].mxu0 %v308
        %v514 = vpop.f32.mrb[0].mxu0
        %v515 = vadd.f32 0.0, %v514
        %v516 = vpop.f32.mrb[0].mxu0
        %v517 = vadd.f32 0.0, %v516
        %518 = vmatprep.mubr.f32.mxu0 0.0
        %519 = vmatmul.mubr.f32.gmra.mrb[0].mxu0 %v309
        %v520 = vpop.f32.mrb[0].mxu0
        %v521 = vadd.f32 0.0, %v520
        %v522 = vpop.f32.mrb[0].mxu0
        %v523 = vadd.f32 0.0, %v522
        %524 = vmatprep.mubr.f32.mxu0 0.0
        %525 = vmatmul.mubr.f32.gmra.mrb[0].mxu0 %v310
        %v526 = vpop.f32.mrb[0].mxu0
        %v527 = vadd.f32 0.0, %v526
        %v528 = vpop.f32.mrb[0].mxu0
        %v529 = vadd.f32 0.0, %v528
        %530 = vmatprep.mubr.f32.mxu0 0.0
        %531 = vmatmul.mubr.f32.gmra.mrb[0].mxu0 %v311
        %v532 = vpop.f32.mrb[0].mxu0
        %v533 = vadd.f32 0.0, %v532
        %v534 = vpop.f32.mrb[0].mxu0
        %v535 = vadd.f32 0.0, %v534
        %536 = vmatprep.mubr.f32.mxu0 0.0
        %537 = vmatmul.mubr.f32.gmra.mrb[0].mxu0 %v312
        %v538 = vpop.f32.mrb[0].mxu0
        %v539 = vadd.f32 0.0, %v538
        %v540 = vpop.f32.mrb[0].mxu0
        %v541 = vadd.f32 0.0, %v540
        %542 = vmatprep.mubr.f32.mxu0 0.0
        %543 = vmatmul.mubr.f32.gmra.mrb[0].mxu0 %v313
        %v544 = vpop.f32.mrb[0].mxu0
        %v545 = vadd.f32 0.0, %v544
        %v546 = vpop.f32.mrb[0].mxu0
        %v547 = vadd.f32 0.0, %v546
        %548 = vmatprep.mubr.f32.mxu0 0.0
        %549 = vmatmul.mubr.f32.gmra.mrb[0].mxu0 %v314
        %v550 = vpop.f32.mrb[0].mxu0
        %v551 = vadd.f32 0.0, %v550
        %v552 = vpop.f32.mrb[0].mxu0
        %v553 = vadd.f32 0.0, %v552
        %554 = vmatprep.mubr.f32.mxu0 0.0
        %555 = vmatmul.mubr.f32.gmra.mrb[0].mxu0 %v315
        %v556 = vpop.f32.mrb[0].mxu0
        %v557 = vadd.f32 0.0, %v556
        %v558 = vpop.f32.mrb[0].mxu0
        %v559 = vadd.f32 0.0, %v558
        %560 = vmatprep.mubr.f32.mxu0 0.0
        %561 = vmatmul.mubr.f32.gmra.mrb[0].mxu0 %v316
        %v562 = vpop.f32.mrb[0].mxu0
        %v563 = vadd.f32 0.0, %v562
        %v564 = vpop.f32.mrb[0].mxu0
        %v565 = vadd.f32 0.0, %v564
        %566 = vmatprep.mubr.f32.mxu0 0.0
        %567 = vmatmul.mubr.f32.gmra.mrb[0].mxu0 %v317
        %v568 = vpop.f32.mrb[0].mxu0
        %v569 = vadd.f32 0.0, %v568
        %v570 = vpop.f32.mrb[0].mxu0
        %v571 = vadd.f32 0.0, %v570
        %572 = vmatprep.mubr.f32.mxu0 0.0
        %573 = vmatmul.mubr.f32.gmra.mrb[0].mxu0 %v318
        %v574 = vpop.f32.mrb[0].mxu0
        %v575 = vadd.f32 0.0, %v574
        %v576 = vpop.f32.mrb[0].mxu0
        %v577 = vadd.f32 0.0, %v576
        %578 = vdwg.mxu0
        %v579 = vmul.f32 %v303, %v303
        %v580 = vmul.f32 %v304, %v304
        %v581 = vmul.f32 %v305, %v305
        %v582 = vmul.f32 %v306, %v306
        %v583 = vmul.f32 %v307, %v307
        %v584 = vmul.f32 %v308, %v308
        %v585 = vmul.f32 %v309, %v309
        %v586 = vmul.f32 %v310, %v310
        %v587 = vmul.f32 %v311, %v311
        %v588 = vmul.f32 %v312, %v312
        %v589 = vmul.f32 %v313, %v313
        %v590 = vmul.f32 %v314, %v314
        %v591 = vmul.f32 %v315, %v315
        %v592 = vmul.f32 %v316, %v316
        %v593 = vmul.f32 %v317, %v317
        %v594 = vmul.f32 %v318, %v318
        %595 = vadd.xlane.f32.xlu0 %v579
        %v596 = vpop.xlane.xlu0 %595
        %597 = vadd.xlane.f32.xlu0 %v580
        %v598 = vpop.xlane.xlu0 %597
        %599 = vadd.xlane.f32.xlu0 %v581
        %v600 = vpop.xlane.xlu0 %599
        %601 = vadd.xlane.f32.xlu0 %v582
        %v602 = vpop.xlane.xlu0 %601
        %603 = vadd.xlane.f32.xlu0 %v583
        %v604 = vpop.xlane.xlu0 %603
        %605 = vadd.xlane.f32.xlu0 %v584
        %v606 = vpop.xlane.xlu0 %605
        %607 = vadd.xlane.f32.xlu0 %v585
        %v608 = vpop.xlane.xlu0 %607
        %609 = vadd.xlane.f32.xlu0 %v586
        %v610 = vpop.xlane.xlu0 %609
        %611 = vadd.xlane.f32.xlu0 %v587
        %v612 = vpop.xlane.xlu0 %611
        %613 = vadd.xlane.f32.xlu0 %v588
        %v614 = vpop.xlane.xlu0 %613
        %615 = vadd.xlane.f32.xlu0 %v589
        %v616 = vpop.xlane.xlu0 %615
        %617 = vadd.xlane.f32.xlu0 %v590
        %v618 = vpop.xlane.xlu0 %617
        %619 = vadd.xlane.f32.xlu0 %v591
        %v620 = vpop.xlane.xlu0 %619
        %621 = vadd.xlane.f32.xlu0 %v592
        %v622 = vpop.xlane.xlu0 %621
        %623 = vadd.xlane.f32.xlu0 %v593
        %v624 = vpop.xlane.xlu0 %623
        %625 = vadd.xlane.f32.xlu0 %v594
        %v626 = vpop.xlane.xlu0 %625
        %v627 = vmul.f32 %v485, 2.0
        %v628 = vmul.f32 %v487, 2.0
        %v629 = vmul.f32 %v491, 2.0
        %v630 = vmul.f32 %v493, 2.0
        %v631 = vmul.f32 %v497, 2.0
        %v632 = vmul.f32 %v499, 2.0
        %v633 = vmul.f32 %v503, 2.0
        %v634 = vmul.f32 %v505, 2.0
        %v635 = vmul.f32 %v509, 2.0
        %v636 = vmul.f32 %v511, 2.0
        %v637 = vmul.f32 %v515, 2.0
        %v638 = vmul.f32 %v517, 2.0
        %v639 = vmul.f32 %v521, 2.0
        %v640 = vmul.f32 %v523, 2.0
        %v641 = vmul.f32 %v527, 2.0
        %v642 = vmul.f32 %v529, 2.0
        %v643 = vmul.f32 %v533, 2.0
        %v644 = vmul.f32 %v535, 2.0
        %v645 = vmul.f32 %v539, 2.0
        %v646 = vmul.f32 %v541, 2.0
        %v647 = vmul.f32 %v545, 2.0
        %v648 = vmul.f32 %v547, 2.0
        %v649 = vmul.f32 %v551, 2.0
        %v650 = vmul.f32 %v553, 2.0
        %v651 = vmul.f32 %v557, 2.0
        %v652 = vmul.f32 %v559, 2.0
        %v653 = vmul.f32 %v563, 2.0
        %v654 = vmul.f32 %v565, 2.0
        %v655 = vmul.f32 %v569, 2.0
        %v656 = vmul.f32 %v571, 2.0
        %v657 = vmul.f32 %v575, 2.0
        %v658 = vmul.f32 %v577, 2.0
        %v659 = vsub.f32 %v596, %v627
        %v660 = vsub.f32 %v596, %v628
        %v661 = vsub.f32 %v598, %v629
        %v662 = vsub.f32 %v598, %v630
        %v663 = vsub.f32 %v600, %v631
        %v664 = vsub.f32 %v600, %v632
        %v665 = vsub.f32 %v602, %v633
        %v666 = vsub.f32 %v602, %v634
        %v667 = vsub.f32 %v604, %v635
        %v668 = vsub.f32 %v604, %v636
        %v669 = vsub.f32 %v606, %v637
        %v670 = vsub.f32 %v606, %v638
        %v671 = vsub.f32 %v608, %v639
        %v672 = vsub.f32 %v608, %v640
        %v673 = vsub.f32 %v610, %v641
        %v674 = vsub.f32 %v610, %v642
        %v675 = vsub.f32 %v612, %v643
        %v676 = vsub.f32 %v612, %v644
        %v677 = vsub.f32 %v614, %v645
        %v678 = vsub.f32 %v614, %v646
        %v679 = vsub.f32 %v616, %v647
        %v680 = vsub.f32 %v616, %v648
        %v681 = vsub.f32 %v618, %v649
        %v682 = vsub.f32 %v618, %v650
        %v683 = vsub.f32 %v620, %v651
        %v684 = vsub.f32 %v620, %v652
        %v685 = vsub.f32 %v622, %v653
        %v686 = vsub.f32 %v622, %v654
        %v687 = vsub.f32 %v624, %v655
        %v688 = vsub.f32 %v624, %v656
        %v689 = vsub.f32 %v626, %v657
        %v690 = vsub.f32 %v626, %v658
        %v692 = vlaneseq
        %v693 = vshrl.u32 %v692, 7
        %v694 = vsub.s32 0, %v693
        %v695 = vrot.slane %v415, %v694
        %v696 = vlaneseq
        %v697 = vshrl.u32 %v696, 7
        %v698 = vsub.s32 1, %v697
        %v699 = vrot.slane %v415, %v698
        %v702 = vadd.f32 %v659, %v695
        %v703 = vadd.f32 %v660, %v699
        %v704 = vadd.f32 %v661, %v695
        %v705 = vadd.f32 %v662, %v699
        %v706 = vadd.f32 %v663, %v695
        %v707 = vadd.f32 %v664, %v699
        %v708 = vadd.f32 %v665, %v695
        %v709 = vadd.f32 %v666, %v699
        %v710 = vadd.f32 %v667, %v695
        %v711 = vadd.f32 %v668, %v699
        %v712 = vadd.f32 %v669, %v695
        %v713 = vadd.f32 %v670, %v699
        %v714 = vadd.f32 %v671, %v695
        %v715 = vadd.f32 %v672, %v699
        %v716 = vadd.f32 %v673, %v695
        %v717 = vadd.f32 %v674, %v699
        %v718 = vadd.f32 %v675, %v695
        %v719 = vadd.f32 %v676, %v699
        %v720 = vadd.f32 %v677, %v695
        %v721 = vadd.f32 %v678, %v699
        %v722 = vadd.f32 %v679, %v695
        %v723 = vadd.f32 %v680, %v699
        %v724 = vadd.f32 %v681, %v695
        %v725 = vadd.f32 %v682, %v699
        %v726 = vadd.f32 %v683, %v695
        %v727 = vadd.f32 %v684, %v699
        %v728 = vadd.f32 %v685, %v695
        %v729 = vadd.f32 %v686, %v699
        %v730 = vadd.f32 %v687, %v695
        %v731 = vadd.f32 %v688, %v699
        %v732 = vadd.f32 %v689, %v695
        %v733 = vadd.f32 %v690, %v699
        %v734 = vstv %s417
        %v735 = vmul.f32 %v734, %v702
        %v736 = vmul.f32 %v734, %v703
        %v737 = vmul.f32 %v734, %v704
        %v738 = vmul.f32 %v734, %v705
        %v739 = vmul.f32 %v734, %v706
        %v740 = vmul.f32 %v734, %v707
        %v741 = vmul.f32 %v734, %v708
        %v742 = vmul.f32 %v734, %v709
        %v743 = vmul.f32 %v734, %v710
        %v744 = vmul.f32 %v734, %v711
        %v745 = vmul.f32 %v734, %v712
        %v746 = vmul.f32 %v734, %v713
        %v747 = vmul.f32 %v734, %v714
        %v748 = vmul.f32 %v734, %v715
        %v749 = vmul.f32 %v734, %v716
        %v750 = vmul.f32 %v734, %v717
        %v751 = vmul.f32 %v734, %v718
        %v752 = vmul.f32 %v734, %v719
        %v753 = vmul.f32 %v734, %v720
        %v754 = vmul.f32 %v734, %v721
        %v755 = vmul.f32 %v734, %v722
        %v756 = vmul.f32 %v734, %v723
        %v757 = vmul.f32 %v734, %v724
        %v758 = vmul.f32 %v734, %v725
        %v759 = vmul.f32 %v734, %v726
        %v760 = vmul.f32 %v734, %v727
        %v761 = vmul.f32 %v734, %v728
        %v762 = vmul.f32 %v734, %v729
        %v763 = vmul.f32 %v734, %v730
        %v764 = vmul.f32 %v734, %v731
        %v765 = vmul.f32 %v734, %v732
        %v766 = vmul.f32 %v734, %v733
        %v767 = vsub.f32 %v735, %v485
        %v768 = vsub.f32 %v736, %v487
        %v769 = vsub.f32 %v737, %v491
        %v770 = vsub.f32 %v738, %v493
        %v771 = vsub.f32 %v739, %v497
        %v772 = vsub.f32 %v740, %v499
        %v773 = vsub.f32 %v741, %v503
        %v774 = vsub.f32 %v742, %v505
        %v775 = vsub.f32 %v743, %v509
        %v776 = vsub.f32 %v744, %v511
        %v777 = vsub.f32 %v745, %v515
        %v778 = vsub.f32 %v746, %v517
        %v779 = vsub.f32 %v747, %v521
        %v780 = vsub.f32 %v748, %v523
        %v781 = vsub.f32 %v749, %v527
        %v782 = vsub.f32 %v750, %v529
        %v783 = vsub.f32 %v751, %v533
        %v784 = vsub.f32 %v752, %v535
        %v785 = vsub.f32 %v753, %v539
        %v786 = vsub.f32 %v754, %v541
        %v787 = vsub.f32 %v755, %v545
        %v788 = vsub.f32 %v756, %v547
        %v789 = vsub.f32 %v757, %v551
        %v790 = vsub.f32 %v758, %v553
        %v791 = vsub.f32 %v759, %v557
        %v792 = vsub.f32 %v760, %v559
        %v793 = vsub.f32 %v761, %v563
        %v794 = vsub.f32 %v762, %v565
        %v795 = vsub.f32 %v763, %v569
        %v796 = vsub.f32 %v764, %v571
        %v797 = vsub.f32 %v765, %v575
        %v798 = vsub.f32 %v766, %v577
        %v799 = vstv %s416
        %v800 = vmul.f32 %v799, %v767
        %v801 = vmul.f32 %v799, %v768
        %v802 = vmul.f32 %v799, %v769
        %v803 = vmul.f32 %v799, %v770
        %v804 = vmul.f32 %v799, %v771
        %v805 = vmul.f32 %v799, %v772
        %v806 = vmul.f32 %v799, %v773
        %v807 = vmul.f32 %v799, %v774
        %v808 = vmul.f32 %v799, %v775
        %v809 = vmul.f32 %v799, %v776
        %v810 = vmul.f32 %v799, %v777
        %v811 = vmul.f32 %v799, %v778
        %v812 = vmul.f32 %v799, %v779
        %v813 = vmul.f32 %v799, %v780
        %v814 = vmul.f32 %v799, %v781
        %v815 = vmul.f32 %v799, %v782
        %v816 = vmul.f32 %v799, %v783
        %v817 = vmul.f32 %v799, %v784
        %v818 = vmul.f32 %v799, %v785
        %v819 = vmul.f32 %v799, %v786
        %v820 = vmul.f32 %v799, %v787
        %v821 = vmul.f32 %v799, %v788
        %v822 = vmul.f32 %v799, %v789
        %v823 = vmul.f32 %v799, %v790
        %v824 = vmul.f32 %v799, %v791
        %v825 = vmul.f32 %v799, %v792
        %v826 = vmul.f32 %v799, %v793
        %v827 = vmul.f32 %v799, %v794
        %v828 = vmul.f32 %v799, %v795
        %v829 = vmul.f32 %v799, %v796
        %v830 = vmul.f32 %v799, %v797
        %v831 = vmul.f32 %v799, %v798
        %v832 = vsub.f32 0.0, %v800
        %v833 = vsub.f32 0.0, %v801
        %v834 = vsub.f32 0.0, %v802
        %v835 = vsub.f32 0.0, %v803
        %v836 = vsub.f32 0.0, %v804
        %v837 = vsub.f32 0.0, %v805
        %v838 = vsub.f32 0.0, %v806
        %v839 = vsub.f32 0.0, %v807
        %v840 = vsub.f32 0.0, %v808
        %v841 = vsub.f32 0.0, %v809
        %v842 = vsub.f32 0.0, %v810
        %v843 = vsub.f32 0.0, %v811
        %v844 = vsub.f32 0.0, %v812
        %v845 = vsub.f32 0.0, %v813
        %v846 = vsub.f32 0.0, %v814
        %v847 = vsub.f32 0.0, %v815
        %v848 = vsub.f32 0.0, %v816
        %v849 = vsub.f32 0.0, %v817
        %v850 = vsub.f32 0.0, %v818
        %v851 = vsub.f32 0.0, %v819
        %v852 = vsub.f32 0.0, %v820
        %v853 = vsub.f32 0.0, %v821
        %v854 = vsub.f32 0.0, %v822
        %v855 = vsub.f32 0.0, %v823
        %v856 = vsub.f32 0.0, %v824
        %v857 = vsub.f32 0.0, %v825
        %v858 = vsub.f32 0.0, %v826
        %v859 = vsub.f32 0.0, %v827
        %v860 = vsub.f32 0.0, %v828
        %v861 = vsub.f32 0.0, %v829
        %v862 = vsub.f32 0.0, %v830
        %v863 = vsub.f32 0.0, %v831
        %v864 = vmax.f32 %v832, %v833
        %865 = vmax.xlane.f32.xlu0 %v864
        %v866 = vpop.xlane.xlu0 %865
        %v867 = vmax.f32 %v834, %v835
        %868 = vmax.xlane.f32.xlu0 %v867
        %v869 = vpop.xlane.xlu0 %868
        %v870 = vmax.f32 %v836, %v837
        %871 = vmax.xlane.f32.xlu0 %v870
        %v872 = vpop.xlane.xlu0 %871
        %v873 = vmax.f32 %v838, %v839
        %874 = vmax.xlane.f32.xlu0 %v873
        %v875 = vpop.xlane.xlu0 %874
        %v876 = vmax.f32 %v840, %v841
        %877 = vmax.xlane.f32.xlu0 %v876
        %v878 = vpop.xlane.xlu0 %877
        %v879 = vmax.f32 %v842, %v843
        %880 = vmax.xlane.f32.xlu0 %v879
        %v881 = vpop.xlane.xlu0 %880
        %v882 = vmax.f32 %v844, %v845
        %883 = vmax.xlane.f32.xlu0 %v882
        %v884 = vpop.xlane.xlu0 %883
        %v885 = vmax.f32 %v846, %v847
        %886 = vmax.xlane.f32.xlu0 %v885
        %v887 = vpop.xlane.xlu0 %886
        %v888 = vmax.f32 %v848, %v849
        %889 = vmax.xlane.f32.xlu0 %v888
        %v890 = vpop.xlane.xlu0 %889
        %v891 = vmax.f32 %v850, %v851
        %892 = vmax.xlane.f32.xlu0 %v891
        %v893 = vpop.xlane.xlu0 %892
        %v894 = vmax.f32 %v852, %v853
        %895 = vmax.xlane.f32.xlu0 %v894
        %v896 = vpop.xlane.xlu0 %895
        %v897 = vmax.f32 %v854, %v855
        %898 = vmax.xlane.f32.xlu0 %v897
        %v899 = vpop.xlane.xlu0 %898
        %v900 = vmax.f32 %v856, %v857
        %901 = vmax.xlane.f32.xlu0 %v900
        %v902 = vpop.xlane.xlu0 %901
        %v903 = vmax.f32 %v858, %v859
        %904 = vmax.xlane.f32.xlu0 %v903
        %v905 = vpop.xlane.xlu0 %904
        %v906 = vmax.f32 %v860, %v861
        %907 = vmax.xlane.f32.xlu0 %v906
        %v908 = vpop.xlane.xlu0 %907
        %v909 = vmax.f32 %v862, %v863
        %910 = vmax.xlane.f32.xlu0 %v909
        %v911 = vpop.xlane.xlu0 %910
        %v912 = vadd.f32 %v832, %v833
        %913 = vadd.xlane.f32.xlu0 %v912
        %v914 = vpop.xlane.xlu0 %913
        %v915 = vadd.f32 %v834, %v835
        %916 = vadd.xlane.f32.xlu0 %v915
        %v917 = vpop.xlane.xlu0 %916
        %v918 = vadd.f32 %v836, %v837
        %919 = vadd.xlane.f32.xlu0 %v918
        %v920 = vpop.xlane.xlu0 %919
        %v921 = vadd.f32 %v838, %v839
        %922 = vadd.xlane.f32.xlu0 %v921
        %v923 = vpop.xlane.xlu0 %922
        %v924 = vadd.f32 %v840, %v841
        %925 = vadd.xlane.f32.xlu0 %v924
        %v926 = vpop.xlane.xlu0 %925
        %v927 = vadd.f32 %v842, %v843
        %928 = vadd.xlane.f32.xlu0 %v927
        %v929 = vpop.xlane.xlu0 %928
        %v930 = vadd.f32 %v844, %v845
        %931 = vadd.xlane.f32.xlu0 %v930
        %v932 = vpop.xlane.xlu0 %931
        %v933 = vadd.f32 %v846, %v847
        %934 = vadd.xlane.f32.xlu0 %v933
        %v935 = vpop.xlane.xlu0 %934
        %v936 = vadd.f32 %v848, %v849
        %937 = vadd.xlane.f32.xlu0 %v936
        %v938 = vpop.xlane.xlu0 %937
        %v939 = vadd.f32 %v850, %v851
        %940 = vadd.xlane.f32.xlu0 %v939
        %v941 = vpop.xlane.xlu0 %940
        %v942 = vadd.f32 %v852, %v853
        %943 = vadd.xlane.f32.xlu0 %v942
        %v944 = vpop.xlane.xlu0 %943
        %v945 = vadd.f32 %v854, %v855
        %946 = vadd.xlane.f32.xlu0 %v945
        %v947 = vpop.xlane.xlu0 %946
        %v948 = vadd.f32 %v856, %v857
        %949 = vadd.xlane.f32.xlu0 %v948
        %v950 = vpop.xlane.xlu0 %949
        %v951 = vadd.f32 %v858, %v859
        %952 = vadd.xlane.f32.xlu0 %v951
        %v953 = vpop.xlane.xlu0 %952
        %v954 = vadd.f32 %v860, %v861
        %955 = vadd.xlane.f32.xlu0 %v954
        %v956 = vpop.xlane.xlu0 %955
        %v957 = vadd.f32 %v862, %v863
        %958 = vadd.xlane.f32.xlu0 %v957
        %v959 = vpop.xlane.xlu0 %958
        %v960 = vsub.f32 %v866, 1.0
        %v961 = vsub.f32 %v869, 1.0
        %v962 = vsub.f32 %v872, 1.0
        %v963 = vsub.f32 %v875, 1.0
        %v964 = vsub.f32 %v878, 1.0
        %v965 = vsub.f32 %v881, 1.0
        %v966 = vsub.f32 %v884, 1.0
        %v967 = vsub.f32 %v887, 1.0
        %v968 = vsub.f32 %v890, 1.0
        %v969 = vsub.f32 %v893, 1.0
        %v970 = vsub.f32 %v896, 1.0
        %v971 = vsub.f32 %v899, 1.0
        %v972 = vsub.f32 %v902, 1.0
        %v973 = vsub.f32 %v905, 1.0
        %v974 = vsub.f32 %v908, 1.0
        %v975 = vsub.f32 %v911, 1.0
        %v976 = vsub.f32 %v914, 1.0
        %v977 = vsub.f32 %v917, 1.0
        %v978 = vsub.f32 %v920, 1.0
        %v979 = vsub.f32 %v923, 1.0
        %v980 = vsub.f32 %v926, 1.0
        %v981 = vsub.f32 %v929, 1.0
        %v982 = vsub.f32 %v932, 1.0
        %v983 = vsub.f32 %v935, 1.0
        %v984 = vsub.f32 %v938, 1.0
        %v985 = vsub.f32 %v941, 1.0
        %v986 = vsub.f32 %v944, 1.0
        %v987 = vsub.f32 %v947, 1.0
        %v988 = vsub.f32 %v950, 1.0
        %v989 = vsub.f32 %v953, 1.0
        %v990 = vsub.f32 %v956, 1.0
        %v991 = vsub.f32 %v959, 1.0
        %v992 = vmul.f32 %v976, 0.00390625
        %v993 = vmul.f32 %v977, 0.00390625
        %v994 = vmul.f32 %v978, 0.00390625
        %v995 = vmul.f32 %v979, 0.00390625
        %v996 = vmul.f32 %v980, 0.00390625
        %v997 = vmul.f32 %v981, 0.00390625
        %v998 = vmul.f32 %v982, 0.00390625
        %v999 = vmul.f32 %v983, 0.00390625
        %v1000 = vmul.f32 %v984, 0.00390625
        %v1001 = vmul.f32 %v985, 0.00390625
        %v1002 = vmul.f32 %v986, 0.00390625
        %v1003 = vmul.f32 %v987, 0.00390625
        %v1004 = vmul.f32 %v988, 0.00390625
        %v1005 = vmul.f32 %v989, 0.00390625
        %v1006 = vmul.f32 %v990, 0.00390625
        %v1007 = vmul.f32 %v991, 0.00390625
        %v1008 = vmax.f32 %v960, %v992
        %v1009 = vmax.f32 %v961, %v993
        %v1010 = vmax.f32 %v962, %v994
        %v1011 = vmax.f32 %v963, %v995
        %v1012 = vmax.f32 %v964, %v996
        %v1013 = vmax.f32 %v965, %v997
        %v1014 = vmax.f32 %v966, %v998
        %v1015 = vmax.f32 %v967, %v999
        %v1016 = vmax.f32 %v968, %v1000
        %v1017 = vmax.f32 %v969, %v1001
        %v1018 = vmax.f32 %v970, %v1002
        %v1019 = vmax.f32 %v971, %v1003
        %v1020 = vmax.f32 %v972, %v1004
        %v1021 = vmax.f32 %v973, %v1005
        %v1022 = vmax.f32 %v974, %v1006
        %v1023 = vmax.f32 %v975, %v1007
        loop: start=0, step=1, limit=26
        $region57: #{tpu_custom_call.1} parent=43 // loop_pre_header
          _
        $region58: #{tpu_custom_call.1} parent=43 // loop_header
          %s1025 = sphi 0, %s1029
          %p1026 = scmp.ge.s32.totalorder %s1025, 26
          %v1030 = vphi %v1008, %v1222
          %v1031 = vphi %v1009, %v1223
          %v1032 = vphi %v1010, %v1224
          %v1033 = vphi %v1011, %v1225
          %v1034 = vphi %v1012, %v1226
          %v1035 = vphi %v1013, %v1227
          %v1036 = vphi %v1014, %v1228
          %v1037 = vphi %v1015, %v1229
          %v1038 = vphi %v1016, %v1230
          %v1039 = vphi %v1017, %v1231
          %v1040 = vphi %v1018, %v1232
          %v1041 = vphi %v1019, %v1233
          %v1042 = vphi %v1020, %v1234
          %v1043 = vphi %v1021, %v1235
          %v1044 = vphi %v1022, %v1236
          %v1045 = vphi %v1023, %v1237
          %v1046 = vphi %v866, %v1238
          %v1047 = vphi %v869, %v1239
          %v1048 = vphi %v872, %v1240
          %v1049 = vphi %v875, %v1241
          %v1050 = vphi %v878, %v1242
          %v1051 = vphi %v881, %v1243
          %v1052 = vphi %v884, %v1244
          %v1053 = vphi %v887, %v1245
          %v1054 = vphi %v890, %v1246
          %v1055 = vphi %v893, %v1247
          %v1056 = vphi %v896, %v1248
          %v1057 = vphi %v899, %v1249
          %v1058 = vphi %v902, %v1250
          %v1059 = vphi %v905, %v1251
          %v1060 = vphi %v908, %v1252
          %v1061 = vphi %v911, %v1253
        $region59: #{tpu_custom_call.1} parent=43 // loop_header_branch
          %1028 = sbr.rel (%p1026) target = $region63
        $region60: #{tpu_custom_call.1} parent=43 // loop_body
          %v1062 = vadd.f32 %v1030, %v1046
          %v1063 = vadd.f32 %v1031, %v1047
          %v1064 = vadd.f32 %v1032, %v1048
          %v1065 = vadd.f32 %v1033, %v1049
          %v1066 = vadd.f32 %v1034, %v1050
          %v1067 = vadd.f32 %v1035, %v1051
          %v1068 = vadd.f32 %v1036, %v1052
          %v1069 = vadd.f32 %v1037, %v1053
          %v1070 = vadd.f32 %v1038, %v1054
          %v1071 = vadd.f32 %v1039, %v1055
          %v1072 = vadd.f32 %v1040, %v1056
          %v1073 = vadd.f32 %v1041, %v1057
          %v1074 = vadd.f32 %v1042, %v1058
          %v1075 = vadd.f32 %v1043, %v1059
          %v1076 = vadd.f32 %v1044, %v1060
          %v1077 = vadd.f32 %v1045, %v1061
          %v1078 = vmul.f32 %v1062, 0.5
          %v1079 = vmul.f32 %v1063, 0.5
          %v1080 = vmul.f32 %v1064, 0.5
          %v1081 = vmul.f32 %v1065, 0.5
          %v1082 = vmul.f32 %v1066, 0.5
          %v1083 = vmul.f32 %v1067, 0.5
          %v1084 = vmul.f32 %v1068, 0.5
          %v1085 = vmul.f32 %v1069, 0.5
          %v1086 = vmul.f32 %v1070, 0.5
          %v1087 = vmul.f32 %v1071, 0.5
          %v1088 = vmul.f32 %v1072, 0.5
          %v1089 = vmul.f32 %v1073, 0.5
          %v1090 = vmul.f32 %v1074, 0.5
          %v1091 = vmul.f32 %v1075, 0.5
          %v1092 = vmul.f32 %v1076, 0.5
          %v1093 = vmul.f32 %v1077, 0.5
          %v1094 = vsub.f32 %v832, %v1078
          %v1095 = vsub.f32 %v833, %v1078
          %v1096 = vsub.f32 %v834, %v1079
          %v1097 = vsub.f32 %v835, %v1079
          %v1098 = vsub.f32 %v836, %v1080
          %v1099 = vsub.f32 %v837, %v1080
          %v1100 = vsub.f32 %v838, %v1081
          %v1101 = vsub.f32 %v839, %v1081
          %v1102 = vsub.f32 %v840, %v1082
          %v1103 = vsub.f32 %v841, %v1082
          %v1104 = vsub.f32 %v842, %v1083
          %v1105 = vsub.f32 %v843, %v1083
          %v1106 = vsub.f32 %v844, %v1084
          %v1107 = vsub.f32 %v845, %v1084
          %v1108 = vsub.f32 %v846, %v1085
          %v1109 = vsub.f32 %v847, %v1085
          %v1110 = vsub.f32 %v848, %v1086
          %v1111 = vsub.f32 %v849, %v1086
          %v1112 = vsub.f32 %v850, %v1087
          %v1113 = vsub.f32 %v851, %v1087
          %v1114 = vsub.f32 %v852, %v1088
          %v1115 = vsub.f32 %v853, %v1088
          %v1116 = vsub.f32 %v854, %v1089
          %v1117 = vsub.f32 %v855, %v1089
          %v1118 = vsub.f32 %v856, %v1090
          %v1119 = vsub.f32 %v857, %v1090
          %v1120 = vsub.f32 %v858, %v1091
          %v1121 = vsub.f32 %v859, %v1091
          %v1122 = vsub.f32 %v860, %v1092
          %v1123 = vsub.f32 %v861, %v1092
          %v1124 = vsub.f32 %v862, %v1093
          %v1125 = vsub.f32 %v863, %v1093
          %v1126 = vmax.f32 %v1094, 0.0
          %v1127 = vmax.f32 %v1095, 0.0
          %v1128 = vmax.f32 %v1096, 0.0
          %v1129 = vmax.f32 %v1097, 0.0
          %v1130 = vmax.f32 %v1098, 0.0
          %v1131 = vmax.f32 %v1099, 0.0
          %v1132 = vmax.f32 %v1100, 0.0
          %v1133 = vmax.f32 %v1101, 0.0
          %v1134 = vmax.f32 %v1102, 0.0
          %v1135 = vmax.f32 %v1103, 0.0
          %v1136 = vmax.f32 %v1104, 0.0
          %v1137 = vmax.f32 %v1105, 0.0
          %v1138 = vmax.f32 %v1106, 0.0
          %v1139 = vmax.f32 %v1107, 0.0
          %v1140 = vmax.f32 %v1108, 0.0
          %v1141 = vmax.f32 %v1109, 0.0
          %v1142 = vmax.f32 %v1110, 0.0
          %v1143 = vmax.f32 %v1111, 0.0
          %v1144 = vmax.f32 %v1112, 0.0
          %v1145 = vmax.f32 %v1113, 0.0
          %v1146 = vmax.f32 %v1114, 0.0
          %v1147 = vmax.f32 %v1115, 0.0
          %v1148 = vmax.f32 %v1116, 0.0
          %v1149 = vmax.f32 %v1117, 0.0
          %v1150 = vmax.f32 %v1118, 0.0
          %v1151 = vmax.f32 %v1119, 0.0
          %v1152 = vmax.f32 %v1120, 0.0
          %v1153 = vmax.f32 %v1121, 0.0
          %v1154 = vmax.f32 %v1122, 0.0
          %v1155 = vmax.f32 %v1123, 0.0
          %v1156 = vmax.f32 %v1124, 0.0
          %v1157 = vmax.f32 %v1125, 0.0
          %v1158 = vadd.f32 %v1126, %v1127
          %1159 = vadd.xlane.f32.xlu0 %v1158
          %v1160 = vpop.xlane.xlu0 %1159
          %v1161 = vadd.f32 %v1128, %v1129
          %1162 = vadd.xlane.f32.xlu0 %v1161
          %v1163 = vpop.xlane.xlu0 %1162
          %v1164 = vadd.f32 %v1130, %v1131
          %1165 = vadd.xlane.f32.xlu0 %v1164
          %v1166 = vpop.xlane.xlu0 %1165
          %v1167 = vadd.f32 %v1132, %v1133
          %1168 = vadd.xlane.f32.xlu0 %v1167
          %v1169 = vpop.xlane.xlu0 %1168
          %v1170 = vadd.f32 %v1134, %v1135
          %1171 = vadd.xlane.f32.xlu0 %v1170
          %v1172 = vpop.xlane.xlu0 %1171
          %v1173 = vadd.f32 %v1136, %v1137
          %1174 = vadd.xlane.f32.xlu0 %v1173
          %v1175 = vpop.xlane.xlu0 %1174
          %v1176 = vadd.f32 %v1138, %v1139
          %1177 = vadd.xlane.f32.xlu0 %v1176
          %v1178 = vpop.xlane.xlu0 %1177
          %v1179 = vadd.f32 %v1140, %v1141
          %1180 = vadd.xlane.f32.xlu0 %v1179
          %v1181 = vpop.xlane.xlu0 %1180
          %v1182 = vadd.f32 %v1142, %v1143
          %1183 = vadd.xlane.f32.xlu0 %v1182
          %v1184 = vpop.xlane.xlu0 %1183
          %v1185 = vadd.f32 %v1144, %v1145
          %1186 = vadd.xlane.f32.xlu0 %v1185
          %v1187 = vpop.xlane.xlu0 %1186
          %v1188 = vadd.f32 %v1146, %v1147
          %1189 = vadd.xlane.f32.xlu0 %v1188
          %v1190 = vpop.xlane.xlu0 %1189
          %v1191 = vadd.f32 %v1148, %v1149
          %1192 = vadd.xlane.f32.xlu0 %v1191
          %v1193 = vpop.xlane.xlu0 %1192
          %v1194 = vadd.f32 %v1150, %v1151
          %1195 = vadd.xlane.f32.xlu0 %v1194
          %v1196 = vpop.xlane.xlu0 %1195
          %v1197 = vadd.f32 %v1152, %v1153
          %1198 = vadd.xlane.f32.xlu0 %v1197
          %v1199 = vpop.xlane.xlu0 %1198
          %v1200 = vadd.f32 %v1154, %v1155
          %1201 = vadd.xlane.f32.xlu0 %v1200
          %v1202 = vpop.xlane.xlu0 %1201
          %v1203 = vadd.f32 %v1156, %v1157
          %1204 = vadd.xlane.f32.xlu0 %v1203
          %v1205 = vpop.xlane.xlu0 %1204
          %vm1206 = vcmp.ge.f32.partialorder %v1160, 1.0
          %vm1207 = vcmp.ge.f32.partialorder %v1163, 1.0
          %vm1208 = vcmp.ge.f32.partialorder %v1166, 1.0
          %vm1209 = vcmp.ge.f32.partialorder %v1169, 1.0
          %vm1210 = vcmp.ge.f32.partialorder %v1172, 1.0
          %vm1211 = vcmp.ge.f32.partialorder %v1175, 1.0
          %vm1212 = vcmp.ge.f32.partialorder %v1178, 1.0
          %vm1213 = vcmp.ge.f32.partialorder %v1181, 1.0
          %vm1214 = vcmp.ge.f32.partialorder %v1184, 1.0
          %vm1215 = vcmp.ge.f32.partialorder %v1187, 1.0
          %vm1216 = vcmp.ge.f32.partialorder %v1190, 1.0
          %vm1217 = vcmp.ge.f32.partialorder %v1193, 1.0
          %vm1218 = vcmp.ge.f32.partialorder %v1196, 1.0
          %vm1219 = vcmp.ge.f32.partialorder %v1199, 1.0
          %vm1220 = vcmp.ge.f32.partialorder %v1202, 1.0
          %vm1221 = vcmp.ge.f32.partialorder %v1205, 1.0
          %v1222 = vsel %vm1206, %v1078, %v1030
          %v1223 = vsel %vm1207, %v1079, %v1031
          %v1224 = vsel %vm1208, %v1080, %v1032
          %v1225 = vsel %vm1209, %v1081, %v1033
          %v1226 = vsel %vm1210, %v1082, %v1034
          %v1227 = vsel %vm1211, %v1083, %v1035
          %v1228 = vsel %vm1212, %v1084, %v1036
          %v1229 = vsel %vm1213, %v1085, %v1037
          %v1230 = vsel %vm1214, %v1086, %v1038
          %v1231 = vsel %vm1215, %v1087, %v1039
          %v1232 = vsel %vm1216, %v1088, %v1040
          %v1233 = vsel %vm1217, %v1089, %v1041
          %v1234 = vsel %vm1218, %v1090, %v1042
          %v1235 = vsel %vm1219, %v1091, %v1043
          %v1236 = vsel %vm1220, %v1092, %v1044
          %v1237 = vsel %vm1221, %v1093, %v1045
          %v1238 = vsel %vm1206, %v1046, %v1078
          %v1239 = vsel %vm1207, %v1047, %v1079
          %v1240 = vsel %vm1208, %v1048, %v1080
          %v1241 = vsel %vm1209, %v1049, %v1081
          %v1242 = vsel %vm1210, %v1050, %v1082
          %v1243 = vsel %vm1211, %v1051, %v1083
          %v1244 = vsel %vm1212, %v1052, %v1084
          %v1245 = vsel %vm1213, %v1053, %v1085
          %v1246 = vsel %vm1214, %v1054, %v1086
          %v1247 = vsel %vm1215, %v1055, %v1087
          %v1248 = vsel %vm1216, %v1056, %v1088
          %v1249 = vsel %vm1217, %v1057, %v1089
          %v1250 = vsel %vm1218, %v1058, %v1090
          %v1251 = vsel %vm1219, %v1059, %v1091
          %v1252 = vsel %vm1220, %v1060, %v1092
          %v1253 = vsel %vm1221, %v1061, %v1093
        $region61: #{tpu_custom_call.1} parent=43 // loop_footer
          %s1029 = sadd.s32 1, %s1025
        $region62: #{tpu_custom_call.1} parent=43 // loop_footer_branch
          %1024 = sbr.rel target = $region58
        $region63: #{tpu_custom_call.1} parent=43 // loop_exit
          _
        %vm1254 = vcmp.ge.f32.partialorder %v832, %v1030
        %vm1255 = vcmp.ge.f32.partialorder %v833, %v1030
        %vm1256 = vcmp.ge.f32.partialorder %v834, %v1031
        %vm1257 = vcmp.ge.f32.partialorder %v835, %v1031
        %vm1258 = vcmp.ge.f32.partialorder %v836, %v1032
        %vm1259 = vcmp.ge.f32.partialorder %v837, %v1032
        %vm1260 = vcmp.ge.f32.partialorder %v838, %v1033
        %vm1261 = vcmp.ge.f32.partialorder %v839, %v1033
        %vm1262 = vcmp.ge.f32.partialorder %v840, %v1034
        %vm1263 = vcmp.ge.f32.partialorder %v841, %v1034
        %vm1264 = vcmp.ge.f32.partialorder %v842, %v1035
        %vm1265 = vcmp.ge.f32.partialorder %v843, %v1035
        %vm1266 = vcmp.ge.f32.partialorder %v844, %v1036
        %vm1267 = vcmp.ge.f32.partialorder %v845, %v1036
        %vm1268 = vcmp.ge.f32.partialorder %v846, %v1037
        %vm1269 = vcmp.ge.f32.partialorder %v847, %v1037
        %vm1270 = vcmp.ge.f32.partialorder %v848, %v1038
        %vm1271 = vcmp.ge.f32.partialorder %v849, %v1038
        %vm1272 = vcmp.ge.f32.partialorder %v850, %v1039
        %vm1273 = vcmp.ge.f32.partialorder %v851, %v1039
        %vm1274 = vcmp.ge.f32.partialorder %v852, %v1040
        %vm1275 = vcmp.ge.f32.partialorder %v853, %v1040
        %vm1276 = vcmp.ge.f32.partialorder %v854, %v1041
        %vm1277 = vcmp.ge.f32.partialorder %v855, %v1041
        %vm1278 = vcmp.ge.f32.partialorder %v856, %v1042
        %vm1279 = vcmp.ge.f32.partialorder %v857, %v1042
        %vm1280 = vcmp.ge.f32.partialorder %v858, %v1043
        %vm1281 = vcmp.ge.f32.partialorder %v859, %v1043
        %vm1282 = vcmp.ge.f32.partialorder %v860, %v1044
        %vm1283 = vcmp.ge.f32.partialorder %v861, %v1044
        %vm1284 = vcmp.ge.f32.partialorder %v862, %v1045
        %vm1285 = vcmp.ge.f32.partialorder %v863, %v1045
        %v1286 = vsel %vm1254, 1, 0
        %v1287 = vsel %vm1255, 1, 0
        %v1288 = vsel %vm1256, 1, 0
        %v1289 = vsel %vm1257, 1, 0
        %v1290 = vsel %vm1258, 1, 0
        %v1291 = vsel %vm1259, 1, 0
        %v1292 = vsel %vm1260, 1, 0
        %v1293 = vsel %vm1261, 1, 0
        %v1294 = vsel %vm1262, 1, 0
        %v1295 = vsel %vm1263, 1, 0
        %v1296 = vsel %vm1264, 1, 0
        %v1297 = vsel %vm1265, 1, 0
        %v1298 = vsel %vm1266, 1, 0
        %v1299 = vsel %vm1267, 1, 0
        %v1300 = vsel %vm1268, 1, 0
        %v1301 = vsel %vm1269, 1, 0
        %v1302 = vsel %vm1270, 1, 0
        %v1303 = vsel %vm1271, 1, 0
        %v1304 = vsel %vm1272, 1, 0
        %v1305 = vsel %vm1273, 1, 0
        %v1306 = vsel %vm1274, 1, 0
        %v1307 = vsel %vm1275, 1, 0
        %v1308 = vsel %vm1276, 1, 0
        %v1309 = vsel %vm1277, 1, 0
        %v1310 = vsel %vm1278, 1, 0
        %v1311 = vsel %vm1279, 1, 0
        %v1312 = vsel %vm1280, 1, 0
        %v1313 = vsel %vm1281, 1, 0
        %v1314 = vsel %vm1282, 1, 0
        %v1315 = vsel %vm1283, 1, 0
        %v1316 = vsel %vm1284, 1, 0
        %v1317 = vsel %vm1285, 1, 0
        %v1318 = vcvt.s32.f32 %v1286
        %v1319 = vcvt.s32.f32 %v1287
        %v1320 = vcvt.s32.f32 %v1288
        %v1321 = vcvt.s32.f32 %v1289
        %v1322 = vcvt.s32.f32 %v1290
        %v1323 = vcvt.s32.f32 %v1291
        %v1324 = vcvt.s32.f32 %v1292
        %v1325 = vcvt.s32.f32 %v1293
        %v1326 = vcvt.s32.f32 %v1294
        %v1327 = vcvt.s32.f32 %v1295
        %v1328 = vcvt.s32.f32 %v1296
        %v1329 = vcvt.s32.f32 %v1297
        %v1330 = vcvt.s32.f32 %v1298
        %v1331 = vcvt.s32.f32 %v1299
        %v1332 = vcvt.s32.f32 %v1300
        %v1333 = vcvt.s32.f32 %v1301
        %v1334 = vcvt.s32.f32 %v1302
        %v1335 = vcvt.s32.f32 %v1303
        %v1336 = vcvt.s32.f32 %v1304
        %v1337 = vcvt.s32.f32 %v1305
        %v1338 = vcvt.s32.f32 %v1306
        %v1339 = vcvt.s32.f32 %v1307
        %v1340 = vcvt.s32.f32 %v1308
        %v1341 = vcvt.s32.f32 %v1309
        %v1342 = vcvt.s32.f32 %v1310
        %v1343 = vcvt.s32.f32 %v1311
        %v1344 = vcvt.s32.f32 %v1312
        %v1345 = vcvt.s32.f32 %v1313
        %v1346 = vcvt.s32.f32 %v1314
        %v1347 = vcvt.s32.f32 %v1315
        %v1348 = vcvt.s32.f32 %v1316
        %v1349 = vcvt.s32.f32 %v1317
        %v1350 = vadd.f32 %v1318, %v1319
        %1351 = vadd.xlane.f32.xlu0 %v1350
        %v1352 = vpop.xlane.xlu0 %1351
        %v1353 = vadd.f32 %v1320, %v1321
        %1354 = vadd.xlane.f32.xlu0 %v1353
        %v1355 = vpop.xlane.xlu0 %1354
        %v1356 = vadd.f32 %v1322, %v1323
        %1357 = vadd.xlane.f32.xlu0 %v1356
        %v1358 = vpop.xlane.xlu0 %1357
        %v1359 = vadd.f32 %v1324, %v1325
        %1360 = vadd.xlane.f32.xlu0 %v1359
        %v1361 = vpop.xlane.xlu0 %1360
        %v1362 = vadd.f32 %v1326, %v1327
        %1363 = vadd.xlane.f32.xlu0 %v1362
        %v1364 = vpop.xlane.xlu0 %1363
        %v1365 = vadd.f32 %v1328, %v1329
        %1366 = vadd.xlane.f32.xlu0 %v1365
        %v1367 = vpop.xlane.xlu0 %1366
        %v1368 = vadd.f32 %v1330, %v1331
        %1369 = vadd.xlane.f32.xlu0 %v1368
        %v1370 = vpop.xlane.xlu0 %1369
        %v1371 = vadd.f32 %v1332, %v1333
        %1372 = vadd.xlane.f32.xlu0 %v1371
        %v1373 = vpop.xlane.xlu0 %1372
        %v1374 = vadd.f32 %v1334, %v1335
        %1375 = vadd.xlane.f32.xlu0 %v1374
        %v1376 = vpop.xlane.xlu0 %1375
        %v1377 = vadd.f32 %v1336, %v1337
        %1378 = vadd.xlane.f32.xlu0 %v1377
        %v1379 = vpop.xlane.xlu0 %1378
        %v1380 = vadd.f32 %v1338, %v1339
        %1381 = vadd.xlane.f32.xlu0 %v1380
        %v1382 = vpop.xlane.xlu0 %1381
        %v1383 = vadd.f32 %v1340, %v1341
        %1384 = vadd.xlane.f32.xlu0 %v1383
        %v1385 = vpop.xlane.xlu0 %1384
        %v1386 = vadd.f32 %v1342, %v1343
        %1387 = vadd.xlane.f32.xlu0 %v1386
        %v1388 = vpop.xlane.xlu0 %1387
        %v1389 = vadd.f32 %v1344, %v1345
        %1390 = vadd.xlane.f32.xlu0 %v1389
        %v1391 = vpop.xlane.xlu0 %1390
        %v1392 = vadd.f32 %v1346, %v1347
        %1393 = vadd.xlane.f32.xlu0 %v1392
        %v1394 = vpop.xlane.xlu0 %1393
        %v1395 = vadd.f32 %v1348, %v1349
        %1396 = vadd.xlane.f32.xlu0 %v1395
        %v1397 = vpop.xlane.xlu0 %1396
        %v1398 = vmul.f32 %v832, %v1318
        %v1399 = vmul.f32 %v833, %v1319
        %v1400 = vmul.f32 %v834, %v1320
        %v1401 = vmul.f32 %v835, %v1321
        %v1402 = vmul.f32 %v836, %v1322
        %v1403 = vmul.f32 %v837, %v1323
        %v1404 = vmul.f32 %v838, %v1324
        %v1405 = vmul.f32 %v839, %v1325
        %v1406 = vmul.f32 %v840, %v1326
        %v1407 = vmul.f32 %v841, %v1327
        %v1408 = vmul.f32 %v842, %v1328
        %v1409 = vmul.f32 %v843, %v1329
        %v1410 = vmul.f32 %v844, %v1330
        %v1411 = vmul.f32 %v845, %v1331
        %v1412 = vmul.f32 %v846, %v1332
        %v1413 = vmul.f32 %v847, %v1333
        %v1414 = vmul.f32 %v848, %v1334
        %v1415 = vmul.f32 %v849, %v1335
        %v1416 = vmul.f32 %v850, %v1336
        %v1417 = vmul.f32 %v851, %v1337
        %v1418 = vmul.f32 %v852, %v1338
        %v1419 = vmul.f32 %v853, %v1339
        %v1420 = vmul.f32 %v854, %v1340
        %v1421 = vmul.f32 %v855, %v1341
        %v1422 = vmul.f32 %v856, %v1342
        %v1423 = vmul.f32 %v857, %v1343
        %v1424 = vmul.f32 %v858, %v1344
        %v1425 = vmul.f32 %v859, %v1345
        %v1426 = vmul.f32 %v860, %v1346
        %v1427 = vmul.f32 %v861, %v1347
        %v1428 = vmul.f32 %v862, %v1348
        %v1429 = vmul.f32 %v863, %v1349
        %v1430 = vadd.f32 %v1398, %v1399
        %1431 = vadd.xlane.f32.xlu0 %v1430
        %v1432 = vpop.xlane.xlu0 %1431
        %v1433 = vadd.f32 %v1400, %v1401
        %1434 = vadd.xlane.f32.xlu0 %v1433
        %v1435 = vpop.xlane.xlu0 %1434
        %v1436 = vadd.f32 %v1402, %v1403
        %1437 = vadd.xlane.f32.xlu0 %v1436
        %v1438 = vpop.xlane.xlu0 %1437
        %v1439 = vadd.f32 %v1404, %v1405
        %1440 = vadd.xlane.f32.xlu0 %v1439
        %v1441 = vpop.xlane.xlu0 %1440
        %v1442 = vadd.f32 %v1406, %v1407
        %1443 = vadd.xlane.f32.xlu0 %v1442
        %v1444 = vpop.xlane.xlu0 %1443
        %v1445 = vadd.f32 %v1408, %v1409
        %1446 = vadd.xlane.f32.xlu0 %v1445
        %v1447 = vpop.xlane.xlu0 %1446
        %v1448 = vadd.f32 %v1410, %v1411
        %1449 = vadd.xlane.f32.xlu0 %v1448
        %v1450 = vpop.xlane.xlu0 %1449
        %v1451 = vadd.f32 %v1412, %v1413
        %1452 = vadd.xlane.f32.xlu0 %v1451
        %v1453 = vpop.xlane.xlu0 %1452
        %v1454 = vadd.f32 %v1414, %v1415
        %1455 = vadd.xlane.f32.xlu0 %v1454
        %v1456 = vpop.xlane.xlu0 %1455
        %v1457 = vadd.f32 %v1416, %v1417
        %1458 = vadd.xlane.f32.xlu0 %v1457
        %v1459 = vpop.xlane.xlu0 %1458
        %v1460 = vadd.f32 %v1418, %v1419
        %1461 = vadd.xlane.f32.xlu0 %v1460
        %v1462 = vpop.xlane.xlu0 %1461
        %v1463 = vadd.f32 %v1420, %v1421
        %1464 = vadd.xlane.f32.xlu0 %v1463
        %v1465 = vpop.xlane.xlu0 %1464
        %v1466 = vadd.f32 %v1422, %v1423
        %1467 = vadd.xlane.f32.xlu0 %v1466
        %v1468 = vpop.xlane.xlu0 %1467
        %v1469 = vadd.f32 %v1424, %v1425
        %1470 = vadd.xlane.f32.xlu0 %v1469
        %v1471 = vpop.xlane.xlu0 %1470
        %v1472 = vadd.f32 %v1426, %v1427
        %1473 = vadd.xlane.f32.xlu0 %v1472
        %v1474 = vpop.xlane.xlu0 %1473
        %v1475 = vadd.f32 %v1428, %v1429
        %1476 = vadd.xlane.f32.xlu0 %v1475
        %v1477 = vpop.xlane.xlu0 %1476
        %v1478 = vsub.f32 %v1432, 1.0
        %v1479 = vsub.f32 %v1435, 1.0
        %v1480 = vsub.f32 %v1438, 1.0
        %v1481 = vsub.f32 %v1441, 1.0
        %v1482 = vsub.f32 %v1444, 1.0
        %v1483 = vsub.f32 %v1447, 1.0
        %v1484 = vsub.f32 %v1450, 1.0
        %v1485 = vsub.f32 %v1453, 1.0
        %v1486 = vsub.f32 %v1456, 1.0
        %v1487 = vsub.f32 %v1459, 1.0
        %v1488 = vsub.f32 %v1462, 1.0
        %v1489 = vsub.f32 %v1465, 1.0
        %v1490 = vsub.f32 %v1468, 1.0
        %v1491 = vsub.f32 %v1471, 1.0
        %v1492 = vsub.f32 %v1474, 1.0
        %v1493 = vsub.f32 %v1477, 1.0
        %v1494 = vrcp.pop %v1352
        %v1495 = vmul.f32 %v1478, %v1494
        %v1496 = vrcp.pop %v1355
        %v1497 = vmul.f32 %v1479, %v1496
        %v1498 = vrcp.pop %v1358
        %v1499 = vmul.f32 %v1480, %v1498
        %v1500 = vrcp.pop %v1361
        %v1501 = vmul.f32 %v1481, %v1500
        %v1502 = vrcp.pop %v1364
        %v1503 = vmul.f32 %v1482, %v1502
        %v1504 = vrcp.pop %v1367
        %v1505 = vmul.f32 %v1483, %v1504
        %v1506 = vrcp.pop %v1370
        %v1507 = vmul.f32 %v1484, %v1506
        %v1508 = vrcp.pop %v1373
        %v1509 = vmul.f32 %v1485, %v1508
        %v1510 = vrcp.pop %v1376
        %v1511 = vmul.f32 %v1486, %v1510
        %v1512 = vrcp.pop %v1379
        %v1513 = vmul.f32 %v1487, %v1512
        %v1514 = vrcp.pop %v1382
        %v1515 = vmul.f32 %v1488, %v1514
        %v1516 = vrcp.pop %v1385
        %v1517 = vmul.f32 %v1489, %v1516
        %v1518 = vrcp.pop %v1388
        %v1519 = vmul.f32 %v1490, %v1518
        %v1520 = vrcp.pop %v1391
        %v1521 = vmul.f32 %v1491, %v1520
        %v1522 = vrcp.pop %v1394
        %v1523 = vmul.f32 %v1492, %v1522
        %v1524 = vrcp.pop %v1397
        %v1525 = vmul.f32 %v1493, %v1524
        %v1526 = vsub.f32 %v832, %v1495
        %v1527 = vsub.f32 %v833, %v1495
        %v1528 = vsub.f32 %v834, %v1497
        %v1529 = vsub.f32 %v835, %v1497
        %v1530 = vsub.f32 %v836, %v1499
        %v1531 = vsub.f32 %v837, %v1499
        %v1532 = vsub.f32 %v838, %v1501
        %v1533 = vsub.f32 %v839, %v1501
        %v1534 = vsub.f32 %v840, %v1503
        %v1535 = vsub.f32 %v841, %v1503
        %v1536 = vsub.f32 %v842, %v1505
        %v1537 = vsub.f32 %v843, %v1505
        %v1538 = vsub.f32 %v844, %v1507
        %v1539 = vsub.f32 %v845, %v1507
        %v1540 = vsub.f32 %v846, %v1509
        %v1541 = vsub.f32 %v847, %v1509
        %v1542 = vsub.f32 %v848, %v1511
        %v1543 = vsub.f32 %v849, %v1511
        %v1544 = vsub.f32 %v850, %v1513
        %v1545 = vsub.f32 %v851, %v1513
        %v1546 = vsub.f32 %v852, %v1515
        %v1547 = vsub.f32 %v853, %v1515
        %v1548 = vsub.f32 %v854, %v1517
        %v1549 = vsub.f32 %v855, %v1517
        %v1550 = vsub.f32 %v856, %v1519
        %v1551 = vsub.f32 %v857, %v1519
        %v1552 = vsub.f32 %v858, %v1521
        %v1553 = vsub.f32 %v859, %v1521
        %v1554 = vsub.f32 %v860, %v1523
        %v1555 = vsub.f32 %v861, %v1523
        %v1556 = vsub.f32 %v862, %v1525
        %v1557 = vsub.f32 %v863, %v1525
        %v1558 = vmax.f32 %v1526, 0.0
        %v1559 = vmax.f32 %v1527, 0.0
        %v1560 = vmax.f32 %v1528, 0.0
        %v1561 = vmax.f32 %v1529, 0.0
        %v1562 = vmax.f32 %v1530, 0.0
        %v1563 = vmax.f32 %v1531, 0.0
        %v1564 = vmax.f32 %v1532, 0.0
        %v1565 = vmax.f32 %v1533, 0.0
        %v1566 = vmax.f32 %v1534, 0.0
        %v1567 = vmax.f32 %v1535, 0.0
        %v1568 = vmax.f32 %v1536, 0.0
        %v1569 = vmax.f32 %v1537, 0.0
        %v1570 = vmax.f32 %v1538, 0.0
        %v1571 = vmax.f32 %v1539, 0.0
        %v1572 = vmax.f32 %v1540, 0.0
        %v1573 = vmax.f32 %v1541, 0.0
        %v1574 = vmax.f32 %v1542, 0.0
        %v1575 = vmax.f32 %v1543, 0.0
        %v1576 = vmax.f32 %v1544, 0.0
        %v1577 = vmax.f32 %v1545, 0.0
        %v1578 = vmax.f32 %v1546, 0.0
        %v1579 = vmax.f32 %v1547, 0.0
        %v1580 = vmax.f32 %v1548, 0.0
        %v1581 = vmax.f32 %v1549, 0.0
        %v1582 = vmax.f32 %v1550, 0.0
        %v1583 = vmax.f32 %v1551, 0.0
        %v1584 = vmax.f32 %v1552, 0.0
        %v1585 = vmax.f32 %v1553, 0.0
        %v1586 = vmax.f32 %v1554, 0.0
        %v1587 = vmax.f32 %v1555, 0.0
        %v1588 = vmax.f32 %v1556, 0.0
        %v1589 = vmax.f32 %v1557, 0.0
        loop: start=1, step=1, limit=8
        $region64: #{tpu_custom_call.1} parent=43 // loop_pre_header
          _
        $region65: #{tpu_custom_call.1} parent=43 // loop_header
          %s1591 = sphi 1, %s1595
          %p1592 = scmp.ge.s32.totalorder %s1591, 8
          %v1596 = vphi %v1558, %v2682
          %v1597 = vphi %v1559, %v2683
          %v1598 = vphi %v1560, %v2684
          %v1599 = vphi %v1561, %v2685
          %v1600 = vphi %v1562, %v2686
          %v1601 = vphi %v1563, %v2687
          %v1602 = vphi %v1564, %v2688
          %v1603 = vphi %v1565, %v2689
          %v1604 = vphi %v1566, %v2690
          %v1605 = vphi %v1567, %v2691
          %v1606 = vphi %v1568, %v2692
          %v1607 = vphi %v1569, %v2693
          %v1608 = vphi %v1570, %v2694
          %v1609 = vphi %v1571, %v2695
          %v1610 = vphi %v1572, %v2696
          %v1611 = vphi %v1573, %v2697
          %v1612 = vphi %v1574, %v2698
          %v1613 = vphi %v1575, %v2699
          %v1614 = vphi %v1576, %v2700
          %v1615 = vphi %v1577, %v2701
          %v1616 = vphi %v1578, %v2702
          %v1617 = vphi %v1579, %v2703
          %v1618 = vphi %v1580, %v2704
          %v1619 = vphi %v1581, %v2705
          %v1620 = vphi %v1582, %v2706
          %v1621 = vphi %v1583, %v2707
          %v1622 = vphi %v1584, %v2708
          %v1623 = vphi %v1585, %v2709
          %v1624 = vphi %v1586, %v2710
          %v1625 = vphi %v1587, %v2711
          %v1626 = vphi %v1588, %v2712
          %v1627 = vphi %v1589, %v2713
          %v1628 = vphi %v1558, %v2579
          %v1629 = vphi %v1559, %v2580
          %v1630 = vphi %v1560, %v2581
          %v1631 = vphi %v1561, %v2582
          %v1632 = vphi %v1562, %v2583
          %v1633 = vphi %v1563, %v2584
          %v1634 = vphi %v1564, %v2585
          %v1635 = vphi %v1565, %v2586
          %v1636 = vphi %v1566, %v2587
          %v1637 = vphi %v1567, %v2588
          %v1638 = vphi %v1568, %v2589
          %v1639 = vphi %v1569, %v2590
          %v1640 = vphi %v1570, %v2591
          %v1641 = vphi %v1571, %v2592
          %v1642 = vphi %v1572, %v2593
          %v1643 = vphi %v1573, %v2594
          %v1644 = vphi %v1574, %v2595
          %v1645 = vphi %v1575, %v2596
          %v1646 = vphi %v1576, %v2597
          %v1647 = vphi %v1577, %v2598
          %v1648 = vphi %v1578, %v2599
          %v1649 = vphi %v1579, %v2600
          %v1650 = vphi %v1580, %v2601
          %v1651 = vphi %v1581, %v2602
          %v1652 = vphi %v1582, %v2603
          %v1653 = vphi %v1583, %v2604
          %v1654 = vphi %v1584, %v2605
          %v1655 = vphi %v1585, %v2606
          %v1656 = vphi %v1586, %v2607
          %v1657 = vphi %v1587, %v2608
          %v1658 = vphi %v1588, %v2609
          %v1659 = vphi %v1589, %v2610
        $region66: #{tpu_custom_call.1} parent=43 // loop_header_branch
          %1594 = sbr.rel (%p1592) target = $region70
        $region67: #{tpu_custom_call.1} parent=43 // loop_body
          %1660 = vmatprep.subr.mxu0 %v352
          %1661 = vmatpush1.msra.mxu0 %v351
          %1662 = vmatprep.subr.mxu0 %v354
          %1663 = vmatpush1.msra.mxu0 %v353
          %1664 = vmatprep.subr.mxu0 %v356
          %1665 = vmatpush1.msra.mxu0 %v355
          %1666 = vmatprep.subr.mxu0 %v358
          %1667 = vmatpush1.msra.mxu0 %v357
          %1668 = vmatprep.subr.mxu0 %v360
          %1669 = vmatpush1.msra.mxu0 %v359
          %1670 = vmatprep.subr.mxu0 %v362
          %1671 = vmatpush1.msra.mxu0 %v361
          %1672 = vmatprep.subr.mxu0 %v364
          %1673 = vmatpush1.msra.mxu0 %v363
          %1674 = vmatprep.subr.mxu0 %v366
          %1675 = vmatpush1.msra.mxu0 %v365
          %1676 = vmatprep.subr.mxu0 %v368
          %1677 = vmatpush1.msra.mxu0 %v367
          %1678 = vmatprep.subr.mxu0 %v370
          %1679 = vmatpush1.msra.mxu0 %v369
          %1680 = vmatprep.subr.mxu0 %v372
          %1681 = vmatpush1.msra.mxu0 %v371
          %1682 = vmatprep.subr.mxu0 %v374
          %1683 = vmatpush1.msra.mxu0 %v373
          %1684 = vmatprep.subr.mxu0 %v376
          %1685 = vmatpush1.msra.mxu0 %v375
          %1686 = vmatprep.subr.mxu0 %v378
          %1687 = vmatpush1.msra.mxu0 %v377
          %1688 = vmatprep.subr.mxu0 %v380
          %1689 = vmatpush1.msra.mxu0 %v379
          %1690 = vmatprep.subr.mxu0 %v382
          %1691 = vmatpush1.msra.mxu0 %v381
          %1692 = vmatprep.subr.mxu0 %v384
          %1693 = vmatpush1.msra.mxu0 %v383
          %1694 = vmatprep.subr.mxu0 %v386
          %1695 = vmatpush1.msra.mxu0 %v385
          %1696 = vmatprep.subr.mxu0 %v388
          %1697 = vmatpush1.msra.mxu0 %v387
          %1698 = vmatprep.subr.mxu0 %v390
          %1699 = vmatpush1.msra.mxu0 %v389
          %1700 = vmatprep.subr.mxu0 %v392
          %1701 = vmatpush1.msra.mxu0 %v391
          %1702 = vmatprep.subr.mxu0 %v394
          %1703 = vmatpush1.msra.mxu0 %v393
          %1704 = vmatprep.subr.mxu0 %v396
          %1705 = vmatpush1.msra.mxu0 %v395
          %1706 = vmatprep.subr.mxu0 %v398
          %1707 = vmatpush1.msra.mxu0 %v397
          %1708 = vmatprep.subr.mxu0 %v400
          %1709 = vmatpush1.msra.mxu0 %v399
          %1710 = vmatprep.subr.mxu0 %v402
          %1711 = vmatpush1.msra.mxu0 %v401
          %1712 = vmatprep.subr.mxu0 %v404
          %1713 = vmatpush1.msra.mxu0 %v403
          %1714 = vmatprep.subr.mxu0 %v406
          %1715 = vmatpush1.msra.mxu0 %v405
          %1716 = vmatprep.subr.mxu0 %v408
          %1717 = vmatpush1.msra.mxu0 %v407
          %1718 = vmatprep.subr.mxu0 %v410
          %1719 = vmatpush1.msra.mxu0 %v409
          %1720 = vmatprep.subr.mxu0 %v412
          %1721 = vmatpush1.msra.mxu0 %v411
          %1722 = vmatprep.subr.mxu0 %v414
          %1723 = vmatpush1.msra.mxu0 %v413
          %1724 = vmatprep.mubr.f32.mxu0 %v1597
          %1725 = vmatmul.mubr.f32.gmra.mrb[0].mxu0 %v1596
          %v1726 = vpop.f32.mrb[0].mxu0
          %v1727 = vadd.f32 0.0, %v1726
          %v1728 = vpop.f32.mrb[0].mxu0
          %v1729 = vadd.f32 0.0, %v1728
          %1730 = vmatprep.mubr.f32.mxu0 %v1599
          %1731 = vmatmul.mubr.f32.gmra.mrb[0].mxu0 %v1598
          %v1732 = vpop.f32.mrb[0].mxu0
          %v1733 = vadd.f32 0.0, %v1732
          %v1734 = vpop.f32.mrb[0].mxu0
          %v1735 = vadd.f32 0.0, %v1734
          %1736 = vmatprep.mubr.f32.mxu0 %v1601
          %1737 = vmatmul.mubr.f32.gmra.mrb[0].mxu0 %v1600
          %v1738 = vpop.f32.mrb[0].mxu0
          %v1739 = vadd.f32 0.0, %v1738
          %v1740 = vpop.f32.mrb[0].mxu0
          %v1741 = vadd.f32 0.0, %v1740
          %1742 = vmatprep.mubr.f32.mxu0 %v1603
          %1743 = vmatmul.mubr.f32.gmra.mrb[0].mxu0 %v1602
          %v1744 = vpop.f32.mrb[0].mxu0
          %v1745 = vadd.f32 0.0, %v1744
          %v1746 = vpop.f32.mrb[0].mxu0
          %v1747 = vadd.f32 0.0, %v1746
          %1748 = vmatprep.mubr.f32.mxu0 %v1605
          %1749 = vmatmul.mubr.f32.gmra.mrb[0].mxu0 %v1604
          %v1750 = vpop.f32.mrb[0].mxu0
          %v1751 = vadd.f32 0.0, %v1750
          %v1752 = vpop.f32.mrb[0].mxu0
          %v1753 = vadd.f32 0.0, %v1752
          %1754 = vmatprep.mubr.f32.mxu0 %v1607
          %1755 = vmatmul.mubr.f32.gmra.mrb[0].mxu0 %v1606
          %v1756 = vpop.f32.mrb[0].mxu0
          %v1757 = vadd.f32 0.0, %v1756
          %v1758 = vpop.f32.mrb[0].mxu0
          %v1759 = vadd.f32 0.0, %v1758
          %1760 = vmatprep.mubr.f32.mxu0 %v1609
          %1761 = vmatmul.mubr.f32.gmra.mrb[0].mxu0 %v1608
          %v1762 = vpop.f32.mrb[0].mxu0
          %v1763 = vadd.f32 0.0, %v1762
          %v1764 = vpop.f32.mrb[0].mxu0
          %v1765 = vadd.f32 0.0, %v1764
          %1766 = vmatprep.mubr.f32.mxu0 %v1611
          %1767 = vmatmul.mubr.f32.gmra.mrb[0].mxu0 %v1610
          %v1768 = vpop.f32.mrb[0].mxu0
          %v1769 = vadd.f32 0.0, %v1768
          %v1770 = vpop.f32.mrb[0].mxu0
          %v1771 = vadd.f32 0.0, %v1770
          %1772 = vmatprep.mubr.f32.mxu0 %v1613
          %1773 = vmatmul.mubr.f32.gmra.mrb[0].mxu0 %v1612
          %v1774 = vpop.f32.mrb[0].mxu0
          %v1775 = vadd.f32 0.0, %v1774
          %v1776 = vpop.f32.mrb[0].mxu0
          %v1777 = vadd.f32 0.0, %v1776
          %1778 = vmatprep.mubr.f32.mxu0 %v1615
          %1779 = vmatmul.mubr.f32.gmra.mrb[0].mxu0 %v1614
          %v1780 = vpop.f32.mrb[0].mxu0
          %v1781 = vadd.f32 0.0, %v1780
          %v1782 = vpop.f32.mrb[0].mxu0
          %v1783 = vadd.f32 0.0, %v1782
          %1784 = vmatprep.mubr.f32.mxu0 %v1617
          %1785 = vmatmul.mubr.f32.gmra.mrb[0].mxu0 %v1616
          %v1786 = vpop.f32.mrb[0].mxu0
          %v1787 = vadd.f32 0.0, %v1786
          %v1788 = vpop.f32.mrb[0].mxu0
          %v1789 = vadd.f32 0.0, %v1788
          %1790 = vmatprep.mubr.f32.mxu0 %v1619
          %1791 = vmatmul.mubr.f32.gmra.mrb[0].mxu0 %v1618
          %v1792 = vpop.f32.mrb[0].mxu0
          %v1793 = vadd.f32 0.0, %v1792
          %v1794 = vpop.f32.mrb[0].mxu0
          %v1795 = vadd.f32 0.0, %v1794
          %1796 = vmatprep.mubr.f32.mxu0 %v1621
          %1797 = vmatmul.mubr.f32.gmra.mrb[0].mxu0 %v1620
          %v1798 = vpop.f32.mrb[0].mxu0
          %v1799 = vadd.f32 0.0, %v1798
          %v1800 = vpop.f32.mrb[0].mxu0
          %v1801 = vadd.f32 0.0, %v1800
          %1802 = vmatprep.mubr.f32.mxu0 %v1623
          %1803 = vmatmul.mubr.f32.gmra.mrb[0].mxu0 %v1622
          %v1804 = vpop.f32.mrb[0].mxu0
          %v1805 = vadd.f32 0.0, %v1804
          %v1806 = vpop.f32.mrb[0].mxu0
          %v1807 = vadd.f32 0.0, %v1806
          %1808 = vmatprep.mubr.f32.mxu0 %v1625
          %1809 = vmatmul.mubr.f32.gmra.mrb[0].mxu0 %v1624
          %v1810 = vpop.f32.mrb[0].mxu0
          %v1811 = vadd.f32 0.0, %v1810
          %v1812 = vpop.f32.mrb[0].mxu0
          %v1813 = vadd.f32 0.0, %v1812
          %1814 = vmatprep.mubr.f32.mxu0 %v1627
          %1815 = vmatmul.mubr.f32.gmra.mrb[0].mxu0 %v1626
          %v1816 = vpop.f32.mrb[0].mxu0
          %v1817 = vadd.f32 0.0, %v1816
          %v1818 = vpop.f32.mrb[0].mxu0
          %v1819 = vadd.f32 0.0, %v1818
          %1820 = vdwg.mxu0
          %v1821 = vsub.f32 %v1596, %v1727
          %v1822 = vsub.f32 %v1597, %v1729
          %v1823 = vsub.f32 %v1598, %v1733
          %v1824 = vsub.f32 %v1599, %v1735
          %v1825 = vsub.f32 %v1600, %v1739
          %v1826 = vsub.f32 %v1601, %v1741
          %v1827 = vsub.f32 %v1602, %v1745
          %v1828 = vsub.f32 %v1603, %v1747
          %v1829 = vsub.f32 %v1604, %v1751
          %v1830 = vsub.f32 %v1605, %v1753
          %v1831 = vsub.f32 %v1606, %v1757
          %v1832 = vsub.f32 %v1607, %v1759
          %v1833 = vsub.f32 %v1608, %v1763
          %v1834 = vsub.f32 %v1609, %v1765
          %v1835 = vsub.f32 %v1610, %v1769
          %v1836 = vsub.f32 %v1611, %v1771
          %v1837 = vsub.f32 %v1612, %v1775
          %v1838 = vsub.f32 %v1613, %v1777
          %v1839 = vsub.f32 %v1614, %v1781
          %v1840 = vsub.f32 %v1615, %v1783
          %v1841 = vsub.f32 %v1616, %v1787
          %v1842 = vsub.f32 %v1617, %v1789
          %v1843 = vsub.f32 %v1618, %v1793
          %v1844 = vsub.f32 %v1619, %v1795
          %v1845 = vsub.f32 %v1620, %v1799
          %v1846 = vsub.f32 %v1621, %v1801
          %v1847 = vsub.f32 %v1622, %v1805
          %v1848 = vsub.f32 %v1623, %v1807
          %v1849 = vsub.f32 %v1624, %v1811
          %v1850 = vsub.f32 %v1625, %v1813
          %v1851 = vsub.f32 %v1626, %v1817
          %v1852 = vsub.f32 %v1627, %v1819
          %v1853 = vsub.f32 %v1821, %v800
          %v1854 = vsub.f32 %v1822, %v801
          %v1855 = vsub.f32 %v1823, %v802
          %v1856 = vsub.f32 %v1824, %v803
          %v1857 = vsub.f32 %v1825, %v804
          %v1858 = vsub.f32 %v1826, %v805
          %v1859 = vsub.f32 %v1827, %v806
          %v1860 = vsub.f32 %v1828, %v807
          %v1861 = vsub.f32 %v1829, %v808
          %v1862 = vsub.f32 %v1830, %v809
          %v1863 = vsub.f32 %v1831, %v810
          %v1864 = vsub.f32 %v1832, %v811
          %v1865 = vsub.f32 %v1833, %v812
          %v1866 = vsub.f32 %v1834, %v813
          %v1867 = vsub.f32 %v1835, %v814
          %v1868 = vsub.f32 %v1836, %v815
          %v1869 = vsub.f32 %v1837, %v816
          %v1870 = vsub.f32 %v1838, %v817
          %v1871 = vsub.f32 %v1839, %v818
          %v1872 = vsub.f32 %v1840, %v819
          %v1873 = vsub.f32 %v1841, %v820
          %v1874 = vsub.f32 %v1842, %v821
          %v1875 = vsub.f32 %v1843, %v822
          %v1876 = vsub.f32 %v1844, %v823
          %v1877 = vsub.f32 %v1845, %v824
          %v1878 = vsub.f32 %v1846, %v825
          %v1879 = vsub.f32 %v1847, %v826
          %v1880 = vsub.f32 %v1848, %v827
          %v1881 = vsub.f32 %v1849, %v828
          %v1882 = vsub.f32 %v1850, %v829
          %v1883 = vsub.f32 %v1851, %v830
          %v1884 = vsub.f32 %v1852, %v831
          %v1885 = vmax.f32 %v1853, %v1854
          %1886 = vmax.xlane.f32.xlu0 %v1885
          %v1887 = vpop.xlane.xlu0 %1886
          %v1888 = vmax.f32 %v1855, %v1856
          %1889 = vmax.xlane.f32.xlu0 %v1888
          %v1890 = vpop.xlane.xlu0 %1889
          %v1891 = vmax.f32 %v1857, %v1858
          %1892 = vmax.xlane.f32.xlu0 %v1891
          %v1893 = vpop.xlane.xlu0 %1892
          %v1894 = vmax.f32 %v1859, %v1860
          %1895 = vmax.xlane.f32.xlu0 %v1894
          %v1896 = vpop.xlane.xlu0 %1895
          %v1897 = vmax.f32 %v1861, %v1862
          %1898 = vmax.xlane.f32.xlu0 %v1897
          %v1899 = vpop.xlane.xlu0 %1898
          %v1900 = vmax.f32 %v1863, %v1864
          %1901 = vmax.xlane.f32.xlu0 %v1900
          %v1902 = vpop.xlane.xlu0 %1901
          %v1903 = vmax.f32 %v1865, %v1866
          %1904 = vmax.xlane.f32.xlu0 %v1903
          %v1905 = vpop.xlane.xlu0 %1904
          %v1906 = vmax.f32 %v1867, %v1868
          %1907 = vmax.xlane.f32.xlu0 %v1906
          %v1908 = vpop.xlane.xlu0 %1907
          %v1909 = vmax.f32 %v1869, %v1870
          %1910 = vmax.xlane.f32.xlu0 %v1909
          %v1911 = vpop.xlane.xlu0 %1910
          %v1912 = vmax.f32 %v1871, %v1872
          %1913 = vmax.xlane.f32.xlu0 %v1912
          %v1914 = vpop.xlane.xlu0 %1913
          %v1915 = vmax.f32 %v1873, %v1874
          %1916 = vmax.xlane.f32.xlu0 %v1915
          %v1917 = vpop.xlane.xlu0 %1916
          %v1918 = vmax.f32 %v1875, %v1876
          %1919 = vmax.xlane.f32.xlu0 %v1918
          %v1920 = vpop.xlane.xlu0 %1919
          %v1921 = vmax.f32 %v1877, %v1878
          %1922 = vmax.xlane.f32.xlu0 %v1921
          %v1923 = vpop.xlane.xlu0 %1922
          %v1924 = vmax.f32 %v1879, %v1880
          %1925 = vmax.xlane.f32.xlu0 %v1924
          %v1926 = vpop.xlane.xlu0 %1925
          %v1927 = vmax.f32 %v1881, %v1882
          %1928 = vmax.xlane.f32.xlu0 %v1927
          %v1929 = vpop.xlane.xlu0 %1928
          %v1930 = vmax.f32 %v1883, %v1884
          %1931 = vmax.xlane.f32.xlu0 %v1930
          %v1932 = vpop.xlane.xlu0 %1931
          %v1933 = vadd.f32 %v1853, %v1854
          %1934 = vadd.xlane.f32.xlu0 %v1933
          %v1935 = vpop.xlane.xlu0 %1934
          %v1936 = vadd.f32 %v1855, %v1856
          %1937 = vadd.xlane.f32.xlu0 %v1936
          %v1938 = vpop.xlane.xlu0 %1937
          %v1939 = vadd.f32 %v1857, %v1858
          %1940 = vadd.xlane.f32.xlu0 %v1939
          %v1941 = vpop.xlane.xlu0 %1940
          %v1942 = vadd.f32 %v1859, %v1860
          %1943 = vadd.xlane.f32.xlu0 %v1942
          %v1944 = vpop.xlane.xlu0 %1943
          %v1945 = vadd.f32 %v1861, %v1862
          %1946 = vadd.xlane.f32.xlu0 %v1945
          %v1947 = vpop.xlane.xlu0 %1946
          %v1948 = vadd.f32 %v1863, %v1864
          %1949 = vadd.xlane.f32.xlu0 %v1948
          %v1950 = vpop.xlane.xlu0 %1949
          %v1951 = vadd.f32 %v1865, %v1866
          %1952 = vadd.xlane.f32.xlu0 %v1951
          %v1953 = vpop.xlane.xlu0 %1952
          %v1954 = vadd.f32 %v1867, %v1868
          %1955 = vadd.xlane.f32.xlu0 %v1954
          %v1956 = vpop.xlane.xlu0 %1955
          %v1957 = vadd.f32 %v1869, %v1870
          %1958 = vadd.xlane.f32.xlu0 %v1957
          %v1959 = vpop.xlane.xlu0 %1958
          %v1960 = vadd.f32 %v1871, %v1872
          %1961 = vadd.xlane.f32.xlu0 %v1960
          %v1962 = vpop.xlane.xlu0 %1961
          %v1963 = vadd.f32 %v1873, %v1874
          %1964 = vadd.xlane.f32.xlu0 %v1963
          %v1965 = vpop.xlane.xlu0 %1964
          %v1966 = vadd.f32 %v1875, %v1876
          %1967 = vadd.xlane.f32.xlu0 %v1966
          %v1968 = vpop.xlane.xlu0 %1967
          %v1969 = vadd.f32 %v1877, %v1878
          %1970 = vadd.xlane.f32.xlu0 %v1969
          %v1971 = vpop.xlane.xlu0 %1970
          %v1972 = vadd.f32 %v1879, %v1880
          %1973 = vadd.xlane.f32.xlu0 %v1972
          %v1974 = vpop.xlane.xlu0 %1973
          %v1975 = vadd.f32 %v1881, %v1882
          %1976 = vadd.xlane.f32.xlu0 %v1975
          %v1977 = vpop.xlane.xlu0 %1976
          %v1978 = vadd.f32 %v1883, %v1884
          %1979 = vadd.xlane.f32.xlu0 %v1978
          %v1980 = vpop.xlane.xlu0 %1979
          %v1981 = vsub.f32 %v1887, 1.0
          %v1982 = vsub.f32 %v1890, 1.0
          %v1983 = vsub.f32 %v1893, 1.0
          %v1984 = vsub.f32 %v1896, 1.0
          %v1985 = vsub.f32 %v1899, 1.0
          %v1986 = vsub.f32 %v1902, 1.0
          %v1987 = vsub.f32 %v1905, 1.0
          %v1988 = vsub.f32 %v1908, 1.0
          %v1989 = vsub.f32 %v1911, 1.0
          %v1990 = vsub.f32 %v1914, 1.0
          %v1991 = vsub.f32 %v1917, 1.0
          %v1992 = vsub.f32 %v1920, 1.0
          %v1993 = vsub.f32 %v1923, 1.0
          %v1994 = vsub.f32 %v1926, 1.0
          %v1995 = vsub.f32 %v1929, 1.0
          %v1996 = vsub.f32 %v1932, 1.0
          %v1997 = vsub.f32 %v1935, 1.0
          %v1998 = vsub.f32 %v1938, 1.0
          %v1999 = vsub.f32 %v1941, 1.0
          %v2000 = vsub.f32 %v1944, 1.0
          %v2001 = vsub.f32 %v1947, 1.0
          %v2002 = vsub.f32 %v1950, 1.0
          %v2003 = vsub.f32 %v1953, 1.0
          %v2004 = vsub.f32 %v1956, 1.0
          %v2005 = vsub.f32 %v1959, 1.0
          %v2006 = vsub.f32 %v1962, 1.0
          %v2007 = vsub.f32 %v1965, 1.0
          %v2008 = vsub.f32 %v1968, 1.0
          %v2009 = vsub.f32 %v1971, 1.0
          %v2010 = vsub.f32 %v1974, 1.0
          %v2011 = vsub.f32 %v1977, 1.0
          %v2012 = vsub.f32 %v1980, 1.0
          %v2013 = vmul.f32 %v1997, 0.00390625
          %v2014 = vmul.f32 %v1998, 0.00390625
          %v2015 = vmul.f32 %v1999, 0.00390625
          %v2016 = vmul.f32 %v2000, 0.00390625
          %v2017 = vmul.f32 %v2001, 0.00390625
          %v2018 = vmul.f32 %v2002, 0.00390625
          %v2019 = vmul.f32 %v2003, 0.00390625
          %v2020 = vmul.f32 %v2004, 0.00390625
          %v2021 = vmul.f32 %v2005, 0.00390625
          %v2022 = vmul.f32 %v2006, 0.00390625
          %v2023 = vmul.f32 %v2007, 0.00390625
          %v2024 = vmul.f32 %v2008, 0.00390625
          %v2025 = vmul.f32 %v2009, 0.00390625
          %v2026 = vmul.f32 %v2010, 0.00390625
          %v2027 = vmul.f32 %v2011, 0.00390625
          %v2028 = vmul.f32 %v2012, 0.00390625
          %v2029 = vmax.f32 %v1981, %v2013
          %v2030 = vmax.f32 %v1982, %v2014
          %v2031 = vmax.f32 %v1983, %v2015
          %v2032 = vmax.f32 %v1984, %v2016
          %v2033 = vmax.f32 %v1985, %v2017
          %v2034 = vmax.f32 %v1986, %v2018
          %v2035 = vmax.f32 %v1987, %v2019
          %v2036 = vmax.f32 %v1988, %v2020
          %v2037 = vmax.f32 %v1989, %v2021
          %v2038 = vmax.f32 %v1990, %v2022
          %v2039 = vmax.f32 %v1991, %v2023
          %v2040 = vmax.f32 %v1992, %v2024
          %v2041 = vmax.f32 %v1993, %v2025
          %v2042 = vmax.f32 %v1994, %v2026
          %v2043 = vmax.f32 %v1995, %v2027
          %v2044 = vmax.f32 %v1996, %v2028
          loop: start=0, step=1, limit=26
          $region71: #{tpu_custom_call.1} parent=67 // loop_pre_header
            _
          $region72: #{tpu_custom_call.1} parent=67 // loop_header
            %s2046 = sphi 0, %s2050
            %p2047 = scmp.ge.s32.totalorder %s2046, 26
            %v2051 = vphi %v2029, %v2243
            %v2052 = vphi %v2030, %v2244
            %v2053 = vphi %v2031, %v2245
            %v2054 = vphi %v2032, %v2246
            %v2055 = vphi %v2033, %v2247
            %v2056 = vphi %v2034, %v2248
            %v2057 = vphi %v2035, %v2249
            %v2058 = vphi %v2036, %v2250
            %v2059 = vphi %v2037, %v2251
            %v2060 = vphi %v2038, %v2252
            %v2061 = vphi %v2039, %v2253
            %v2062 = vphi %v2040, %v2254
            %v2063 = vphi %v2041, %v2255
            %v2064 = vphi %v2042, %v2256
            %v2065 = vphi %v2043, %v2257
            %v2066 = vphi %v2044, %v2258
            %v2067 = vphi %v1887, %v2259
            %v2068 = vphi %v1890, %v2260
            %v2069 = vphi %v1893, %v2261
            %v2070 = vphi %v1896, %v2262
            %v2071 = vphi %v1899, %v2263
            %v2072 = vphi %v1902, %v2264
            %v2073 = vphi %v1905, %v2265
            %v2074 = vphi %v1908, %v2266
            %v2075 = vphi %v1911, %v2267
            %v2076 = vphi %v1914, %v2268
            %v2077 = vphi %v1917, %v2269
            %v2078 = vphi %v1920, %v2270
            %v2079 = vphi %v1923, %v2271
            %v2080 = vphi %v1926, %v2272
            %v2081 = vphi %v1929, %v2273
            %v2082 = vphi %v1932, %v2274
          $region73: #{tpu_custom_call.1} parent=67 // loop_header_branch
            %2049 = sbr.rel (%p2047) target = $region77
          $region74: #{tpu_custom_call.1} parent=67 // loop_body
            %v2083 = vadd.f32 %v2051, %v2067
            %v2084 = vadd.f32 %v2052, %v2068
            %v2085 = vadd.f32 %v2053, %v2069
            %v2086 = vadd.f32 %v2054, %v2070
            %v2087 = vadd.f32 %v2055, %v2071
            %v2088 = vadd.f32 %v2056, %v2072
            %v2089 = vadd.f32 %v2057, %v2073
            %v2090 = vadd.f32 %v2058, %v2074
            %v2091 = vadd.f32 %v2059, %v2075
            %v2092 = vadd.f32 %v2060, %v2076
            %v2093 = vadd.f32 %v2061, %v2077
            %v2094 = vadd.f32 %v2062, %v2078
            %v2095 = vadd.f32 %v2063, %v2079
            %v2096 = vadd.f32 %v2064, %v2080
            %v2097 = vadd.f32 %v2065, %v2081
            %v2098 = vadd.f32 %v2066, %v2082
            %v2099 = vmul.f32 %v2083, 0.5
            %v2100 = vmul.f32 %v2084, 0.5
            %v2101 = vmul.f32 %v2085, 0.5
            %v2102 = vmul.f32 %v2086, 0.5
            %v2103 = vmul.f32 %v2087, 0.5
            %v2104 = vmul.f32 %v2088, 0.5
            %v2105 = vmul.f32 %v2089, 0.5
            %v2106 = vmul.f32 %v2090, 0.5
            %v2107 = vmul.f32 %v2091, 0.5
            %v2108 = vmul.f32 %v2092, 0.5
            %v2109 = vmul.f32 %v2093, 0.5
            %v2110 = vmul.f32 %v2094, 0.5
            %v2111 = vmul.f32 %v2095, 0.5
            %v2112 = vmul.f32 %v2096, 0.5
            %v2113 = vmul.f32 %v2097, 0.5
            %v2114 = vmul.f32 %v2098, 0.5
            %v2115 = vsub.f32 %v1853, %v2099
            %v2116 = vsub.f32 %v1854, %v2099
            %v2117 = vsub.f32 %v1855, %v2100
            %v2118 = vsub.f32 %v1856, %v2100
            %v2119 = vsub.f32 %v1857, %v2101
            %v2120 = vsub.f32 %v1858, %v2101
            %v2121 = vsub.f32 %v1859, %v2102
            %v2122 = vsub.f32 %v1860, %v2102
            %v2123 = vsub.f32 %v1861, %v2103
            %v2124 = vsub.f32 %v1862, %v2103
            %v2125 = vsub.f32 %v1863, %v2104
            %v2126 = vsub.f32 %v1864, %v2104
            %v2127 = vsub.f32 %v1865, %v2105
            %v2128 = vsub.f32 %v1866, %v2105
            %v2129 = vsub.f32 %v1867, %v2106
            %v2130 = vsub.f32 %v1868, %v2106
            %v2131 = vsub.f32 %v1869, %v2107
            %v2132 = vsub.f32 %v1870, %v2107
            %v2133 = vsub.f32 %v1871, %v2108
            %v2134 = vsub.f32 %v1872, %v2108
            %v2135 = vsub.f32 %v1873, %v2109
            %v2136 = vsub.f32 %v1874, %v2109
            %v2137 = vsub.f32 %v1875, %v2110
            %v2138 = vsub.f32 %v1876, %v2110
            %v2139 = vsub.f32 %v1877, %v2111
            %v2140 = vsub.f32 %v1878, %v2111
            %v2141 = vsub.f32 %v1879, %v2112
            %v2142 = vsub.f32 %v1880, %v2112
            %v2143 = vsub.f32 %v1881, %v2113
            %v2144 = vsub.f32 %v1882, %v2113
            %v2145 = vsub.f32 %v1883, %v2114
            %v2146 = vsub.f32 %v1884, %v2114
            %v2147 = vmax.f32 %v2115, 0.0
            %v2148 = vmax.f32 %v2116, 0.0
            %v2149 = vmax.f32 %v2117, 0.0
            %v2150 = vmax.f32 %v2118, 0.0
            %v2151 = vmax.f32 %v2119, 0.0
            %v2152 = vmax.f32 %v2120, 0.0
            %v2153 = vmax.f32 %v2121, 0.0
            %v2154 = vmax.f32 %v2122, 0.0
            %v2155 = vmax.f32 %v2123, 0.0
            %v2156 = vmax.f32 %v2124, 0.0
            %v2157 = vmax.f32 %v2125, 0.0
            %v2158 = vmax.f32 %v2126, 0.0
            %v2159 = vmax.f32 %v2127, 0.0
            %v2160 = vmax.f32 %v2128, 0.0
            %v2161 = vmax.f32 %v2129, 0.0
            %v2162 = vmax.f32 %v2130, 0.0
            %v2163 = vmax.f32 %v2131, 0.0
            %v2164 = vmax.f32 %v2132, 0.0
            %v2165 = vmax.f32 %v2133, 0.0
            %v2166 = vmax.f32 %v2134, 0.0
            %v2167 = vmax.f32 %v2135, 0.0
            %v2168 = vmax.f32 %v2136, 0.0
            %v2169 = vmax.f32 %v2137, 0.0
            %v2170 = vmax.f32 %v2138, 0.0
            %v2171 = vmax.f32 %v2139, 0.0
            %v2172 = vmax.f32 %v2140, 0.0
            %v2173 = vmax.f32 %v2141, 0.0
            %v2174 = vmax.f32 %v2142, 0.0
            %v2175 = vmax.f32 %v2143, 0.0
            %v2176 = vmax.f32 %v2144, 0.0
            %v2177 = vmax.f32 %v2145, 0.0
            %v2178 = vmax.f32 %v2146, 0.0
            %v2179 = vadd.f32 %v2147, %v2148
            %2180 = vadd.xlane.f32.xlu0 %v2179
            %v2181 = vpop.xlane.xlu0 %2180
            %v2182 = vadd.f32 %v2149, %v2150
            %2183 = vadd.xlane.f32.xlu0 %v2182
            %v2184 = vpop.xlane.xlu0 %2183
            %v2185 = vadd.f32 %v2151, %v2152
            %2186 = vadd.xlane.f32.xlu0 %v2185
            %v2187 = vpop.xlane.xlu0 %2186
            %v2188 = vadd.f32 %v2153, %v2154
            %2189 = vadd.xlane.f32.xlu0 %v2188
            %v2190 = vpop.xlane.xlu0 %2189
            %v2191 = vadd.f32 %v2155, %v2156
            %2192 = vadd.xlane.f32.xlu0 %v2191
            %v2193 = vpop.xlane.xlu0 %2192
            %v2194 = vadd.f32 %v2157, %v2158
            %2195 = vadd.xlane.f32.xlu0 %v2194
            %v2196 = vpop.xlane.xlu0 %2195
            %v2197 = vadd.f32 %v2159, %v2160
            %2198 = vadd.xlane.f32.xlu0 %v2197
            %v2199 = vpop.xlane.xlu0 %2198
            %v2200 = vadd.f32 %v2161, %v2162
            %2201 = vadd.xlane.f32.xlu0 %v2200
            %v2202 = vpop.xlane.xlu0 %2201
            %v2203 = vadd.f32 %v2163, %v2164
            %2204 = vadd.xlane.f32.xlu0 %v2203
            %v2205 = vpop.xlane.xlu0 %2204
            %v2206 = vadd.f32 %v2165, %v2166
            %2207 = vadd.xlane.f32.xlu0 %v2206
            %v2208 = vpop.xlane.xlu0 %2207
            %v2209 = vadd.f32 %v2167, %v2168
            %2210 = vadd.xlane.f32.xlu0 %v2209
            %v2211 = vpop.xlane.xlu0 %2210
            %v2212 = vadd.f32 %v2169, %v2170
            %2213 = vadd.xlane.f32.xlu0 %v2212
            %v2214 = vpop.xlane.xlu0 %2213
            %v2215 = vadd.f32 %v2171, %v2172
            %2216 = vadd.xlane.f32.xlu0 %v2215
            %v2217 = vpop.xlane.xlu0 %2216
            %v2218 = vadd.f32 %v2173, %v2174
            %2219 = vadd.xlane.f32.xlu0 %v2218
            %v2220 = vpop.xlane.xlu0 %2219
            %v2221 = vadd.f32 %v2175, %v2176
            %2222 = vadd.xlane.f32.xlu0 %v2221
            %v2223 = vpop.xlane.xlu0 %2222
            %v2224 = vadd.f32 %v2177, %v2178
            %2225 = vadd.xlane.f32.xlu0 %v2224
            %v2226 = vpop.xlane.xlu0 %2225
            %vm2227 = vcmp.ge.f32.partialorder %v2181, 1.0
            %vm2228 = vcmp.ge.f32.partialorder %v2184, 1.0
            %vm2229 = vcmp.ge.f32.partialorder %v2187, 1.0
            %vm2230 = vcmp.ge.f32.partialorder %v2190, 1.0
            %vm2231 = vcmp.ge.f32.partialorder %v2193, 1.0
            %vm2232 = vcmp.ge.f32.partialorder %v2196, 1.0
            %vm2233 = vcmp.ge.f32.partialorder %v2199, 1.0
            %vm2234 = vcmp.ge.f32.partialorder %v2202, 1.0
            %vm2235 = vcmp.ge.f32.partialorder %v2205, 1.0
            %vm2236 = vcmp.ge.f32.partialorder %v2208, 1.0
            %vm2237 = vcmp.ge.f32.partialorder %v2211, 1.0
            %vm2238 = vcmp.ge.f32.partialorder %v2214, 1.0
            %vm2239 = vcmp.ge.f32.partialorder %v2217, 1.0
            %vm2240 = vcmp.ge.f32.partialorder %v2220, 1.0
            %vm2241 = vcmp.ge.f32.partialorder %v2223, 1.0
            %vm2242 = vcmp.ge.f32.partialorder %v2226, 1.0
            %v2243 = vsel %vm2227, %v2099, %v2051
            %v2244 = vsel %vm2228, %v2100, %v2052
            %v2245 = vsel %vm2229, %v2101, %v2053
            %v2246 = vsel %vm2230, %v2102, %v2054
            %v2247 = vsel %vm2231, %v2103, %v2055
            %v2248 = vsel %vm2232, %v2104, %v2056
            %v2249 = vsel %vm2233, %v2105, %v2057
            %v2250 = vsel %vm2234, %v2106, %v2058
            %v2251 = vsel %vm2235, %v2107, %v2059
            %v2252 = vsel %vm2236, %v2108, %v2060
            %v2253 = vsel %vm2237, %v2109, %v2061
            %v2254 = vsel %vm2238, %v2110, %v2062
            %v2255 = vsel %vm2239, %v2111, %v2063
            %v2256 = vsel %vm2240, %v2112, %v2064
            %v2257 = vsel %vm2241, %v2113, %v2065
            %v2258 = vsel %vm2242, %v2114, %v2066
            %v2259 = vsel %vm2227, %v2067, %v2099
            %v2260 = vsel %vm2228, %v2068, %v2100
            %v2261 = vsel %vm2229, %v2069, %v2101
            %v2262 = vsel %vm2230, %v2070, %v2102
            %v2263 = vsel %vm2231, %v2071, %v2103
            %v2264 = vsel %vm2232, %v2072, %v2104
            %v2265 = vsel %vm2233, %v2073, %v2105
            %v2266 = vsel %vm2234, %v2074, %v2106
            %v2267 = vsel %vm2235, %v2075, %v2107
            %v2268 = vsel %vm2236, %v2076, %v2108
            %v2269 = vsel %vm2237, %v2077, %v2109
            %v2270 = vsel %vm2238, %v2078, %v2110
            %v2271 = vsel %vm2239, %v2079, %v2111
            %v2272 = vsel %vm2240, %v2080, %v2112
            %v2273 = vsel %vm2241, %v2081, %v2113
            %v2274 = vsel %vm2242, %v2082, %v2114
          $region75: #{tpu_custom_call.1} parent=67 // loop_footer
            %s2050 = sadd.s32 1, %s2046
          $region76: #{tpu_custom_call.1} parent=67 // loop_footer_branch
            %2045 = sbr.rel target = $region72
          $region77: #{tpu_custom_call.1} parent=67 // loop_exit
            _
          %vm2275 = vcmp.ge.f32.partialorder %v1853, %v2051
          %vm2276 = vcmp.ge.f32.partialorder %v1854, %v2051
          %vm2277 = vcmp.ge.f32.partialorder %v1855, %v2052
          %vm2278 = vcmp.ge.f32.partialorder %v1856, %v2052
          %vm2279 = vcmp.ge.f32.partialorder %v1857, %v2053
          %vm2280 = vcmp.ge.f32.partialorder %v1858, %v2053
          %vm2281 = vcmp.ge.f32.partialorder %v1859, %v2054
          %vm2282 = vcmp.ge.f32.partialorder %v1860, %v2054
          %vm2283 = vcmp.ge.f32.partialorder %v1861, %v2055
          %vm2284 = vcmp.ge.f32.partialorder %v1862, %v2055
          %vm2285 = vcmp.ge.f32.partialorder %v1863, %v2056
          %vm2286 = vcmp.ge.f32.partialorder %v1864, %v2056
          %vm2287 = vcmp.ge.f32.partialorder %v1865, %v2057
          %vm2288 = vcmp.ge.f32.partialorder %v1866, %v2057
          %vm2289 = vcmp.ge.f32.partialorder %v1867, %v2058
          %vm2290 = vcmp.ge.f32.partialorder %v1868, %v2058
          %vm2291 = vcmp.ge.f32.partialorder %v1869, %v2059
          %vm2292 = vcmp.ge.f32.partialorder %v1870, %v2059
          %vm2293 = vcmp.ge.f32.partialorder %v1871, %v2060
          %vm2294 = vcmp.ge.f32.partialorder %v1872, %v2060
          %vm2295 = vcmp.ge.f32.partialorder %v1873, %v2061
          %vm2296 = vcmp.ge.f32.partialorder %v1874, %v2061
          %vm2297 = vcmp.ge.f32.partialorder %v1875, %v2062
          %vm2298 = vcmp.ge.f32.partialorder %v1876, %v2062
          %vm2299 = vcmp.ge.f32.partialorder %v1877, %v2063
          %vm2300 = vcmp.ge.f32.partialorder %v1878, %v2063
          %vm2301 = vcmp.ge.f32.partialorder %v1879, %v2064
          %vm2302 = vcmp.ge.f32.partialorder %v1880, %v2064
          %vm2303 = vcmp.ge.f32.partialorder %v1881, %v2065
          %vm2304 = vcmp.ge.f32.partialorder %v1882, %v2065
          %vm2305 = vcmp.ge.f32.partialorder %v1883, %v2066
          %vm2306 = vcmp.ge.f32.partialorder %v1884, %v2066
          %v2307 = vsel %vm2275, 1, 0
          %v2308 = vsel %vm2276, 1, 0
          %v2309 = vsel %vm2277, 1, 0
          %v2310 = vsel %vm2278, 1, 0
          %v2311 = vsel %vm2279, 1, 0
          %v2312 = vsel %vm2280, 1, 0
          %v2313 = vsel %vm2281, 1, 0
          %v2314 = vsel %vm2282, 1, 0
          %v2315 = vsel %vm2283, 1, 0
          %v2316 = vsel %vm2284, 1, 0
          %v2317 = vsel %vm2285, 1, 0
          %v2318 = vsel %vm2286, 1, 0
          %v2319 = vsel %vm2287, 1, 0
          %v2320 = vsel %vm2288, 1, 0
          %v2321 = vsel %vm2289, 1, 0
          %v2322 = vsel %vm2290, 1, 0
          %v2323 = vsel %vm2291, 1, 0
          %v2324 = vsel %vm2292, 1, 0
          %v2325 = vsel %vm2293, 1, 0
          %v2326 = vsel %vm2294, 1, 0
          %v2327 = vsel %vm2295, 1, 0
          %v2328 = vsel %vm2296, 1, 0
          %v2329 = vsel %vm2297, 1, 0
          %v2330 = vsel %vm2298, 1, 0
          %v2331 = vsel %vm2299, 1, 0
          %v2332 = vsel %vm2300, 1, 0
          %v2333 = vsel %vm2301, 1, 0
          %v2334 = vsel %vm2302, 1, 0
          %v2335 = vsel %vm2303, 1, 0
          %v2336 = vsel %vm2304, 1, 0
          %v2337 = vsel %vm2305, 1, 0
          %v2338 = vsel %vm2306, 1, 0
          %v2339 = vcvt.s32.f32 %v2307
          %v2340 = vcvt.s32.f32 %v2308
          %v2341 = vcvt.s32.f32 %v2309
          %v2342 = vcvt.s32.f32 %v2310
          %v2343 = vcvt.s32.f32 %v2311
          %v2344 = vcvt.s32.f32 %v2312
          %v2345 = vcvt.s32.f32 %v2313
          %v2346 = vcvt.s32.f32 %v2314
          %v2347 = vcvt.s32.f32 %v2315
          %v2348 = vcvt.s32.f32 %v2316
          %v2349 = vcvt.s32.f32 %v2317
          %v2350 = vcvt.s32.f32 %v2318
          %v2351 = vcvt.s32.f32 %v2319
          %v2352 = vcvt.s32.f32 %v2320
          %v2353 = vcvt.s32.f32 %v2321
          %v2354 = vcvt.s32.f32 %v2322
          %v2355 = vcvt.s32.f32 %v2323
          %v2356 = vcvt.s32.f32 %v2324
          %v2357 = vcvt.s32.f32 %v2325
          %v2358 = vcvt.s32.f32 %v2326
          %v2359 = vcvt.s32.f32 %v2327
          %v2360 = vcvt.s32.f32 %v2328
          %v2361 = vcvt.s32.f32 %v2329
          %v2362 = vcvt.s32.f32 %v2330
          %v2363 = vcvt.s32.f32 %v2331
          %v2364 = vcvt.s32.f32 %v2332
          %v2365 = vcvt.s32.f32 %v2333
          %v2366 = vcvt.s32.f32 %v2334
          %v2367 = vcvt.s32.f32 %v2335
          %v2368 = vcvt.s32.f32 %v2336
          %v2369 = vcvt.s32.f32 %v2337
          %v2370 = vcvt.s32.f32 %v2338
          %v2371 = vadd.f32 %v2339, %v2340
          %2372 = vadd.xlane.f32.xlu0 %v2371
          %v2373 = vpop.xlane.xlu0 %2372
          %v2374 = vadd.f32 %v2341, %v2342
          %2375 = vadd.xlane.f32.xlu0 %v2374
          %v2376 = vpop.xlane.xlu0 %2375
          %v2377 = vadd.f32 %v2343, %v2344
          %2378 = vadd.xlane.f32.xlu0 %v2377
          %v2379 = vpop.xlane.xlu0 %2378
          %v2380 = vadd.f32 %v2345, %v2346
          %2381 = vadd.xlane.f32.xlu0 %v2380
          %v2382 = vpop.xlane.xlu0 %2381
          %v2383 = vadd.f32 %v2347, %v2348
          %2384 = vadd.xlane.f32.xlu0 %v2383
          %v2385 = vpop.xlane.xlu0 %2384
          %v2386 = vadd.f32 %v2349, %v2350
          %2387 = vadd.xlane.f32.xlu0 %v2386
          %v2388 = vpop.xlane.xlu0 %2387
          %v2389 = vadd.f32 %v2351, %v2352
          %2390 = vadd.xlane.f32.xlu0 %v2389
          %v2391 = vpop.xlane.xlu0 %2390
          %v2392 = vadd.f32 %v2353, %v2354
          %2393 = vadd.xlane.f32.xlu0 %v2392
          %v2394 = vpop.xlane.xlu0 %2393
          %v2395 = vadd.f32 %v2355, %v2356
          %2396 = vadd.xlane.f32.xlu0 %v2395
          %v2397 = vpop.xlane.xlu0 %2396
          %v2398 = vadd.f32 %v2357, %v2358
          %2399 = vadd.xlane.f32.xlu0 %v2398
          %v2400 = vpop.xlane.xlu0 %2399
          %v2401 = vadd.f32 %v2359, %v2360
          %2402 = vadd.xlane.f32.xlu0 %v2401
          %v2403 = vpop.xlane.xlu0 %2402
          %v2404 = vadd.f32 %v2361, %v2362
          %2405 = vadd.xlane.f32.xlu0 %v2404
          %v2406 = vpop.xlane.xlu0 %2405
          %v2407 = vadd.f32 %v2363, %v2364
          %2408 = vadd.xlane.f32.xlu0 %v2407
          %v2409 = vpop.xlane.xlu0 %2408
          %v2410 = vadd.f32 %v2365, %v2366
          %2411 = vadd.xlane.f32.xlu0 %v2410
          %v2412 = vpop.xlane.xlu0 %2411
          %v2413 = vadd.f32 %v2367, %v2368
          %2414 = vadd.xlane.f32.xlu0 %v2413
          %v2415 = vpop.xlane.xlu0 %2414
          %v2416 = vadd.f32 %v2369, %v2370
          %2417 = vadd.xlane.f32.xlu0 %v2416
          %v2418 = vpop.xlane.xlu0 %2417
          %v2419 = vmul.f32 %v1853, %v2339
          %v2420 = vmul.f32 %v1854, %v2340
          %v2421 = vmul.f32 %v1855, %v2341
          %v2422 = vmul.f32 %v1856, %v2342
          %v2423 = vmul.f32 %v1857, %v2343
          %v2424 = vmul.f32 %v1858, %v2344
          %v2425 = vmul.f32 %v1859, %v2345
          %v2426 = vmul.f32 %v1860, %v2346
          %v2427 = vmul.f32 %v1861, %v2347
          %v2428 = vmul.f32 %v1862, %v2348
          %v2429 = vmul.f32 %v1863, %v2349
          %v2430 = vmul.f32 %v1864, %v2350
          %v2431 = vmul.f32 %v1865, %v2351
          %v2432 = vmul.f32 %v1866, %v2352
          %v2433 = vmul.f32 %v1867, %v2353
          %v2434 = vmul.f32 %v1868, %v2354
          %v2435 = vmul.f32 %v1869, %v2355
          %v2436 = vmul.f32 %v1870, %v2356
          %v2437 = vmul.f32 %v1871, %v2357
          %v2438 = vmul.f32 %v1872, %v2358
          %v2439 = vmul.f32 %v1873, %v2359
          %v2440 = vmul.f32 %v1874, %v2360
          %v2441 = vmul.f32 %v1875, %v2361
          %v2442 = vmul.f32 %v1876, %v2362
          %v2443 = vmul.f32 %v1877, %v2363
          %v2444 = vmul.f32 %v1878, %v2364
          %v2445 = vmul.f32 %v1879, %v2365
          %v2446 = vmul.f32 %v1880, %v2366
          %v2447 = vmul.f32 %v1881, %v2367
          %v2448 = vmul.f32 %v1882, %v2368
          %v2449 = vmul.f32 %v1883, %v2369
          %v2450 = vmul.f32 %v1884, %v2370
          %v2451 = vadd.f32 %v2419, %v2420
          %2452 = vadd.xlane.f32.xlu0 %v2451
          %v2453 = vpop.xlane.xlu0 %2452
          %v2454 = vadd.f32 %v2421, %v2422
          %2455 = vadd.xlane.f32.xlu0 %v2454
          %v2456 = vpop.xlane.xlu0 %2455
          %v2457 = vadd.f32 %v2423, %v2424
          %2458 = vadd.xlane.f32.xlu0 %v2457
          %v2459 = vpop.xlane.xlu0 %2458
          %v2460 = vadd.f32 %v2425, %v2426
          %2461 = vadd.xlane.f32.xlu0 %v2460
          %v2462 = vpop.xlane.xlu0 %2461
          %v2463 = vadd.f32 %v2427, %v2428
          %2464 = vadd.xlane.f32.xlu0 %v2463
          %v2465 = vpop.xlane.xlu0 %2464
          %v2466 = vadd.f32 %v2429, %v2430
          %2467 = vadd.xlane.f32.xlu0 %v2466
          %v2468 = vpop.xlane.xlu0 %2467
          %v2469 = vadd.f32 %v2431, %v2432
          %2470 = vadd.xlane.f32.xlu0 %v2469
          %v2471 = vpop.xlane.xlu0 %2470
          %v2472 = vadd.f32 %v2433, %v2434
          %2473 = vadd.xlane.f32.xlu0 %v2472
          %v2474 = vpop.xlane.xlu0 %2473
          %v2475 = vadd.f32 %v2435, %v2436
          %2476 = vadd.xlane.f32.xlu0 %v2475
          %v2477 = vpop.xlane.xlu0 %2476
          %v2478 = vadd.f32 %v2437, %v2438
          %2479 = vadd.xlane.f32.xlu0 %v2478
          %v2480 = vpop.xlane.xlu0 %2479
          %v2481 = vadd.f32 %v2439, %v2440
          %2482 = vadd.xlane.f32.xlu0 %v2481
          %v2483 = vpop.xlane.xlu0 %2482
          %v2484 = vadd.f32 %v2441, %v2442
          %2485 = vadd.xlane.f32.xlu0 %v2484
          %v2486 = vpop.xlane.xlu0 %2485
          %v2487 = vadd.f32 %v2443, %v2444
          %2488 = vadd.xlane.f32.xlu0 %v2487
          %v2489 = vpop.xlane.xlu0 %2488
          %v2490 = vadd.f32 %v2445, %v2446
          %2491 = vadd.xlane.f32.xlu0 %v2490
          %v2492 = vpop.xlane.xlu0 %2491
          %v2493 = vadd.f32 %v2447, %v2448
          %2494 = vadd.xlane.f32.xlu0 %v2493
          %v2495 = vpop.xlane.xlu0 %2494
          %v2496 = vadd.f32 %v2449, %v2450
          %2497 = vadd.xlane.f32.xlu0 %v2496
          %v2498 = vpop.xlane.xlu0 %2497
          %v2499 = vsub.f32 %v2453, 1.0
          %v2500 = vsub.f32 %v2456, 1.0
          %v2501 = vsub.f32 %v2459, 1.0
          %v2502 = vsub.f32 %v2462, 1.0
          %v2503 = vsub.f32 %v2465, 1.0
          %v2504 = vsub.f32 %v2468, 1.0
          %v2505 = vsub.f32 %v2471, 1.0
          %v2506 = vsub.f32 %v2474, 1.0
          %v2507 = vsub.f32 %v2477, 1.0
          %v2508 = vsub.f32 %v2480, 1.0
          %v2509 = vsub.f32 %v2483, 1.0
          %v2510 = vsub.f32 %v2486, 1.0
          %v2511 = vsub.f32 %v2489, 1.0
          %v2512 = vsub.f32 %v2492, 1.0
          %v2513 = vsub.f32 %v2495, 1.0
          %v2514 = vsub.f32 %v2498, 1.0
          %v2515 = vrcp.pop %v2373
          %v2516 = vmul.f32 %v2499, %v2515
          %v2517 = vrcp.pop %v2376
          %v2518 = vmul.f32 %v2500, %v2517
          %v2519 = vrcp.pop %v2379
          %v2520 = vmul.f32 %v2501, %v2519
          %v2521 = vrcp.pop %v2382
          %v2522 = vmul.f32 %v2502, %v2521
          %v2523 = vrcp.pop %v2385
          %v2524 = vmul.f32 %v2503, %v2523
          %v2525 = vrcp.pop %v2388
          %v2526 = vmul.f32 %v2504, %v2525
          %v2527 = vrcp.pop %v2391
          %v2528 = vmul.f32 %v2505, %v2527
          %v2529 = vrcp.pop %v2394
          %v2530 = vmul.f32 %v2506, %v2529
          %v2531 = vrcp.pop %v2397
          %v2532 = vmul.f32 %v2507, %v2531
          %v2533 = vrcp.pop %v2400
          %v2534 = vmul.f32 %v2508, %v2533
          %v2535 = vrcp.pop %v2403
          %v2536 = vmul.f32 %v2509, %v2535
          %v2537 = vrcp.pop %v2406
          %v2538 = vmul.f32 %v2510, %v2537
          %v2539 = vrcp.pop %v2409
          %v2540 = vmul.f32 %v2511, %v2539
          %v2541 = vrcp.pop %v2412
          %v2542 = vmul.f32 %v2512, %v2541
          %v2543 = vrcp.pop %v2415
          %v2544 = vmul.f32 %v2513, %v2543
          %v2545 = vrcp.pop %v2418
          %v2546 = vmul.f32 %v2514, %v2545
          %v2547 = vsub.f32 %v1853, %v2516
          %v2548 = vsub.f32 %v1854, %v2516
          %v2549 = vsub.f32 %v1855, %v2518
          %v2550 = vsub.f32 %v1856, %v2518
          %v2551 = vsub.f32 %v1857, %v2520
          %v2552 = vsub.f32 %v1858, %v2520
          %v2553 = vsub.f32 %v1859, %v2522
          %v2554 = vsub.f32 %v1860, %v2522
          %v2555 = vsub.f32 %v1861, %v2524
          %v2556 = vsub.f32 %v1862, %v2524
          %v2557 = vsub.f32 %v1863, %v2526
          %v2558 = vsub.f32 %v1864, %v2526
          %v2559 = vsub.f32 %v1865, %v2528
          %v2560 = vsub.f32 %v1866, %v2528
          %v2561 = vsub.f32 %v1867, %v2530
          %v2562 = vsub.f32 %v1868, %v2530
          %v2563 = vsub.f32 %v1869, %v2532
          %v2564 = vsub.f32 %v1870, %v2532
          %v2565 = vsub.f32 %v1871, %v2534
          %v2566 = vsub.f32 %v1872, %v2534
          %v2567 = vsub.f32 %v1873, %v2536
          %v2568 = vsub.f32 %v1874, %v2536
          %v2569 = vsub.f32 %v1875, %v2538
          %v2570 = vsub.f32 %v1876, %v2538
          %v2571 = vsub.f32 %v1877, %v2540
          %v2572 = vsub.f32 %v1878, %v2540
          %v2573 = vsub.f32 %v1879, %v2542
          %v2574 = vsub.f32 %v1880, %v2542
          %v2575 = vsub.f32 %v1881, %v2544
          %v2576 = vsub.f32 %v1882, %v2544
          %v2577 = vsub.f32 %v1883, %v2546
          %v2578 = vsub.f32 %v1884, %v2546
          %v2579 = vmax.f32 %v2547, 0.0
          %v2580 = vmax.f32 %v2548, 0.0
          %v2581 = vmax.f32 %v2549, 0.0
          %v2582 = vmax.f32 %v2550, 0.0
          %v2583 = vmax.f32 %v2551, 0.0
          %v2584 = vmax.f32 %v2552, 0.0
          %v2585 = vmax.f32 %v2553, 0.0
          %v2586 = vmax.f32 %v2554, 0.0
          %v2587 = vmax.f32 %v2555, 0.0
          %v2588 = vmax.f32 %v2556, 0.0
          %v2589 = vmax.f32 %v2557, 0.0
          %v2590 = vmax.f32 %v2558, 0.0
          %v2591 = vmax.f32 %v2559, 0.0
          %v2592 = vmax.f32 %v2560, 0.0
          %v2593 = vmax.f32 %v2561, 0.0
          %v2594 = vmax.f32 %v2562, 0.0
          %v2595 = vmax.f32 %v2563, 0.0
          %v2596 = vmax.f32 %v2564, 0.0
          %v2597 = vmax.f32 %v2565, 0.0
          %v2598 = vmax.f32 %v2566, 0.0
          %v2599 = vmax.f32 %v2567, 0.0
          %v2600 = vmax.f32 %v2568, 0.0
          %v2601 = vmax.f32 %v2569, 0.0
          %v2602 = vmax.f32 %v2570, 0.0
          %v2603 = vmax.f32 %v2571, 0.0
          %v2604 = vmax.f32 %v2572, 0.0
          %v2605 = vmax.f32 %v2573, 0.0
          %v2606 = vmax.f32 %v2574, 0.0
          %v2607 = vmax.f32 %v2575, 0.0
          %v2608 = vmax.f32 %v2576, 0.0
          %v2609 = vmax.f32 %v2577, 0.0
          %v2610 = vmax.f32 %v2578, 0.0
          %s2611 = scvt.s32.f32 %s1591
          %s2612 = sadd.f32 %s2611, 3.0
          %v2613 = vstv %s2612
          %v2614 = vrcp.pop %v2613
          %s2615 = vtos %v2614
          %s2616 = smul.f32 %s2611, %s2615
          %v2617 = vsub.f32 %v2579, %v1628
          %v2618 = vsub.f32 %v2580, %v1629
          %v2619 = vsub.f32 %v2581, %v1630
          %v2620 = vsub.f32 %v2582, %v1631
          %v2621 = vsub.f32 %v2583, %v1632
          %v2622 = vsub.f32 %v2584, %v1633
          %v2623 = vsub.f32 %v2585, %v1634
          %v2624 = vsub.f32 %v2586, %v1635
          %v2625 = vsub.f32 %v2587, %v1636
          %v2626 = vsub.f32 %v2588, %v1637
          %v2627 = vsub.f32 %v2589, %v1638
          %v2628 = vsub.f32 %v2590, %v1639
          %v2629 = vsub.f32 %v2591, %v1640
          %v2630 = vsub.f32 %v2592, %v1641
          %v2631 = vsub.f32 %v2593, %v1642
          %v2632 = vsub.f32 %v2594, %v1643
          %v2633 = vsub.f32 %v2595, %v1644
          %v2634 = vsub.f32 %v2596, %v1645
          %v2635 = vsub.f32 %v2597, %v1646
          %v2636 = vsub.f32 %v2598, %v1647
          %v2637 = vsub.f32 %v2599, %v1648
          %v2638 = vsub.f32 %v2600, %v1649
          %v2639 = vsub.f32 %v2601, %v1650
          %v2640 = vsub.f32 %v2602, %v1651
          %v2641 = vsub.f32 %v2603, %v1652
          %v2642 = vsub.f32 %v2604, %v1653
          %v2643 = vsub.f32 %v2605, %v1654
          %v2644 = vsub.f32 %v2606, %v1655
          %v2645 = vsub.f32 %v2607, %v1656
          %v2646 = vsub.f32 %v2608, %v1657
          %v2647 = vsub.f32 %v2609, %v1658
          %v2648 = vsub.f32 %v2610, %v1659
          %v2649 = vstv %s2616
          %v2650 = vmul.f32 %v2649, %v2617
          %v2651 = vmul.f32 %v2649, %v2618
          %v2652 = vmul.f32 %v2649, %v2619
          %v2653 = vmul.f32 %v2649, %v2620
          %v2654 = vmul.f32 %v2649, %v2621
          %v2655 = vmul.f32 %v2649, %v2622
          %v2656 = vmul.f32 %v2649, %v2623
          %v2657 = vmul.f32 %v2649, %v2624
          %v2658 = vmul.f32 %v2649, %v2625
          %v2659 = vmul.f32 %v2649, %v2626
          %v2660 = vmul.f32 %v2649, %v2627
          %v2661 = vmul.f32 %v2649, %v2628
          %v2662 = vmul.f32 %v2649, %v2629
          %v2663 = vmul.f32 %v2649, %v2630
          %v2664 = vmul.f32 %v2649, %v2631
          %v2665 = vmul.f32 %v2649, %v2632
          %v2666 = vmul.f32 %v2649, %v2633
          %v2667 = vmul.f32 %v2649, %v2634
          %v2668 = vmul.f32 %v2649, %v2635
          %v2669 = vmul.f32 %v2649, %v2636
          %v2670 = vmul.f32 %v2649, %v2637
          %v2671 = vmul.f32 %v2649, %v2638
          %v2672 = vmul.f32 %v2649, %v2639
          %v2673 = vmul.f32 %v2649, %v2640
          %v2674 = vmul.f32 %v2649, %v2641
          %v2675 = vmul.f32 %v2649, %v2642
          %v2676 = vmul.f32 %v2649, %v2643
          %v2677 = vmul.f32 %v2649, %v2644
          %v2678 = vmul.f32 %v2649, %v2645
          %v2679 = vmul.f32 %v2649, %v2646
          %v2680 = vmul.f32 %v2649, %v2647
          %v2681 = vmul.f32 %v2649, %v2648
          %v2682 = vadd.f32 %v2579, %v2650
          %v2683 = vadd.f32 %v2580, %v2651
          %v2684 = vadd.f32 %v2581, %v2652
          %v2685 = vadd.f32 %v2582, %v2653
          %v2686 = vadd.f32 %v2583, %v2654
          %v2687 = vadd.f32 %v2584, %v2655
          %v2688 = vadd.f32 %v2585, %v2656
          %v2689 = vadd.f32 %v2586, %v2657
          %v2690 = vadd.f32 %v2587, %v2658
          %v2691 = vadd.f32 %v2588, %v2659
          %v2692 = vadd.f32 %v2589, %v2660
          %v2693 = vadd.f32 %v2590, %v2661
          %v2694 = vadd.f32 %v2591, %v2662
          %v2695 = vadd.f32 %v2592, %v2663
          %v2696 = vadd.f32 %v2593, %v2664
          %v2697 = vadd.f32 %v2594, %v2665
          %v2698 = vadd.f32 %v2595, %v2666
          %v2699 = vadd.f32 %v2596, %v2667
          %v2700 = vadd.f32 %v2597, %v2668
          %v2701 = vadd.f32 %v2598, %v2669
          %v2702 = vadd.f32 %v2599, %v2670
          %v2703 = vadd.f32 %v2600, %v2671
          %v2704 = vadd.f32 %v2601, %v2672
          %v2705 = vadd.f32 %v2602, %v2673
          %v2706 = vadd.f32 %v2603, %v2674
          %v2707 = vadd.f32 %v2604, %v2675
          %v2708 = vadd.f32 %v2605, %v2676
          %v2709 = vadd.f32 %v2606, %v2677
          %v2710 = vadd.f32 %v2607, %v2678
          %v2711 = vadd.f32 %v2608, %v2679
          %v2712 = vadd.f32 %v2609, %v2680
          %v2713 = vadd.f32 %v2610, %v2681
        $region68: #{tpu_custom_call.1} parent=43 // loop_footer
          %s1595 = sadd.s32 1, %s1591
        $region69: #{tpu_custom_call.1} parent=43 // loop_footer_branch
          %1590 = sbr.rel target = $region65
        $region70: #{tpu_custom_call.1} parent=43 // loop_exit
          _
        %2714 = vmatprep.subr.mxu0 0.0
        %2715 = vmatpush1.msra.mxu0 %v319
        %2716 = vmatprep.subr.mxu0 0.0
        %2717 = vmatpush1.msra.mxu0 %v320
        %2718 = vmatprep.subr.mxu0 0.0
        %2719 = vmatpush1.msra.mxu0 %v321
        %2720 = vmatprep.subr.mxu0 0.0
        %2721 = vmatpush1.msra.mxu0 %v322
        %2722 = vmatprep.subr.mxu0 0.0
        %2723 = vmatpush1.msra.mxu0 %v323
        %2724 = vmatprep.subr.mxu0 0.0
        %2725 = vmatpush1.msra.mxu0 %v324
        %2726 = vmatprep.subr.mxu0 0.0
        %2727 = vmatpush1.msra.mxu0 %v325
        %2728 = vmatprep.subr.mxu0 0.0
        %2729 = vmatpush1.msra.mxu0 %v326
        %2730 = vmatprep.subr.mxu0 0.0
        %2731 = vmatpush1.msra.mxu0 %v327
        %2732 = vmatprep.subr.mxu0 0.0
        %2733 = vmatpush1.msra.mxu0 %v328
        %2734 = vmatprep.subr.mxu0 0.0
        %2735 = vmatpush1.msra.mxu0 %v329
        %2736 = vmatprep.subr.mxu0 0.0
        %2737 = vmatpush1.msra.mxu0 %v330
        %2738 = vmatprep.subr.mxu0 0.0
        %2739 = vmatpush1.msra.mxu0 %v331
        %2740 = vmatprep.subr.mxu0 0.0
        %2741 = vmatpush1.msra.mxu0 %v332
        %2742 = vmatprep.subr.mxu0 0.0
        %2743 = vmatpush1.msra.mxu0 %v333
        %2744 = vmatprep.subr.mxu0 0.0
        %2745 = vmatpush1.msra.mxu0 %v334
        %2746 = vmatprep.subr.mxu0 0.0
        %2747 = vmatpush1.msra.mxu0 %v335
        %2748 = vmatprep.subr.mxu0 0.0
        %2749 = vmatpush1.msra.mxu0 %v336
        %2750 = vmatprep.subr.mxu0 0.0
        %2751 = vmatpush1.msra.mxu0 %v337
        %2752 = vmatprep.subr.mxu0 0.0
        %2753 = vmatpush1.msra.mxu0 %v338
        %2754 = vmatprep.subr.mxu0 0.0
        %2755 = vmatpush1.msra.mxu0 %v339
        %2756 = vmatprep.subr.mxu0 0.0
        %2757 = vmatpush1.msra.mxu0 %v340
        %2758 = vmatprep.subr.mxu0 0.0
        %2759 = vmatpush1.msra.mxu0 %v341
        %2760 = vmatprep.subr.mxu0 0.0
        %2761 = vmatpush1.msra.mxu0 %v342
        %2762 = vmatprep.subr.mxu0 0.0
        %2763 = vmatpush1.msra.mxu0 %v343
        %2764 = vmatprep.subr.mxu0 0.0
        %2765 = vmatpush1.msra.mxu0 %v344
        %2766 = vmatprep.subr.mxu0 0.0
        %2767 = vmatpush1.msra.mxu0 %v345
        %2768 = vmatprep.subr.mxu0 0.0
        %2769 = vmatpush1.msra.mxu0 %v346
        %2770 = vmatprep.subr.mxu0 0.0
        %2771 = vmatpush1.msra.mxu0 %v347
        %2772 = vmatprep.subr.mxu0 0.0
        %2773 = vmatpush1.msra.mxu0 %v348
        %2774 = vmatprep.subr.mxu0 0.0
        %2775 = vmatpush1.msra.mxu0 %v349
        %2776 = vmatprep.subr.mxu0 0.0
        %2777 = vmatpush1.msra.mxu0 %v350
        %2778 = vmatprep.mubr.f32.mxu0 %v1629
        %2779 = vmatmul.mubr.f32.gmra.mrb[0].mxu0 %v1628
        %v2780 = vpop.f32.mrb[0].mxu0
        %v2781 = vadd.f32 0.0, %v2780
        %v2782 = vpop.f32.mrb[0].mxu0
        %2783 = vmatprep.mubr.f32.mxu0 %v1631
        %2784 = vmatmul.mubr.f32.gmra.mrb[0].mxu0 %v1630
        %v2785 = vpop.f32.mrb[0].mxu0
        %v2786 = vadd.f32 0.0, %v2785
        %v2787 = vpop.f32.mrb[0].mxu0
        %2788 = vmatprep.mubr.f32.mxu0 %v1633
        %2789 = vmatmul.mubr.f32.gmra.mrb[0].mxu0 %v1632
        %v2790 = vpop.f32.mrb[0].mxu0
        %v2791 = vadd.f32 0.0, %v2790
        %v2792 = vpop.f32.mrb[0].mxu0
        %2793 = vmatprep.mubr.f32.mxu0 %v1635
        %2794 = vmatmul.mubr.f32.gmra.mrb[0].mxu0 %v1634
        %v2795 = vpop.f32.mrb[0].mxu0
        %v2796 = vadd.f32 0.0, %v2795
        %v2797 = vpop.f32.mrb[0].mxu0
        %2798 = vmatprep.mubr.f32.mxu0 %v1637
        %2799 = vmatmul.mubr.f32.gmra.mrb[0].mxu0 %v1636
        %v2800 = vpop.f32.mrb[0].mxu0
        %v2801 = vadd.f32 0.0, %v2800
        %v2802 = vpop.f32.mrb[0].mxu0
        %2803 = vmatprep.mubr.f32.mxu0 %v1639
        %2804 = vmatmul.mubr.f32.gmra.mrb[0].mxu0 %v1638
        %v2805 = vpop.f32.mrb[0].mxu0
        %v2806 = vadd.f32 0.0, %v2805
        %v2807 = vpop.f32.mrb[0].mxu0
        %2808 = vmatprep.mubr.f32.mxu0 %v1641
        %2809 = vmatmul.mubr.f32.gmra.mrb[0].mxu0 %v1640
        %v2810 = vpop.f32.mrb[0].mxu0
        %v2811 = vadd.f32 0.0, %v2810
        %v2812 = vpop.f32.mrb[0].mxu0
        %2813 = vmatprep.mubr.f32.mxu0 %v1643
        %2814 = vmatmul.mubr.f32.gmra.mrb[0].mxu0 %v1642
        %v2815 = vpop.f32.mrb[0].mxu0
        %v2816 = vadd.f32 0.0, %v2815
        %v2817 = vpop.f32.mrb[0].mxu0
        %2818 = vmatprep.mubr.f32.mxu0 %v1645
        %2819 = vmatmul.mubr.f32.gmra.mrb[0].mxu0 %v1644
        %v2820 = vpop.f32.mrb[0].mxu0
        %v2821 = vadd.f32 0.0, %v2820
        %v2822 = vpop.f32.mrb[0].mxu0
        %2823 = vmatprep.mubr.f32.mxu0 %v1647
        %2824 = vmatmul.mubr.f32.gmra.mrb[0].mxu0 %v1646
        %v2825 = vpop.f32.mrb[0].mxu0
        %v2826 = vadd.f32 0.0, %v2825
        %v2827 = vpop.f32.mrb[0].mxu0
        %2828 = vmatprep.mubr.f32.mxu0 %v1649
        %2829 = vmatmul.mubr.f32.gmra.mrb[0].mxu0 %v1648
        %v2830 = vpop.f32.mrb[0].mxu0
        %v2831 = vadd.f32 0.0, %v2830
        %v2832 = vpop.f32.mrb[0].mxu0
        %2833 = vmatprep.mubr.f32.mxu0 %v1651
        %2834 = vmatmul.mubr.f32.gmra.mrb[0].mxu0 %v1650
        %v2835 = vpop.f32.mrb[0].mxu0
        %v2836 = vadd.f32 0.0, %v2835
        %v2837 = vpop.f32.mrb[0].mxu0
        %2838 = vmatprep.mubr.f32.mxu0 %v1653
        %2839 = vmatmul.mubr.f32.gmra.mrb[0].mxu0 %v1652
        %v2840 = vpop.f32.mrb[0].mxu0
        %v2841 = vadd.f32 0.0, %v2840
        %v2842 = vpop.f32.mrb[0].mxu0
        %2843 = vmatprep.mubr.f32.mxu0 %v1655
        %2844 = vmatmul.mubr.f32.gmra.mrb[0].mxu0 %v1654
        %v2845 = vpop.f32.mrb[0].mxu0
        %v2846 = vadd.f32 0.0, %v2845
        %v2847 = vpop.f32.mrb[0].mxu0
        %2848 = vmatprep.mubr.f32.mxu0 %v1657
        %2849 = vmatmul.mubr.f32.gmra.mrb[0].mxu0 %v1656
        %v2850 = vpop.f32.mrb[0].mxu0
        %v2851 = vadd.f32 0.0, %v2850
        %v2852 = vpop.f32.mrb[0].mxu0
        %2853 = vmatprep.mubr.f32.mxu0 %v1659
        %2854 = vmatmul.mubr.f32.gmra.mrb[0].mxu0 %v1658
        %v2855 = vpop.f32.mrb[0].mxu0
        %v2856 = vadd.f32 0.0, %v2855
        %v2857 = vpop.f32.mrb[0].mxu0
        %2858 = vdwg.mxu0
        %2859 = vst [vmem:[%s300] sm:$0xff] %v2781
        %2860 = vst [vmem:[%s300 + $0x8] sm:$0xff] %v2786
        %2861 = vst [vmem:[%s300 + $0x10] sm:$0xff] %v2791
        %2862 = vst [vmem:[%s300 + $0x18] sm:$0xff] %v2796
        %2863 = vst [vmem:[%s300 + $0x20] sm:$0xff] %v2801
        %2864 = vst [vmem:[%s300 + $0x28] sm:$0xff] %v2806
        %2865 = vst [vmem:[%s300 + $0x30] sm:$0xff] %v2811
        %2866 = vst [vmem:[%s300 + $0x38] sm:$0xff] %v2816
        %2867 = vst [vmem:[%s300 + $0x40] sm:$0xff] %v2821
        %2868 = vst [vmem:[%s300 + $0x48] sm:$0xff] %v2826
        %2869 = vst [vmem:[%s300 + $0x50] sm:$0xff] %v2831
        %2870 = vst [vmem:[%s300 + $0x58] sm:$0xff] %v2836
        %2871 = vst [vmem:[%s300 + $0x60] sm:$0xff] %v2841
        %2872 = vst [vmem:[%s300 + $0x68] sm:$0xff] %v2846
        %2873 = vst [vmem:[%s300 + $0x70] sm:$0xff] %v2851
        %2874 = vst [vmem:[%s300 + $0x78] sm:$0xff] %v2856
        %s2875 = sand.u32 %s165, 1
        %s2876 = scalar_lea.sflag [#allocation6], %s2875
        %s2877 = sand.u32 %s165, 1
        %s2878 = smul.addr %s2877, 128
        %s2879 = scalar_lea.vmem [#allocation10], %s2878
        // Predicated region
        $region78: #{tpu_custom_call.1} parent=43 // pred_check
          %p2880 = pneg %p175
        $region79: #{tpu_custom_call.1} parent=43 // pred_check_branch
          %2882 = sbr.rel (%p2880) target = $region81
        $region80: #{tpu_custom_call.1} parent=43 // pred_region
          %s2883 = smul.u32 16, %s26
          %s2885 = ssub.s32 2048, 2048
          %2886 = vsyncadd %s2876, %s2885
          %s2887 = smul.addr %s2883, 128
          %s2888 = scalar_lea.hbm %s6, %s2887
          %s2889 = sshll.u32 %s2879, 4
          %s2890 = int_to_ptr.vmem [resolvable:$true] %s2889
          %2895 = dma.vmem_to_hbm [thread:$0]  %s2890, 2048, %s2888, %s2876, 128, 128, 8
        $region81: #{tpu_custom_call.1} parent=43 // pred_fallthru
          _
      $region44: #{tpu_custom_call.1} parent=5 // pred_fallthru
        _
      %p2896 = scmp.le.s32.totalorder 2, %s21
      // Predicated region
      $region82: #{tpu_custom_call.1} parent=5 // pred_check
        %p2897 = pneg %p2896
      $region83: #{tpu_custom_call.1} parent=5 // pred_check_branch
        %2899 = sbr.rel (%p2897) target = $region85
      $region84: #{tpu_custom_call.1} parent=5 // pred_region
        %s2900 = ssub.s32 %s21, 2
        // Predicated region
        $region86: #{tpu_custom_call.1} parent=84 // pred_check
          %p2901 = pneg %p181
        $region87: #{tpu_custom_call.1} parent=84 // pred_check_branch
          %2903 = sbr.rel (%p2901) target = $region89
        $region88: #{tpu_custom_call.1} parent=84 // pred_region
          %s2904 = sand.u32 %s166, 1
          %s2905 = scalar_lea.sflag [#allocation6], %s2904
          %s2906 = sand.u32 %s166, 1
          %s2907 = smul.addr %s2906, 128
          %s2908 = scalar_lea.vmem [#allocation10], %s2907
          %2909 = dma.done %s2905, 2048
        $region89: #{tpu_custom_call.1} parent=84 // pred_fallthru
          _
      $region85: #{tpu_custom_call.1} parent=5 // pred_fallthru
        _
    $region6: #{tpu_custom_call.1} parent=1 // loop_footer
      %s25 = sadd.s32 1, %s21
    $region7: #{tpu_custom_call.1} parent=1 // loop_footer_branch
      %20 = sbr.rel target = $region3
    $region8: #{tpu_custom_call.1} parent=1 // loop_exit
      _
    %2910 = vsyncpa [#allocation5], 1
    %s2911 = scalar_lea.sflag [#allocation5], 1
    %2912 = vsyncpa %s2911, 1
    %2913 = vsyncpa [#allocation8], 1
    %2914 = vsyncpa [#allocation6], 1
    %s2915 = scalar_lea.sflag [#allocation6], 1
    %2916 = vsyncpa %s2915, 1

</llo_original>
